<compile_context>
chip_gen: v6e
topology: v6e:2x2x1
jax: 0.10.0
libtpu: 0.0.40
codegen_flags: <defaults>
</compile_context>

<pallas_src>
import functools

import jax
import jax.numpy as jnp
from jax.experimental import pallas as pl
from jax.experimental.pallas import tpu as pltpu


LANE = 128  # TPU lane width; channel dims are padded to a multiple of this.


def _round_up(x, m):
    return (x + m - 1) // m * m


# ----------------------------------------------------------------------------
# Pallas kernel.
# ----------------------------------------------------------------------------

def _adscam_kernel(xl_ref, xr_ref, kcl_ref, kcr_ref,
                   lnlw_ref, lnlb_ref, lnrw_ref, lnrb_ref,
                   wl1_ref, bl1_ref, wr1_ref, br1_ref,
                   wl2_ref, bl2_ref, wr2_ref, br2_ref,
                   wc1_ref, bc1_ref, wc2_ref, bc2_ref,
                   beta_ref, gamma_ref,
                   outl_ref, outr_ref, *, scale, c_true, eps):
    f32 = jnp.float32
    bf16 = jnp.bfloat16

    xl = xl_ref[0]                      # (TH, W, Cp)   f32, raw left (residual)
    xr = xr_ref[0]                      # (TH, W, Cp)   f32, raw right (residual)
    kcl = kcl_ref[0]                    # (TH, W, C3p)  bf16, dilated feats left
    kcr = kcr_ref[0]                    # (TH, W, C3p)  bf16, dilated feats right
    th, w, cp = xl.shape

    inv_c = 1.0 / float(c_true)

    def layernorm(x, w_ref, b_ref):
        # Channel LayerNorm in f32.  Padded channel lanes of x are exactly 0,
        # so sum(x)/C and sum(x*x)/C over the padded lane axis are exact over
        # the true C channels; XLU cross-lane reduces + EUP rsqrt.
        mu = jnp.sum(x, axis=-1, keepdims=True) * inv_c
        ex2 = jnp.sum(x * x, axis=-1, keepdims=True) * inv_c
        var = ex2 - mu * mu
        inv = jax.lax.rsqrt(var + eps)
        return (x - mu) * inv * w_ref[0].astype(f32) + b_ref[0].astype(f32)

    nl = layernorm(xl, lnlw_ref, lnlb_ref).astype(bf16)   # norm_l(x_l)
    nr = layernorm(xr, lnrw_ref, lnrb_ref).astype(bf16)   # norm_r(x_r)

    def proj(x_bf16, w_ref, b_ref):
        # 1x1 conv == one flattened (TH*W, Cin) @ (Cin, Cout) MXU matmul
        # (bf16 operands, f32 accumulation), bias add in f32.
        cin = x_bf16.shape[-1]
        x2 = x_bf16.reshape(th * w, cin)
        y = jnp.dot(x2, w_ref[...], preferred_element_type=f32)
        y = y + b_ref[0].astype(f32)
        return y.reshape(th, w, cp)

    # Fold the softmax scale into Q (cheaper than scaling the (W, W) scores).
    q_l = proj(nl, wl1_ref, bl1_ref) * scale        # l_proj1(norm_l(x_l))
    q_r = proj(nr, wr1_ref, br1_ref) * scale        # r_proj1(norm_r(x_r))
    v_l = proj(xl.astype(bf16), wl2_ref, bl2_ref)   # l_proj2(x_l)
    v_r = proj(xr.astype(bf16), wr2_ref, br2_ref)   # r_proj2(x_r)
    k_l = proj(kcl, wc1_ref, bc1_ref)               # conv1(cat(dilated_l*(norm_l)))
    k_r = proj(kcr, wc2_ref, bc2_ref)               # conv2(cat(dilated_r*(norm_r)))

    def cross_attn(q, k, v):
        # attn[h, w, v] = sum_c q[h, w, c] * k[h, v, c]   (Q @ K^T per row).
        # Contract-on-last-dim batched dot; bf16 MXU operands, f32
        # accumulation; softmax math stays in f32 on the VPU.
        # TODO(synk): for W >= ~1024 tile the query axis (flash-style) inside
        # the kernel so the (TH, W, W) score tensor stays bounded in VMEM.
        attn = jnp.einsum('hwc,hvc->hwv', q.astype(bf16), k.astype(bf16),
                          preferred_element_type=f32)
        m = jnp.max(attn, axis=-1, keepdims=True)
        p = jnp.exp(attn - m)
        denom = jnp.sum(p, axis=-1, keepdims=True)
        p = p * pl.reciprocal(denom, approx=True)
        return jnp.einsum('hwv,hvc->hwc', p.astype(bf16), v.astype(bf16),
                          preferred_element_type=f32)

    f_r2l = cross_attn(q_l, k_r, v_r)
    f_l2r = cross_attn(q_r, k_l, v_l)

    beta = beta_ref[0].astype(f32)          # (Cp,)
    gamma = gamma_ref[0].astype(f32)        # (Cp,)
    outl_ref[0] = (xl + f_r2l * beta).astype(outl_ref.dtype)
    outr_ref[0] = (xr + f_l2r * gamma).astype(outr_ref.dtype)


# ----------------------------------------------------------------------------
# Plain-JAX glue (LayerNorm2d over channels, dilated 3x3 convs feeding K).
# ----------------------------------------------------------------------------

def _layernorm2d_nhwc(x, w, b, eps=1e-6):
    mu = jnp.mean(x, axis=-1, keepdims=True)
    var = jnp.mean((x - mu) ** 2, axis=-1, keepdims=True)
    return (x - mu) / jnp.sqrt(var + eps) * w + b


def _dilated_conv_nhwc(x, w_hwio, b, d):
    # TODO(synk): dilated 3x3 conv stays in XLA (lax.conv_general_dilated);
    # expressing it inside the kernel would need H/W halo exchange per tile.
    y = jax.lax.conv_general_dilated(
        x, w_hwio, window_strides=(1, 1),
        padding=((d, d), (d, d)), rhs_dilation=(d, d),
        dimension_numbers=('NHWC', 'HWIO', 'NHWC'))
    return y + b


def _preprocess(x_l_nchw, x_r_nchw, p):
    xl = jnp.transpose(x_l_nchw, (0, 2, 3, 1))   # NCHW -> NHWC
    xr = jnp.transpose(x_r_nchw, (0, 2, 3, 1))
    nl = _layernorm2d_nhwc(xl, p['ln_l_w'], p['ln_l_b'])
    nr = _layernorm2d_nhwc(xr, p['ln_r_w'], p['ln_r_b'])
    kcl = jnp.concatenate(
        [_dilated_conv_nhwc(nl, p[f'dl{i}_w'], p[f'dl{i}_b'], d)
         for i, d in enumerate((2, 4, 6))], axis=-1)
    kcr = jnp.concatenate(
        [_dilated_conv_nhwc(nr, p[f'dr{i}_w'], p[f'dr{i}_b'], d)
         for i, d in enumerate((2, 4, 6))], axis=-1)
    return xl, xr, nl, nr, kcl, kcr


# ----------------------------------------------------------------------------
# Tiling heuristic + Pallas wrapper.
# ----------------------------------------------------------------------------

def _choose_tile_h(H, W, Cp, C3p, budget_bytes=8 << 20):
    """Largest divisor of H whose per-step VMEM working set fits the budget.

    Rough per-row bytes: double-buffered I/O tiles (x f32, kc bf16, 2 outputs
    f32), LN + q/k/v intermediates (f32 + bf16 copies) and the two (W, W)
    score tensors.  Budget is conservative so the tile also fits v7x
    (64 MiB physical VMEM).
    """
    per_row = W * (88 * Cp + 8 * C3p + 24 * W)
    max_rows = max(1, budget_bytes // per_row)
    # Keep at least two H-tiles (when possible) so the grid has enough steps
    # to pipeline / shard across TensorCores.
    cap = max(1, min(max_rows, H if H <= 1 else H // 2))
    th = 1
    for d in range(1, H + 1):
        if H % d == 0 and d <= cap:
            th = d
    return th


def adscam_forward(x_l, x_r, params, *, tile_h=None):
    """x_l, x_r: (N, C, H, W) float32.  Returns (out_l, out_r) in NCHW."""
    c = x_l.shape[1]
    scale = float(c) ** (-0.5)      # uses the *original* channel count
    xl, xr, _nl, _nr, kcl, kcr = _preprocess(x_l, x_r, params)
    N, H, W, C = xl.shape

    # Lane-dense channel padding (zeros are exact no-ops for every matmul,
    # LayerNorm statistic, softmax and residual in this block).
    Cp = _round_up(C, LANE)
    C3p = _round_up(3 * C, LANE)
    bf16 = jnp.bfloat16

    def pad_last(a, target):
        if a.shape[-1] == target:
            return a
        cfg = [(0, 0)] * (a.ndim - 1) + [(0, target - a.shape[-1])]
        return jnp.pad(a, cfg)

    def pad_mat(w, rows, cols):
        if w.shape == (rows, cols):
            return w
        return jnp.pad(w, ((0, rows - w.shape[0]), (0, cols - w.shape[1])))

    # Matmul-only operands go to bf16 (halves DMA + 2x MXU rate); the raw
    # features stay f32 because they also feed the exact residual add and the
    # in-kernel LayerNorm statistics.
    xl_p = pad_last(xl, Cp)
    xr_p = pad_last(xr, Cp)
    kcl_p = pad_last(kcl, C3p).astype(bf16)
    kcr_p = pad_last(kcr, C3p).astype(bf16)

    lnlw = pad_mat(params['ln_l_w'][None, :], 1, Cp)
    lnlb = pad_mat(params['ln_l_b'][None, :], 1, Cp)
    lnrw = pad_mat(params['ln_r_w'][None, :], 1, Cp)
    lnrb = pad_mat(params['ln_r_b'][None, :], 1, Cp)

    wl1 = pad_mat(params['wl1'], Cp, Cp).astype(bf16)
    wr1 = pad_mat(params['wr1'], Cp, Cp).astype(bf16)
    wl2 = pad_mat(params['wl2'], Cp, Cp).astype(bf16)
    wr2 = pad_mat(params['wr2'], Cp, Cp).astype(bf16)
    wc1 = pad_mat(params['wc1'], C3p, Cp).astype(bf16)
    wc2 = pad_mat(params['wc2'], C3p, Cp).astype(bf16)
    bl1 = pad_mat(params['bl1'], 1, Cp)
    br1 = pad_mat(params['br1'], 1, Cp)
    bl2 = pad_mat(params['bl2'], 1, Cp)
    br2 = pad_mat(params['br2'], 1, Cp)
    bc1 = pad_mat(params['bc1'], 1, Cp)
    bc2 = pad_mat(params['bc2'], 1, Cp)
    beta = pad_mat(params['beta'], 1, Cp)
    gamma = pad_mat(params['gamma'], 1, Cp)

    TH = tile_h if tile_h is not None else _choose_tile_h(H, W, Cp, C3p)
    assert H % TH == 0, (H, TH)
    grid = (N, H // TH)

    def tensor_spec(ch):
        return pl.BlockSpec((1, TH, W, ch), lambda n, h: (n, h, 0, 0))

    def mat_spec(rows, cols):
        return pl.BlockSpec((rows, cols), lambda n, h: (0, 0))

    kernel = functools.partial(_adscam_kernel, scale=scale, c_true=C, eps=1e-6)

    out_l, out_r = pl.pallas_call(
        kernel,
        out_shape=(jax.ShapeDtypeStruct((N, H, W, Cp), jnp.float32),
                   jax.ShapeDtypeStruct((N, H, W, Cp), jnp.float32)),
        grid_spec=pltpu.PrefetchScalarGridSpec(
            num_scalar_prefetch=0,
            grid=grid,
            in_specs=[
                tensor_spec(Cp), tensor_spec(Cp),        # xl, xr   (f32)
                tensor_spec(C3p), tensor_spec(C3p),      # kcl, kcr (bf16)
                mat_spec(1, Cp), mat_spec(1, Cp),        # LN left  w, b
                mat_spec(1, Cp), mat_spec(1, Cp),        # LN right w, b
                mat_spec(Cp, Cp), mat_spec(1, Cp),       # l_proj1
                mat_spec(Cp, Cp), mat_spec(1, Cp),       # r_proj1
                mat_spec(Cp, Cp), mat_spec(1, Cp),       # l_proj2
                mat_spec(Cp, Cp), mat_spec(1, Cp),       # r_proj2
                mat_spec(C3p, Cp), mat_spec(1, Cp),      # conv1
                mat_spec(C3p, Cp), mat_spec(1, Cp),      # conv2
                mat_spec(1, Cp), mat_spec(1, Cp),        # beta, gamma
            ],
            out_specs=[tensor_spec(Cp), tensor_spec(Cp)]),
        compiler_params=pltpu.CompilerParams(
            dimension_semantics=("parallel", "parallel"),
            vmem_limit_bytes=48 * 1024 * 1024),
    )(xl_p, xr_p, kcl_p, kcr_p,
      lnlw, lnlb, lnrw, lnrb,
      wl1, bl1, wr1, br1, wl2, bl2, wr2, br2,
      wc1, bc1, wc2, bc2, beta, gamma)

    out_l = out_l[..., :C]
    out_r = out_r[..., :C]
    return (jnp.transpose(out_l, (0, 3, 1, 2)),
            jnp.transpose(out_r, (0, 3, 1, 2)))


# ----------------------------------------------------------------------------
# Pure-JAX reference (mirrors the PyTorch forward exactly).
# ----------------------------------------------------------------------------

def adscam_reference(x_l, x_r, p):
    c = x_l.shape[1]
    scale = float(c) ** (-0.5)
    xl, xr, nl, nr, kcl, kcr = _preprocess(x_l, x_r, p)

    def proj(x, w, b):
        return jnp.einsum('nhwc,cd->nhwd', x, w) + b[0]

    q_l = proj(nl, p['wl1'], p['bl1'])
    q_r = proj(nr, p['wr1'], p['br1'])
    v_l = proj(xl, p['wl2'], p['bl2'])
    v_r = proj(xr, p['wr2'], p['br2'])
    k_l = proj(kcl, p['wc1'], p['bc1'])
    k_r = proj(kcr, p['wc2'], p['bc2'])

    def cross(q, k, v):
        attn = jnp.einsum('nhwc,nhvc->nhwv', q, k) * scale
        a = jax.nn.softmax(attn, axis=-1)
        return jnp.einsum('nhwv,nhvc->nhwc', a, v)

    out_l = xl + cross(q_l, k_r, v_r) * p['beta'][0]
    out_r = xr + cross(q_r, k_l, v_l) * p['gamma'][0]
    return (jnp.transpose(out_l, (0, 3, 1, 2)),
            jnp.transpose(out_r, (0, 3, 1, 2)))


# ----------------------------------------------------------------------------
# Deterministic parameter init (shapes from ADSCAM.__init__).
# ----------------------------------------------------------------------------

def init_params(key, c):
    keys = iter(jax.random.split(key, 40))

    def nrm(shape, s=0.1):
        return s * jax.random.normal(next(keys), shape, jnp.float32)

    p = {}
    p['ln_l_w'] = 1.0 + nrm((c,))
    p['ln_l_b'] = nrm((c,))
    p['ln_r_w'] = 1.0 + nrm((c,))
    p['ln_r_b'] = nrm((c,))
    for name in ('wl1', 'wr1', 'wl2', 'wr2'):
        p[name] = nrm((c, c))                      # 1x1 conv weight as (Cin, Cout)
    for name in ('bl1', 'br1', 'bl2', 'br2'):
        p[name] = nrm((1, c))
    for side in 'lr':
        for i in range(3):
            p[f'd{side}{i}_w'] = nrm((3, 3, c, c))  # HWIO
            p[f'd{side}{i}_b'] = nrm((c,))
    p['wc1'] = nrm((3 * c, c))
    p['bc1'] = nrm((1, c))
    p['wc2'] = nrm((3 * c, c))
    p['bc2'] = nrm((1, c))
    # NOTE: PyTorch initializes beta/gamma to zero (making the block an
    # identity); use nonzero deterministic values so the attention path is
    # actually exercised by the test.
    p['beta'] = nrm((1, c))
    p['gamma'] = nrm((1, c))
    return p


if __name__ == "__main__":
    key = jax.random.PRNGKey(0)
    N, C, H, W = 2, 8, 16, 16
    k_p, k_l, k_r = jax.random.split(key, 3)
    params = init_params(k_p, C)
    x_l = jax.random.normal(k_l, (N, C, H, W), jnp.float32)
    x_r = jax.random.normal(k_r, (N, C, H, W), jnp.float32)

    out_l, out_r = adscam_forward(x_l, x_r, params)
    jax.block_until_ready((out_l, out_r))

    ref_l, ref_r = adscam_reference(x_l, x_r, params)
    assert out_l.shape == (N, C, H, W) and out_r.shape == (N, C, H, W)
    # bf16 MXU operands + approx reciprocal -> slightly looser tolerance.
    assert jnp.allclose(out_l, ref_l, atol=2e-3, rtol=2e-3), \
        float(jnp.max(jnp.abs(out_l - ref_l)))
    assert jnp.allclose(out_r, ref_r, atol=2e-3, rtol=2e-3), \
        float(jnp.max(jnp.abs(out_r - ref_r)))

    print("KERNEL_OK")
</pallas_src>

<mosaic_0001>
module attributes {stable_mosaic.version = 11 : i64} {
  func.func @_adscam_kernel(%arg0: i32, %arg1: i32, %arg2: memref<1x8x16x128xf32, #tpu.memory_space<vmem>>, %arg3: memref<1x8x16x128xf32, #tpu.memory_space<vmem>>, %arg4: memref<1x8x16x128xbf16, #tpu.memory_space<vmem>>, %arg5: memref<1x8x16x128xbf16, #tpu.memory_space<vmem>>, %arg6: memref<1x128xf32, #tpu.memory_space<vmem>>, %arg7: memref<1x128xf32, #tpu.memory_space<vmem>>, %arg8: memref<1x128xf32, #tpu.memory_space<vmem>>, %arg9: memref<1x128xf32, #tpu.memory_space<vmem>>, %arg10: memref<128x128xbf16, #tpu.memory_space<vmem>>, %arg11: memref<1x128xf32, #tpu.memory_space<vmem>>, %arg12: memref<128x128xbf16, #tpu.memory_space<vmem>>, %arg13: memref<1x128xf32, #tpu.memory_space<vmem>>, %arg14: memref<128x128xbf16, #tpu.memory_space<vmem>>, %arg15: memref<1x128xf32, #tpu.memory_space<vmem>>, %arg16: memref<128x128xbf16, #tpu.memory_space<vmem>>, %arg17: memref<1x128xf32, #tpu.memory_space<vmem>>, %arg18: memref<128x128xbf16, #tpu.memory_space<vmem>>, %arg19: memref<1x128xf32, #tpu.memory_space<vmem>>, %arg20: memref<128x128xbf16, #tpu.memory_space<vmem>>, %arg21: memref<1x128xf32, #tpu.memory_space<vmem>>, %arg22: memref<1x128xf32, #tpu.memory_space<vmem>>, %arg23: memref<1x128xf32, #tpu.memory_space<vmem>>, %arg24: memref<1x8x16x128xf32, #tpu.memory_space<vmem>>, %arg25: memref<1x8x16x128xf32, #tpu.memory_space<vmem>>) attributes {dimension_semantics = [#tpu.dimension_semantics<parallel>, #tpu.dimension_semantics<parallel>], iteration_bounds = array<i64: 2, 2>, scalar_prefetch = 0 : i64, scratch_operands = 0 : i64, tpu.core_type = #tpu.core_type<tc>, window_params = [{transform_indices = @transform_0, window_bounds = array<i64: 1, 8, 16, 128>}, {transform_indices = @transform_1, window_bounds = array<i64: 1, 8, 16, 128>}, {transform_indices = @transform_2, window_bounds = array<i64: 1, 8, 16, 128>}, {transform_indices = @transform_3, window_bounds = array<i64: 1, 8, 16, 128>}, {pipeline_mode = #tpu.pipeline_mode<synchronous>, transform_indices = @transform_4, window_bounds = array<i64: 1, 128>}, {pipeline_mode = #tpu.pipeline_mode<synchronous>, transform_indices = @transform_5, window_bounds = array<i64: 1, 128>}, {pipeline_mode = #tpu.pipeline_mode<synchronous>, transform_indices = @transform_6, window_bounds = array<i64: 1, 128>}, {pipeline_mode = #tpu.pipeline_mode<synchronous>, transform_indices = @transform_7, window_bounds = array<i64: 1, 128>}, {pipeline_mode = #tpu.pipeline_mode<synchronous>, transform_indices = @transform_8, window_bounds = array<i64: 128, 128>}, {pipeline_mode = #tpu.pipeline_mode<synchronous>, transform_indices = @transform_9, window_bounds = array<i64: 1, 128>}, {pipeline_mode = #tpu.pipeline_mode<synchronous>, transform_indices = @transform_10, window_bounds = array<i64: 128, 128>}, {pipeline_mode = #tpu.pipeline_mode<synchronous>, transform_indices = @transform_11, window_bounds = array<i64: 1, 128>}, {pipeline_mode = #tpu.pipeline_mode<synchronous>, transform_indices = @transform_12, window_bounds = array<i64: 128, 128>}, {pipeline_mode = #tpu.pipeline_mode<synchronous>, transform_indices = @transform_13, window_bounds = array<i64: 1, 128>}, {pipeline_mode = #tpu.pipeline_mode<synchronous>, transform_indices = @transform_14, window_bounds = array<i64: 128, 128>}, {pipeline_mode = #tpu.pipeline_mode<synchronous>, transform_indices = @transform_15, window_bounds = array<i64: 1, 128>}, {pipeline_mode = #tpu.pipeline_mode<synchronous>, transform_indices = @transform_16, window_bounds = array<i64: 128, 128>}, {pipeline_mode = #tpu.pipeline_mode<synchronous>, transform_indices = @transform_17, window_bounds = array<i64: 1, 128>}, {pipeline_mode = #tpu.pipeline_mode<synchronous>, transform_indices = @transform_18, window_bounds = array<i64: 128, 128>}, {pipeline_mode = #tpu.pipeline_mode<synchronous>, transform_indices = @transform_19, window_bounds = array<i64: 1, 128>}, {pipeline_mode = #tpu.pipeline_mode<synchronous>, transform_indices = @transform_20, window_bounds = array<i64: 1, 128>}, {pipeline_mode = #tpu.pipeline_mode<synchronous>, transform_indices = @transform_21, window_bounds = array<i64: 1, 128>}, {transform_indices = @transform_22, window_bounds = array<i64: 1, 8, 16, 128>}, {transform_indices = @transform_23, window_bounds = array<i64: 1, 8, 16, 128>}]} {
    %c0 = arith.constant 0 : index
    %c0_0 = arith.constant 0 : index
    %c0_1 = arith.constant 0 : index
    %c0_2 = arith.constant 0 : index
    %0 = vector.load %arg2[%c0, %c0_0, %c0_1, %c0_2] : memref<1x8x16x128xf32, #tpu.memory_space<vmem>>, vector<1x8x16x128xf32>
    %1 = vector.shape_cast %0 : vector<1x8x16x128xf32> to vector<8x16x128xf32>
    %c0_3 = arith.constant 0 : index
    %c0_4 = arith.constant 0 : index
    %c0_5 = arith.constant 0 : index
    %c0_6 = arith.constant 0 : index
    %2 = vector.load %arg3[%c0_3, %c0_4, %c0_5, %c0_6] : memref<1x8x16x128xf32, #tpu.memory_space<vmem>>, vector<1x8x16x128xf32>
    %3 = vector.shape_cast %2 : vector<1x8x16x128xf32> to vector<8x16x128xf32>
    %c0_7 = arith.constant 0 : index
    %c0_8 = arith.constant 0 : index
    %c0_9 = arith.constant 0 : index
    %c0_10 = arith.constant 0 : index
    %4 = vector.load %arg4[%c0_7, %c0_8, %c0_9, %c0_10] : memref<1x8x16x128xbf16, #tpu.memory_space<vmem>>, vector<1x8x16x128xbf16>
    %5 = vector.shape_cast %4 : vector<1x8x16x128xbf16> to vector<8x16x128xbf16>
    %c0_11 = arith.constant 0 : index
    %c0_12 = arith.constant 0 : index
    %c0_13 = arith.constant 0 : index
    %c0_14 = arith.constant 0 : index
    %6 = vector.load %arg5[%c0_11, %c0_12, %c0_13, %c0_14] : memref<1x8x16x128xbf16, #tpu.memory_space<vmem>>, vector<1x8x16x128xbf16>
    %7 = vector.shape_cast %6 : vector<1x8x16x128xbf16> to vector<8x16x128xbf16>
    %cst = arith.constant dense<0.000000e+00> : vector<8x16xf32>
    %8 = vector.multi_reduction <add>, %1, %cst [2] : vector<8x16x128xf32> to vector<8x16xf32>
    %9 = vector.shape_cast %8 : vector<8x16xf32> to vector<8x16x1xf32>
    %cst_15 = arith.constant 1.250000e-01 : f32
    %10 = vector.broadcast %cst_15 : f32 to vector<8x16x1xf32>
    %11 = arith.mulf %9, %10 : vector<8x16x1xf32>
    %12 = arith.mulf %1, %1 : vector<8x16x128xf32>
    %cst_16 = arith.constant dense<0.000000e+00> : vector<8x16xf32>
    %13 = vector.multi_reduction <add>, %12, %cst_16 [2] : vector<8x16x128xf32> to vector<8x16xf32>
    %14 = vector.shape_cast %13 : vector<8x16xf32> to vector<8x16x1xf32>
    %cst_17 = arith.constant 1.250000e-01 : f32
    %15 = vector.broadcast %cst_17 : f32 to vector<8x16x1xf32>
    %16 = arith.mulf %14, %15 : vector<8x16x1xf32>
    %17 = arith.mulf %11, %11 : vector<8x16x1xf32>
    %18 = arith.subf %16, %17 : vector<8x16x1xf32>
    %cst_18 = arith.constant 9.99999997E-7 : f32
    %19 = vector.broadcast %cst_18 : f32 to vector<8x16x1xf32>
    %20 = arith.addf %18, %19 : vector<8x16x1xf32>
    %21 = math.rsqrt %20 : vector<8x16x1xf32>
    %22 = vector.broadcast %11 : vector<8x16x1xf32> to vector<8x16x128xf32>
    %23 = arith.subf %1, %22 : vector<8x16x128xf32>
    %24 = vector.broadcast %21 : vector<8x16x1xf32> to vector<8x16x128xf32>
    %25 = arith.mulf %23, %24 : vector<8x16x128xf32>
    %c0_19 = arith.constant 0 : index
    %c0_20 = arith.constant 0 : index
    %26 = vector.load %arg6[%c0_19, %c0_20] : memref<1x128xf32, #tpu.memory_space<vmem>>, vector<1x128xf32>
    %27 = vector.shape_cast %26 : vector<1x128xf32> to vector<128xf32>
    %28 = vector.shape_cast %27 : vector<128xf32> to vector<1x1x128xf32>
    %29 = vector.broadcast %28 : vector<1x1x128xf32> to vector<8x16x128xf32>
    %30 = arith.mulf %25, %29 : vector<8x16x128xf32>
    %c0_21 = arith.constant 0 : index
    %c0_22 = arith.constant 0 : index
    %31 = vector.load %arg7[%c0_21, %c0_22] : memref<1x128xf32, #tpu.memory_space<vmem>>, vector<1x128xf32>
    %32 = vector.shape_cast %31 : vector<1x128xf32> to vector<128xf32>
    %33 = vector.shape_cast %32 : vector<128xf32> to vector<1x1x128xf32>
    %34 = vector.broadcast %33 : vector<1x1x128xf32> to vector<8x16x128xf32>
    %35 = arith.addf %30, %34 : vector<8x16x128xf32>
    %36 = arith.truncf %35 : vector<8x16x128xf32> to vector<8x16x128xbf16>
    %cst_23 = arith.constant dense<0.000000e+00> : vector<8x16xf32>
    %37 = vector.multi_reduction <add>, %3, %cst_23 [2] : vector<8x16x128xf32> to vector<8x16xf32>
    %38 = vector.shape_cast %37 : vector<8x16xf32> to vector<8x16x1xf32>
    %cst_24 = arith.constant 1.250000e-01 : f32
    %39 = vector.broadcast %cst_24 : f32 to vector<8x16x1xf32>
    %40 = arith.mulf %38, %39 : vector<8x16x1xf32>
    %41 = arith.mulf %3, %3 : vector<8x16x128xf32>
    %cst_25 = arith.constant dense<0.000000e+00> : vector<8x16xf32>
    %42 = vector.multi_reduction <add>, %41, %cst_25 [2] : vector<8x16x128xf32> to vector<8x16xf32>
    %43 = vector.shape_cast %42 : vector<8x16xf32> to vector<8x16x1xf32>
    %cst_26 = arith.constant 1.250000e-01 : f32
    %44 = vector.broadcast %cst_26 : f32 to vector<8x16x1xf32>
    %45 = arith.mulf %43, %44 : vector<8x16x1xf32>
    %46 = arith.mulf %40, %40 : vector<8x16x1xf32>
    %47 = arith.subf %45, %46 : vector<8x16x1xf32>
    %cst_27 = arith.constant 9.99999997E-7 : f32
    %48 = vector.broadcast %cst_27 : f32 to vector<8x16x1xf32>
    %49 = arith.addf %47, %48 : vector<8x16x1xf32>
    %50 = math.rsqrt %49 : vector<8x16x1xf32>
    %51 = vector.broadcast %40 : vector<8x16x1xf32> to vector<8x16x128xf32>
    %52 = arith.subf %3, %51 : vector<8x16x128xf32>
    %53 = vector.broadcast %50 : vector<8x16x1xf32> to vector<8x16x128xf32>
    %54 = arith.mulf %52, %53 : vector<8x16x128xf32>
    %c0_28 = arith.constant 0 : index
    %c0_29 = arith.constant 0 : index
    %55 = vector.load %arg8[%c0_28, %c0_29] : memref<1x128xf32, #tpu.memory_space<vmem>>, vector<1x128xf32>
    %56 = vector.shape_cast %55 : vector<1x128xf32> to vector<128xf32>
    %57 = vector.shape_cast %56 : vector<128xf32> to vector<1x1x128xf32>
    %58 = vector.broadcast %57 : vector<1x1x128xf32> to vector<8x16x128xf32>
    %59 = arith.mulf %54, %58 : vector<8x16x128xf32>
    %c0_30 = arith.constant 0 : index
    %c0_31 = arith.constant 0 : index
    %60 = vector.load %arg9[%c0_30, %c0_31] : memref<1x128xf32, #tpu.memory_space<vmem>>, vector<1x128xf32>
    %61 = vector.shape_cast %60 : vector<1x128xf32> to vector<128xf32>
    %62 = vector.shape_cast %61 : vector<128xf32> to vector<1x1x128xf32>
    %63 = vector.broadcast %62 : vector<1x1x128xf32> to vector<8x16x128xf32>
    %64 = arith.addf %59, %63 : vector<8x16x128xf32>
    %65 = arith.truncf %64 : vector<8x16x128xf32> to vector<8x16x128xbf16>
    %66 = vector.shape_cast %36 : vector<8x16x128xbf16> to vector<128x128xbf16>
    %c0_32 = arith.constant 0 : index
    %c0_33 = arith.constant 0 : index
    %67 = vector.load %arg10[%c0_32, %c0_33] : memref<128x128xbf16, #tpu.memory_space<vmem>>, vector<128x128xbf16>
    %cst_34 = arith.constant dense<0.000000e+00> : vector<128x128xf32>
    %68 = tpu.matmul %66, %67, %cst_34 {dimension_numbers = #tpu.dot_dimension_numbers<[1], [0], [0], [1], [0, 0, 1, 1], [], []>} : vector<128x128xbf16>, vector<128x128xbf16>, vector<128x128xf32> -> vector<128x128xf32>
    %c0_35 = arith.constant 0 : index
    %c0_36 = arith.constant 0 : index
    %69 = vector.load %arg11[%c0_35, %c0_36] : memref<1x128xf32, #tpu.memory_space<vmem>>, vector<1x128xf32>
    %70 = vector.shape_cast %69 : vector<1x128xf32> to vector<128xf32>
    %71 = vector.shape_cast %70 : vector<128xf32> to vector<1x128xf32>
    %72 = vector.broadcast %71 : vector<1x128xf32> to vector<128x128xf32>
    %73 = arith.addf %68, %72 : vector<128x128xf32>
    %74 = vector.shape_cast %73 : vector<128x128xf32> to vector<8x16x128xf32>
    %cst_37 = arith.constant 0.353553385 : f32
    %75 = vector.broadcast %cst_37 : f32 to vector<8x16x128xf32>
    %76 = arith.mulf %74, %75 : vector<8x16x128xf32>
    %77 = vector.shape_cast %65 : vector<8x16x128xbf16> to vector<128x128xbf16>
    %c0_38 = arith.constant 0 : index
    %c0_39 = arith.constant 0 : index
    %78 = vector.load %arg12[%c0_38, %c0_39] : memref<128x128xbf16, #tpu.memory_space<vmem>>, vector<128x128xbf16>
    %cst_40 = arith.constant dense<0.000000e+00> : vector<128x128xf32>
    %79 = tpu.matmul %77, %78, %cst_40 {dimension_numbers = #tpu.dot_dimension_numbers<[1], [0], [0], [1], [0, 0, 1, 1], [], []>} : vector<128x128xbf16>, vector<128x128xbf16>, vector<128x128xf32> -> vector<128x128xf32>
    %c0_41 = arith.constant 0 : index
    %c0_42 = arith.constant 0 : index
    %80 = vector.load %arg13[%c0_41, %c0_42] : memref<1x128xf32, #tpu.memory_space<vmem>>, vector<1x128xf32>
    %81 = vector.shape_cast %80 : vector<1x128xf32> to vector<128xf32>
    %82 = vector.shape_cast %81 : vector<128xf32> to vector<1x128xf32>
    %83 = vector.broadcast %82 : vector<1x128xf32> to vector<128x128xf32>
    %84 = arith.addf %79, %83 : vector<128x128xf32>
    %85 = vector.shape_cast %84 : vector<128x128xf32> to vector<8x16x128xf32>
    %cst_43 = arith.constant 0.353553385 : f32
    %86 = vector.broadcast %cst_43 : f32 to vector<8x16x128xf32>
    %87 = arith.mulf %85, %86 : vector<8x16x128xf32>
    %88 = arith.truncf %1 : vector<8x16x128xf32> to vector<8x16x128xbf16>
    %89 = vector.shape_cast %88 : vector<8x16x128xbf16> to vector<128x128xbf16>
    %c0_44 = arith.constant 0 : index
    %c0_45 = arith.constant 0 : index
    %90 = vector.load %arg14[%c0_44, %c0_45] : memref<128x128xbf16, #tpu.memory_space<vmem>>, vector<128x128xbf16>
    %cst_46 = arith.constant dense<0.000000e+00> : vector<128x128xf32>
    %91 = tpu.matmul %89, %90, %cst_46 {dimension_numbers = #tpu.dot_dimension_numbers<[1], [0], [0], [1], [0, 0, 1, 1], [], []>} : vector<128x128xbf16>, vector<128x128xbf16>, vector<128x128xf32> -> vector<128x128xf32>
    %c0_47 = arith.constant 0 : index
    %c0_48 = arith.constant 0 : index
    %92 = vector.load %arg15[%c0_47, %c0_48] : memref<1x128xf32, #tpu.memory_space<vmem>>, vector<1x128xf32>
    %93 = vector.shape_cast %92 : vector<1x128xf32> to vector<128xf32>
    %94 = vector.shape_cast %93 : vector<128xf32> to vector<1x128xf32>
    %95 = vector.broadcast %94 : vector<1x128xf32> to vector<128x128xf32>
    %96 = arith.addf %91, %95 : vector<128x128xf32>
    %97 = vector.shape_cast %96 : vector<128x128xf32> to vector<8x16x128xf32>
    %98 = arith.truncf %3 : vector<8x16x128xf32> to vector<8x16x128xbf16>
    %99 = vector.shape_cast %98 : vector<8x16x128xbf16> to vector<128x128xbf16>
    %c0_49 = arith.constant 0 : index
    %c0_50 = arith.constant 0 : index
    %100 = vector.load %arg16[%c0_49, %c0_50] : memref<128x128xbf16, #tpu.memory_space<vmem>>, vector<128x128xbf16>
    %cst_51 = arith.constant dense<0.000000e+00> : vector<128x128xf32>
    %101 = tpu.matmul %99, %100, %cst_51 {dimension_numbers = #tpu.dot_dimension_numbers<[1], [0], [0], [1], [0, 0, 1, 1], [], []>} : vector<128x128xbf16>, vector<128x128xbf16>, vector<128x128xf32> -> vector<128x128xf32>
    %c0_52 = arith.constant 0 : index
    %c0_53 = arith.constant 0 : index
    %102 = vector.load %arg17[%c0_52, %c0_53] : memref<1x128xf32, #tpu.memory_space<vmem>>, vector<1x128xf32>
    %103 = vector.shape_cast %102 : vector<1x128xf32> to vector<128xf32>
    %104 = vector.shape_cast %103 : vector<128xf32> to vector<1x128xf32>
    %105 = vector.broadcast %104 : vector<1x128xf32> to vector<128x128xf32>
    %106 = arith.addf %101, %105 : vector<128x128xf32>
    %107 = vector.shape_cast %106 : vector<128x128xf32> to vector<8x16x128xf32>
    %108 = vector.shape_cast %5 : vector<8x16x128xbf16> to vector<128x128xbf16>
    %c0_54 = arith.constant 0 : index
    %c0_55 = arith.constant 0 : index
    %109 = vector.load %arg18[%c0_54, %c0_55] : memref<128x128xbf16, #tpu.memory_space<vmem>>, vector<128x128xbf16>
    %cst_56 = arith.constant dense<0.000000e+00> : vector<128x128xf32>
    %110 = tpu.matmul %108, %109, %cst_56 {dimension_numbers = #tpu.dot_dimension_numbers<[1], [0], [0], [1], [0, 0, 1, 1], [], []>} : vector<128x128xbf16>, vector<128x128xbf16>, vector<128x128xf32> -> vector<128x128xf32>
    %c0_57 = arith.constant 0 : index
    %c0_58 = arith.constant 0 : index
    %111 = vector.load %arg19[%c0_57, %c0_58] : memref<1x128xf32, #tpu.memory_space<vmem>>, vector<1x128xf32>
    %112 = vector.shape_cast %111 : vector<1x128xf32> to vector<128xf32>
    %113 = vector.shape_cast %112 : vector<128xf32> to vector<1x128xf32>
    %114 = vector.broadcast %113 : vector<1x128xf32> to vector<128x128xf32>
    %115 = arith.addf %110, %114 : vector<128x128xf32>
    %116 = vector.shape_cast %115 : vector<128x128xf32> to vector<8x16x128xf32>
    %117 = vector.shape_cast %7 : vector<8x16x128xbf16> to vector<128x128xbf16>
    %c0_59 = arith.constant 0 : index
    %c0_60 = arith.constant 0 : index
    %118 = vector.load %arg20[%c0_59, %c0_60] : memref<128x128xbf16, #tpu.memory_space<vmem>>, vector<128x128xbf16>
    %cst_61 = arith.constant dense<0.000000e+00> : vector<128x128xf32>
    %119 = tpu.matmul %117, %118, %cst_61 {dimension_numbers = #tpu.dot_dimension_numbers<[1], [0], [0], [1], [0, 0, 1, 1], [], []>} : vector<128x128xbf16>, vector<128x128xbf16>, vector<128x128xf32> -> vector<128x128xf32>
    %c0_62 = arith.constant 0 : index
    %c0_63 = arith.constant 0 : index
    %120 = vector.load %arg21[%c0_62, %c0_63] : memref<1x128xf32, #tpu.memory_space<vmem>>, vector<1x128xf32>
    %121 = vector.shape_cast %120 : vector<1x128xf32> to vector<128xf32>
    %122 = vector.shape_cast %121 : vector<128xf32> to vector<1x128xf32>
    %123 = vector.broadcast %122 : vector<1x128xf32> to vector<128x128xf32>
    %124 = arith.addf %119, %123 : vector<128x128xf32>
    %125 = vector.shape_cast %124 : vector<128x128xf32> to vector<8x16x128xf32>
    %126 = arith.truncf %76 : vector<8x16x128xf32> to vector<8x16x128xbf16>
    %127 = arith.truncf %125 : vector<8x16x128xf32> to vector<8x16x128xbf16>
    "tpu.trace_start"() <{level = 10 : i32, message = "hwc,hvc->hwv"}> : () -> ()
    %cst_64 = arith.constant dense<0.000000e+00> : vector<8x16x16xf32>
    %128 = tpu.matmul %126, %127, %cst_64 {dimension_numbers = #tpu.dot_dimension_numbers<[2], [2], [1], [1], [0, 0, 0, 1, 1, 1], [0], [0]>} : vector<8x16x128xbf16>, vector<8x16x128xbf16>, vector<8x16x16xf32> -> vector<8x16x16xf32>
    "tpu.trace_stop"() : () -> ()
    %cst_65 = arith.constant dense<0xFF800000> : vector<8x16xf32>
    %129 = vector.multi_reduction <maximumf>, %128, %cst_65 [2] : vector<8x16x16xf32> to vector<8x16xf32>
    %130 = vector.shape_cast %129 : vector<8x16xf32> to vector<8x16x1xf32>
    %131 = vector.broadcast %130 : vector<8x16x1xf32> to vector<8x16x16xf32>
    %132 = arith.subf %128, %131 : vector<8x16x16xf32>
    %133 = math.exp %132 : vector<8x16x16xf32>
    %cst_66 = arith.constant dense<0.000000e+00> : vector<8x16xf32>
    %134 = vector.multi_reduction <add>, %133, %cst_66 [2] : vector<8x16x16xf32> to vector<8x16xf32>
    %135 = vector.shape_cast %134 : vector<8x16xf32> to vector<8x16x1xf32>
    %136 = tpu.reciprocal %135 {approx = true} : vector<8x16x1xf32> -> vector<8x16x1xf32>
    %137 = vector.broadcast %136 : vector<8x16x1xf32> to vector<8x16x16xf32>
    %138 = arith.mulf %133, %137 : vector<8x16x16xf32>
    %139 = arith.truncf %138 : vector<8x16x16xf32> to vector<8x16x16xbf16>
    %140 = arith.truncf %107 : vector<8x16x128xf32> to vector<8x16x128xbf16>
    "tpu.trace_start"() <{level = 10 : i32, message = "hwv,hvc->hwc"}> : () -> ()
    %cst_67 = arith.constant dense<0.000000e+00> : vector<8x16x128xf32>
    %141 = tpu.matmul %139, %140, %cst_67 {dimension_numbers = #tpu.dot_dimension_numbers<[2], [1], [1], [2], [0, 0, 0, 1, 1, 2], [0], [0]>} : vector<8x16x16xbf16>, vector<8x16x128xbf16>, vector<8x16x128xf32> -> vector<8x16x128xf32>
    "tpu.trace_stop"() : () -> ()
    %142 = arith.truncf %87 : vector<8x16x128xf32> to vector<8x16x128xbf16>
    %143 = arith.truncf %116 : vector<8x16x128xf32> to vector<8x16x128xbf16>
    "tpu.trace_start"() <{level = 10 : i32, message = "hwc,hvc->hwv"}> : () -> ()
    %cst_68 = arith.constant dense<0.000000e+00> : vector<8x16x16xf32>
    %144 = tpu.matmul %142, %143, %cst_68 {dimension_numbers = #tpu.dot_dimension_numbers<[2], [2], [1], [1], [0, 0, 0, 1, 1, 1], [0], [0]>} : vector<8x16x128xbf16>, vector<8x16x128xbf16>, vector<8x16x16xf32> -> vector<8x16x16xf32>
    "tpu.trace_stop"() : () -> ()
    %cst_69 = arith.constant dense<0xFF800000> : vector<8x16xf32>
    %145 = vector.multi_reduction <maximumf>, %144, %cst_69 [2] : vector<8x16x16xf32> to vector<8x16xf32>
    %146 = vector.shape_cast %145 : vector<8x16xf32> to vector<8x16x1xf32>
    %147 = vector.broadcast %146 : vector<8x16x1xf32> to vector<8x16x16xf32>
    %148 = arith.subf %144, %147 : vector<8x16x16xf32>
    %149 = math.exp %148 : vector<8x16x16xf32>
    %cst_70 = arith.constant dense<0.000000e+00> : vector<8x16xf32>
    %150 = vector.multi_reduction <add>, %149, %cst_70 [2] : vector<8x16x16xf32> to vector<8x16xf32>
    %151 = vector.shape_cast %150 : vector<8x16xf32> to vector<8x16x1xf32>
    %152 = tpu.reciprocal %151 {approx = true} : vector<8x16x1xf32> -> vector<8x16x1xf32>
    %153 = vector.broadcast %152 : vector<8x16x1xf32> to vector<8x16x16xf32>
    %154 = arith.mulf %149, %153 : vector<8x16x16xf32>
    %155 = arith.truncf %154 : vector<8x16x16xf32> to vector<8x16x16xbf16>
    %156 = arith.truncf %97 : vector<8x16x128xf32> to vector<8x16x128xbf16>
    "tpu.trace_start"() <{level = 10 : i32, message = "hwv,hvc->hwc"}> : () -> ()
    %cst_71 = arith.constant dense<0.000000e+00> : vector<8x16x128xf32>
    %157 = tpu.matmul %155, %156, %cst_71 {dimension_numbers = #tpu.dot_dimension_numbers<[2], [1], [1], [2], [0, 0, 0, 1, 1, 2], [0], [0]>} : vector<8x16x16xbf16>, vector<8x16x128xbf16>, vector<8x16x128xf32> -> vector<8x16x128xf32>
    "tpu.trace_stop"() : () -> ()
    %c0_72 = arith.constant 0 : index
    %c0_73 = arith.constant 0 : index
    %158 = vector.load %arg22[%c0_72, %c0_73] : memref<1x128xf32, #tpu.memory_space<vmem>>, vector<1x128xf32>
    %159 = vector.shape_cast %158 : vector<1x128xf32> to vector<128xf32>
    %c0_74 = arith.constant 0 : index
    %c0_75 = arith.constant 0 : index
    %160 = vector.load %arg23[%c0_74, %c0_75] : memref<1x128xf32, #tpu.memory_space<vmem>>, vector<1x128xf32>
    %161 = vector.shape_cast %160 : vector<1x128xf32> to vector<128xf32>
    %162 = vector.shape_cast %159 : vector<128xf32> to vector<1x1x128xf32>
    %163 = vector.broadcast %162 : vector<1x1x128xf32> to vector<8x16x128xf32>
    %164 = arith.mulf %141, %163 : vector<8x16x128xf32>
    %165 = arith.addf %1, %164 : vector<8x16x128xf32>
    %c0_76 = arith.constant 0 : index
    %c0_77 = arith.constant 0 : index
    %c0_78 = arith.constant 0 : index
    %c0_79 = arith.constant 0 : index
    %166 = vector.load %arg24[%c0_76, %c0_77, %c0_78, %c0_79] : memref<1x8x16x128xf32, #tpu.memory_space<vmem>>, vector<1x8x16x128xf32>
    %167 = vector.shape_cast %166 : vector<1x8x16x128xf32> to vector<8x16x128xf32>
    %168 = vector.shape_cast %165 : vector<8x16x128xf32> to vector<1x8x16x128xf32>
    tpu.vector_store %arg24[%c0_76, %c0_77, %c0_78, %c0_79], %168 {strides = array<i32>} : memref<1x8x16x128xf32, #tpu.memory_space<vmem>>, vector<1x8x16x128xf32>,
    %169 = vector.shape_cast %161 : vector<128xf32> to vector<1x1x128xf32>
    %170 = vector.broadcast %169 : vector<1x1x128xf32> to vector<8x16x128xf32>
    %171 = arith.mulf %157, %170 : vector<8x16x128xf32>
    %172 = arith.addf %3, %171 : vector<8x16x128xf32>
    %c0_80 = arith.constant 0 : index
    %c0_81 = arith.constant 0 : index
    %c0_82 = arith.constant 0 : index
    %c0_83 = arith.constant 0 : index
    %173 = vector.load %arg25[%c0_80, %c0_81, %c0_82, %c0_83] : memref<1x8x16x128xf32, #tpu.memory_space<vmem>>, vector<1x8x16x128xf32>
    %174 = vector.shape_cast %173 : vector<1x8x16x128xf32> to vector<8x16x128xf32>
    %175 = vector.shape_cast %172 : vector<8x16x128xf32> to vector<1x8x16x128xf32>
    tpu.vector_store %arg25[%c0_80, %c0_81, %c0_82, %c0_83], %175 {strides = array<i32>} : memref<1x8x16x128xf32, #tpu.memory_space<vmem>>, vector<1x8x16x128xf32>,
    return
  }
  func.func @transform_0(%arg0: i32, %arg1: i32) -> (i32, i32, i32, i32) {
    %c0_i32 = arith.constant 0 : i32
    %c0_i32_0 = arith.constant 0 : i32
    %c0_i32_1 = arith.constant 0 : i32
    return %arg0, %arg1, %c0_i32, %c0_i32_0 : i32, i32, i32, i32
  }
  func.func @transform_1(%arg0: i32, %arg1: i32) -> (i32, i32, i32, i32) {
    %c0_i32 = arith.constant 0 : i32
    %c0_i32_0 = arith.constant 0 : i32
    %c0_i32_1 = arith.constant 0 : i32
    return %arg0, %arg1, %c0_i32, %c0_i32_0 : i32, i32, i32, i32
  }
  func.func @transform_2(%arg0: i32, %arg1: i32) -> (i32, i32, i32, i32) {
    %c0_i32 = arith.constant 0 : i32
    %c0_i32_0 = arith.constant 0 : i32
    %c0_i32_1 = arith.constant 0 : i32
    return %arg0, %arg1, %c0_i32, %c0_i32_0 : i32, i32, i32, i32
  }
  func.func @transform_3(%arg0: i32, %arg1: i32) -> (i32, i32, i32, i32) {
    %c0_i32 = arith.constant 0 : i32
    %c0_i32_0 = arith.constant 0 : i32
    %c0_i32_1 = arith.constant 0 : i32
    return %arg0, %arg1, %c0_i32, %c0_i32_0 : i32, i32, i32, i32
  }
  func.func @transform_4(%arg0: i32, %arg1: i32) -> (i32, i32) {
    %c0_i32 = arith.constant 0 : i32
    %c0_i32_0 = arith.constant 0 : i32
    %c0_i32_1 = arith.constant 0 : i32
    return %c0_i32, %c0_i32_0 : i32, i32
  }
  func.func @transform_5(%arg0: i32, %arg1: i32) -> (i32, i32) {
    %c0_i32 = arith.constant 0 : i32
    %c0_i32_0 = arith.constant 0 : i32
    %c0_i32_1 = arith.constant 0 : i32
    return %c0_i32, %c0_i32_0 : i32, i32
  }
  func.func @transform_6(%arg0: i32, %arg1: i32) -> (i32, i32) {
    %c0_i32 = arith.constant 0 : i32
    %c0_i32_0 = arith.constant 0 : i32
    %c0_i32_1 = arith.constant 0 : i32
    return %c0_i32, %c0_i32_0 : i32, i32
  }
  func.func @transform_7(%arg0: i32, %arg1: i32) -> (i32, i32) {
    %c0_i32 = arith.constant 0 : i32
    %c0_i32_0 = arith.constant 0 : i32
    %c0_i32_1 = arith.constant 0 : i32
    return %c0_i32, %c0_i32_0 : i32, i32
  }
  func.func @transform_8(%arg0: i32, %arg1: i32) -> (i32, i32) {
    %c0_i32 = arith.constant 0 : i32
    %c0_i32_0 = arith.constant 0 : i32
    %c0_i32_1 = arith.constant 0 : i32
    return %c0_i32, %c0_i32_0 : i32, i32
  }
  func.func @transform_9(%arg0: i32, %arg1: i32) -> (i32, i32) {
    %c0_i32 = arith.constant 0 : i32
    %c0_i32_0 = arith.constant 0 : i32
    %c0_i32_1 = arith.constant 0 : i32
    return %c0_i32, %c0_i32_0 : i32, i32
  }
  func.func @transform_10(%arg0: i32, %arg1: i32) -> (i32, i32) {
    %c0_i32 = arith.constant 0 : i32
    %c0_i32_0 = arith.constant 0 : i32
    %c0_i32_1 = arith.constant 0 : i32
    return %c0_i32, %c0_i32_0 : i32, i32
  }
  func.func @transform_11(%arg0: i32, %arg1: i32) -> (i32, i32) {
    %c0_i32 = arith.constant 0 : i32
    %c0_i32_0 = arith.constant 0 : i32
    %c0_i32_1 = arith.constant 0 : i32
    return %c0_i32, %c0_i32_0 : i32, i32
  }
  func.func @transform_12(%arg0: i32, %arg1: i32) -> (i32, i32) {
    %c0_i32 = arith.constant 0 : i32
    %c0_i32_0 = arith.constant 0 : i32
    %c0_i32_1 = arith.constant 0 : i32
    return %c0_i32, %c0_i32_0 : i32, i32
  }
  func.func @transform_13(%arg0: i32, %arg1: i32) -> (i32, i32) {
    %c0_i32 = arith.constant 0 : i32
    %c0_i32_0 = arith.constant 0 : i32
    %c0_i32_1 = arith.constant 0 : i32
    return %c0_i32, %c0_i32_0 : i32, i32
  }
  func.func @transform_14(%arg0: i32, %arg1: i32) -> (i32, i32) {
    %c0_i32 = arith.constant 0 : i32
    %c0_i32_0 = arith.constant 0 : i32
    %c0_i32_1 = arith.constant 0 : i32
    return %c0_i32, %c0_i32_0 : i32, i32
  }
  func.func @transform_15(%arg0: i32, %arg1: i32) -> (i32, i32) {
    %c0_i32 = arith.constant 0 : i32
    %c0_i32_0 = arith.constant 0 : i32
    %c0_i32_1 = arith.constant 0 : i32
    return %c0_i32, %c0_i32_0 : i32, i32
  }
  func.func @transform_16(%arg0: i32, %arg1: i32) -> (i32, i32) {
    %c0_i32 = arith.constant 0 : i32
    %c0_i32_0 = arith.constant 0 : i32
    %c0_i32_1 = arith.constant 0 : i32
    return %c0_i32, %c0_i32_0 : i32, i32
  }
  func.func @transform_17(%arg0: i32, %arg1: i32) -> (i32, i32) {
    %c0_i32 = arith.constant 0 : i32
    %c0_i32_0 = arith.constant 0 : i32
    %c0_i32_1 = arith.constant 0 : i32
    return %c0_i32, %c0_i32_0 : i32, i32
  }
  func.func @transform_18(%arg0: i32, %arg1: i32) -> (i32, i32) {
    %c0_i32 = arith.constant 0 : i32
    %c0_i32_0 = arith.constant 0 : i32
    %c0_i32_1 = arith.constant 0 : i32
    return %c0_i32, %c0_i32_0 : i32, i32
  }
  func.func @transform_19(%arg0: i32, %arg1: i32) -> (i32, i32) {
    %c0_i32 = arith.constant 0 : i32
    %c0_i32_0 = arith.constant 0 : i32
    %c0_i32_1 = arith.constant 0 : i32
    return %c0_i32, %c0_i32_0 : i32, i32
  }
  func.func @transform_20(%arg0: i32, %arg1: i32) -> (i32, i32) {
    %c0_i32 = arith.constant 0 : i32
    %c0_i32_0 = arith.constant 0 : i32
    %c0_i32_1 = arith.constant 0 : i32
    return %c0_i32, %c0_i32_0 : i32, i32
  }
  func.func @transform_21(%arg0: i32, %arg1: i32) -> (i32, i32) {
    %c0_i32 = arith.constant 0 : i32
    %c0_i32_0 = arith.constant 0 : i32
    %c0_i32_1 = arith.constant 0 : i32
    return %c0_i32, %c0_i32_0 : i32, i32
  }
  func.func @transform_22(%arg0: i32, %arg1: i32) -> (i32, i32, i32, i32) {
    %c0_i32 = arith.constant 0 : i32
    %c0_i32_0 = arith.constant 0 : i32
    %c0_i32_1 = arith.constant 0 : i32
    return %arg0, %arg1, %c0_i32, %c0_i32_0 : i32, i32, i32, i32
  }
  func.func @transform_23(%arg0: i32, %arg1: i32) -> (i32, i32, i32, i32) {
    %c0_i32 = arith.constant 0 : i32
    %c0_i32_0 = arith.constant 0 : i32
    %c0_i32_1 = arith.constant 0 : i32
    return %arg0, %arg1, %c0_i32, %c0_i32_0 : i32, i32, i32, i32
  }
}

</mosaic_0001>

<llo_original>
// kernel: tpu_custom_call.1
$region0: #{tpu_custom_call.1}
  #allocation0 [shape = 'u32[]', space=smem, size = 0x4, offset = 0x4, fixed_abs, tag = 'smem constant byte address 0x4 - core index']
  #allocation1 [shape = 'u32[144,128]{1,0:T(1,128)}', space=vmem, size = 0x12000, scoped, tag = 'internal scratch']
  %s0 = inlined_call_operand.hbm [shape: f32[2,16,16,128], index: 0, kind: input, shape index: {}]
  %s1 = inlined_call_operand.hbm [shape: f32[2,16,16,128], index: 1, kind: input, shape index: {}]
  %s2 = inlined_call_operand.hbm [shape: bf16[2,16,16,128], index: 2, kind: input, shape index: {}]
  %s3 = inlined_call_operand.hbm [shape: bf16[2,16,16,128], index: 3, kind: input, shape index: {}]
  %s4 = inlined_call_operand.vmem [shape: f32[1,128], index: 4, kind: input, shape index: {}]
  %s5 = inlined_call_operand.vmem [shape: f32[1,128], index: 5, kind: input, shape index: {}]
  %s6 = inlined_call_operand.vmem [shape: f32[1,128], index: 6, kind: input, shape index: {}]
  %s7 = inlined_call_operand.vmem [shape: f32[1,128], index: 7, kind: input, shape index: {}]
  %s8 = inlined_call_operand.hbm [shape: bf16[128,128], index: 8, kind: input, shape index: {}]
  %s9 = inlined_call_operand.vmem [shape: f32[1,128], index: 9, kind: input, shape index: {}]
  %s10 = inlined_call_operand.hbm [shape: bf16[128,128], index: 10, kind: input, shape index: {}]
  %s11 = inlined_call_operand.vmem [shape: f32[1,128], index: 11, kind: input, shape index: {}]
  %s12 = inlined_call_operand.hbm [shape: bf16[128,128], index: 12, kind: input, shape index: {}]
  %s13 = inlined_call_operand.vmem [shape: f32[1,128], index: 13, kind: input, shape index: {}]
  %s14 = inlined_call_operand.hbm [shape: bf16[128,128], index: 14, kind: input, shape index: {}]
  %s15 = inlined_call_operand.vmem [shape: f32[1,128], index: 15, kind: input, shape index: {}]
  %s16 = inlined_call_operand.hbm [shape: bf16[128,128], index: 16, kind: input, shape index: {}]
  %s17 = inlined_call_operand.vmem [shape: f32[1,128], index: 17, kind: input, shape index: {}]
  %s18 = inlined_call_operand.hbm [shape: bf16[128,128], index: 18, kind: input, shape index: {}]
  %s19 = inlined_call_operand.vmem [shape: f32[1,128], index: 19, kind: input, shape index: {}]
  %s20 = inlined_call_operand.vmem [shape: f32[1,128], index: 20, kind: input, shape index: {}]
  %s21 = inlined_call_operand.vmem [shape: f32[1,128], index: 21, kind: input, shape index: {}]
  %s22 = inlined_call_operand.hbm [shape: f32[2,16,16,128], index: 22, kind: output, shape index: {0}]
  %s23 = inlined_call_operand.hbm [shape: f32[2,16,16,128], index: 23, kind: output, shape index: {1}]
  %24 = xla_tuple %s22, %s23
  %s25 = sld [smem:[#allocation0]]
  $region169: #{tpu_custom_call.1} parent=0
    _
  %s27 = ssub.s32 1, %s25
  %s28 = scalar_select 0, %s27, %s25
  $region1: #{tpu_custom_call.1} parent=0
    #allocation2 [shape = 'u8[131072]{0}', space=vmem, size = 0x20000, scoped, tag = 'input window, operand 0']
    #allocation3 [shape = 's32[2]{0}', space=sflag, size = 0x8, scoped, tag = 'scoped memory for tpu_custom_call.1']
    #allocation4 [shape = 's32[2]{0}', space=sflag, size = 0x8, scoped, tag = 'scoped memory for tpu_custom_call.1']
    #allocation5 [shape = 'u8[131072]{0}', space=vmem, size = 0x20000, scoped, tag = 'input window, operand 1']
    #allocation6 [shape = 's32[2]{0}', space=sflag, size = 0x8, scoped, tag = 'scoped memory for tpu_custom_call.1']
    #allocation7 [shape = 'u8[65536]{0}', space=vmem, size = 0x10000, scoped, tag = 'input window, operand 2']
    #allocation8 [shape = 'u8[65536]{0}', space=vmem, size = 0x10000, scoped, tag = 'input window, operand 3']
    #allocation9 [shape = 's32[2]{0}', space=sflag, size = 0x8, scoped, tag = 'scoped memory for tpu_custom_call.1']
    #allocation10 [shape = 'u8[32768]{0}', space=vmem, size = 0x8000, scoped, tag = 'input window, operand 8, single buffered']
    #allocation11 [shape = 'u8[32768]{0}', space=vmem, size = 0x8000, scoped, tag = 'input window, operand 10, single buffered']
    #allocation12 [shape = 's32[1]{0}', space=sflag, size = 0x4, scoped, tag = 'scoped memory for tpu_custom_call.1']
    #allocation13 [shape = 'u8[32768]{0}', space=vmem, size = 0x8000, scoped, tag = 'input window, operand 12, single buffered']
    #allocation14 [shape = 'u8[32768]{0}', space=vmem, size = 0x8000, scoped, tag = 'input window, operand 14, single buffered']
    #allocation15 [shape = 's32[1]{0}', space=sflag, size = 0x4, scoped, tag = 'scoped memory for tpu_custom_call.1']
    #allocation16 [shape = 'u8[32768]{0}', space=vmem, size = 0x8000, scoped, tag = 'input window, operand 16, single buffered']
    #allocation17 [shape = 'u8[32768]{0}', space=vmem, size = 0x8000, scoped, tag = 'input window, operand 18, single buffered']
    #allocation18 [shape = 's32[1]{0}', space=sflag, size = 0x4, scoped, tag = 'scoped memory for tpu_custom_call.1']
    #allocation19 [shape = 'u8[131072]{0}', space=vmem, size = 0x20000, scoped, tag = 'output window, operand 0']
    #allocation20 [shape = 'u8[131072]{0}', space=vmem, size = 0x20000, scoped, tag = 'output window, operand 1']
    #allocation21 [shape = 's32[2]{0}', space=sflag, size = 0x8, scoped, tag = 'scoped memory for tpu_custom_call.1']
    %29 = vsyncpa [#allocation3], 0
    %s30 = scalar_lea.sflag [#allocation3], 1
    %31 = vsyncpa %s30, 0
    %32 = vsyncpa [#allocation6], 0
    %s33 = scalar_lea.sflag [#allocation6], 1
    %34 = vsyncpa %s33, 0
    %35 = vsyncpa [#allocation9], 0
    %s36 = scalar_lea.sflag [#allocation9], 1
    %37 = vsyncpa %s36, 0
    %38 = vsyncpa [#allocation12], 0
    %39 = vsyncpa [#allocation15], 0
    %40 = vsyncpa [#allocation18], 0
    %41 = vsyncpa [#allocation4], 0
    %s42 = scalar_lea.sflag [#allocation4], 1
    %43 = vsyncpa %s42, 0
    %44 = vsyncpa [#allocation21], 0
    %s45 = scalar_lea.sflag [#allocation21], 1
    %46 = vsyncpa %s45, 0
    loop: start=0, step=1, limit=6
    $region2: #{tpu_custom_call.1} parent=1 // loop_pre_header
      _
    $region3: #{tpu_custom_call.1} parent=1 // loop_header
      %s48 = sphi 0, %s52
      %p49 = scmp.ge.s32.totalorder %s48, 6
      %s55 = sphi 0, %s67
      %s56 = sphi 0, %s63
      %s57 = sphi 0, %s55
      %s58 = sphi 0, %s56
      %s59 = sphi 0, %s57
      %s60 = sphi 0, %s58
      %s72 = sphi 0, %s74
      %s75 = sphi 0, %s72
      %s76 = sphi 0, %s75
      %s92 = sphi 0, %s76
      %s100 = sphi 0, %s102
      %s103 = sphi 0, %s100
      %s104 = sphi 0, %s103
      %s120 = sphi 0, %s104
      %s128 = sphi 0, %s130
      %s131 = sphi 0, %s128
      %s132 = sphi 0, %s131
      %s148 = sphi 0, %s132
      %s156 = sphi 0, %s158
      %s159 = sphi 0, %s156
      %s160 = sphi 0, %s159
      %s176 = sphi 0, %s160
      %s180 = sphi 0, %s180
      %s182 = sphi 0, %s180
      %s183 = sphi 0, %s182
      %s197 = sphi 0, %s183
      %s201 = sphi 0, %s201
      %s203 = sphi 0, %s201
      %s204 = sphi 0, %s203
      %s218 = sphi 0, %s204
      %s222 = sphi 0, %s222
      %s224 = sphi 0, %s222
      %s225 = sphi 0, %s224
      %s239 = sphi 0, %s225
      %s243 = sphi 0, %s243
      %s245 = sphi 0, %s243
      %s246 = sphi 0, %s245
      %s260 = sphi 0, %s246
      %s264 = sphi 0, %s264
      %s266 = sphi 0, %s264
      %s267 = sphi 0, %s266
      %s281 = sphi 0, %s267
      %s285 = sphi 0, %s285
      %s287 = sphi 0, %s285
      %s288 = sphi 0, %s287
      %s302 = sphi 0, %s288
      %s306 = sphi 0, %s306
      %s308 = sphi 0, %s306
      %s309 = sphi 0, %s308
      %s323 = sphi 0, %s309
      %s327 = sphi 0, %s327
      %s329 = sphi 0, %s327
      %s330 = sphi 0, %s329
      %s344 = sphi 0, %s330
      %s348 = sphi 0, %s348
      %s350 = sphi 0, %s348
      %s351 = sphi 0, %s350
      %s365 = sphi 0, %s351
      %s369 = sphi 0, %s369
      %s371 = sphi 0, %s369
      %s372 = sphi 0, %s371
      %s386 = sphi 0, %s372
      %s390 = sphi 0, %s390
      %s392 = sphi 0, %s390
      %s393 = sphi 0, %s392
      %s407 = sphi 0, %s393
      %s411 = sphi 0, %s411
      %s413 = sphi 0, %s411
      %s414 = sphi 0, %s413
      %s428 = sphi 0, %s414
      %s432 = sphi 0, %s432
      %s434 = sphi 0, %s432
      %s435 = sphi 0, %s434
      %s449 = sphi 0, %s435
      %s453 = sphi 0, %s453
      %s455 = sphi 0, %s453
      %s456 = sphi 0, %s455
      %s470 = sphi 0, %s456
      %s474 = sphi 0, %s474
      %s476 = sphi 0, %s474
      %s477 = sphi 0, %s476
      %s491 = sphi 0, %s477
      %s495 = sphi 0, %s495
      %s497 = sphi 0, %s495
      %s498 = sphi 0, %s497
      %s512 = sphi 0, %s498
      %s516 = sphi 0, %s516
      %s518 = sphi 0, %s516
      %s519 = sphi 0, %s518
      %s533 = sphi 0, %s519
      %s537 = sphi 0, %s537
      %s539 = sphi 0, %s537
      %s540 = sphi 0, %s539
      %s554 = sphi 0, %s540
      %s562 = sphi 0, %s564
      %s565 = sphi 0, %s562
      %s566 = sphi 0, %s565
      %s582 = sphi 0, %s566
      %s590 = sphi 0, %s592
      %s593 = sphi 0, %s590
      %s594 = sphi 0, %s593
      %s610 = sphi 0, %s594
    $region4: #{tpu_custom_call.1} parent=1 // loop_header_branch
      %51 = sbr.rel (%p49) target = $region8
    $region5: #{tpu_custom_call.1} parent=1 // loop_body
      %s53 = ssub.s32 %s48, 1
      %s54 = ssub.s32 %s48, 2
      %s61 = sadd.s32 1, %s56
      %p62 = scmp.ge.s32.totalorder %s61, 2
      %s63 = scalar_select %p62, 0, %s61
      %s64 = sadd.s32 1, %s55
      %s65 = scalar_select %p62, %s64, %s55
      %p66 = scmp.ge.s32.totalorder %s65, 2
      %s67 = scalar_select %p66, 0, %s65
      %s68 = ssub.s32 %s55, %s67
      %s69 = ssub.s32 %s56, %s63
      %s70 = sor.u32 %s68, %s69
      %p71 = scmp.eq.s32.totalorder %s70, 0
      %s73 = sadd.s32 %s72, 1
      %s74 = scalar_select %p71, %s72, %s73
      %p77 = pneg %p71
      %p78 = scmp.eq.s32.totalorder %s48, 3
      %p79 = por %p77, %p78
      %p80 = scmp.ne.s32.totalorder %s72, %s75
      %p81 = scmp.eq.s32.totalorder %s48, 0
      %p82 = por %p80, %p81
      %p83 = scmp.ne.s32.totalorder %s72, %s75
      %p84 = scmp.eq.s32.totalorder %s53, 3
      %p85 = por %p83, %p84
      %p86 = scmp.ne.s32.totalorder %s75, %s76
      %p87 = scmp.eq.s32.totalorder %s53, 0
      %p88 = por %p86, %p87
      %p89 = scmp.ne.s32.totalorder %s75, %s76
      %p90 = scmp.eq.s32.totalorder %s54, 3
      %p91 = por %p89, %p90
      %p93 = scmp.ne.s32.totalorder %s76, %s92
      %p94 = scmp.eq.s32.totalorder %s54, 0
      %p95 = por %p93, %p94
      %s96 = ssub.s32 %s55, %s67
      %s97 = ssub.s32 %s56, %s63
      %s98 = sor.u32 %s96, %s97
      %p99 = scmp.eq.s32.totalorder %s98, 0
      %s101 = sadd.s32 %s100, 1
      %s102 = scalar_select %p99, %s100, %s101
      %p105 = pneg %p99
      %p106 = scmp.eq.s32.totalorder %s48, 3
      %p107 = por %p105, %p106
      %p108 = scmp.ne.s32.totalorder %s100, %s103
      %p109 = scmp.eq.s32.totalorder %s48, 0
      %p110 = por %p108, %p109
      %p111 = scmp.ne.s32.totalorder %s100, %s103
      %p112 = scmp.eq.s32.totalorder %s53, 3
      %p113 = por %p111, %p112
      %p114 = scmp.ne.s32.totalorder %s103, %s104
      %p115 = scmp.eq.s32.totalorder %s53, 0
      %p116 = por %p114, %p115
      %p117 = scmp.ne.s32.totalorder %s103, %s104
      %p118 = scmp.eq.s32.totalorder %s54, 3
      %p119 = por %p117, %p118
      %p121 = scmp.ne.s32.totalorder %s104, %s120
      %p122 = scmp.eq.s32.totalorder %s54, 0
      %p123 = por %p121, %p122
      %s124 = ssub.s32 %s55, %s67
      %s125 = ssub.s32 %s56, %s63
      %s126 = sor.u32 %s124, %s125
      %p127 = scmp.eq.s32.totalorder %s126, 0
      %s129 = sadd.s32 %s128, 1
      %s130 = scalar_select %p127, %s128, %s129
      %p133 = pneg %p127
      %p134 = scmp.eq.s32.totalorder %s48, 3
      %p135 = por %p133, %p134
      %p136 = scmp.ne.s32.totalorder %s128, %s131
      %p137 = scmp.eq.s32.totalorder %s48, 0
      %p138 = por %p136, %p137
      %p139 = scmp.ne.s32.totalorder %s128, %s131
      %p140 = scmp.eq.s32.totalorder %s53, 3
      %p141 = por %p139, %p140
      %p142 = scmp.ne.s32.totalorder %s131, %s132
      %p143 = scmp.eq.s32.totalorder %s53, 0
      %p144 = por %p142, %p143
      %p145 = scmp.ne.s32.totalorder %s131, %s132
      %p146 = scmp.eq.s32.totalorder %s54, 3
      %p147 = por %p145, %p146
      %p149 = scmp.ne.s32.totalorder %s132, %s148
      %p150 = scmp.eq.s32.totalorder %s54, 0
      %p151 = por %p149, %p150
      %s152 = ssub.s32 %s55, %s67
      %s153 = ssub.s32 %s56, %s63
      %s154 = sor.u32 %s152, %s153
      %p155 = scmp.eq.s32.totalorder %s154, 0
      %s157 = sadd.s32 %s156, 1
      %s158 = scalar_select %p155, %s156, %s157
      %p161 = pneg %p155
      %p162 = scmp.eq.s32.totalorder %s48, 3
      %p163 = por %p161, %p162
      %p164 = scmp.ne.s32.totalorder %s156, %s159
      %p165 = scmp.eq.s32.totalorder %s48, 0
      %p166 = por %p164, %p165
      %p167 = scmp.ne.s32.totalorder %s156, %s159
      %p168 = scmp.eq.s32.totalorder %s53, 3
      %p169 = por %p167, %p168
      %p170 = scmp.ne.s32.totalorder %s159, %s160
      %p171 = scmp.eq.s32.totalorder %s53, 0
      %p172 = por %p170, %p171
      %p173 = scmp.ne.s32.totalorder %s159, %s160
      %p174 = scmp.eq.s32.totalorder %s54, 3
      %p175 = por %p173, %p174
      %p177 = scmp.ne.s32.totalorder %s160, %s176
      %p178 = scmp.eq.s32.totalorder %s54, 0
      %p179 = por %p177, %p178
      %s181 = sadd.s32 %s180, 1
      %p184 = scmp.eq.s32.totalorder %s48, 3
      %p185 = scmp.ne.s32.totalorder %s180, %s182
      %p186 = scmp.eq.s32.totalorder %s48, 0
      %p187 = por %p185, %p186
      %p188 = scmp.ne.s32.totalorder %s180, %s182
      %p189 = scmp.eq.s32.totalorder %s53, 3
      %p190 = por %p188, %p189
      %p191 = scmp.ne.s32.totalorder %s182, %s183
      %p192 = scmp.eq.s32.totalorder %s53, 0
      %p193 = por %p191, %p192
      %p194 = scmp.ne.s32.totalorder %s182, %s183
      %p195 = scmp.eq.s32.totalorder %s54, 3
      %p196 = por %p194, %p195
      %p198 = scmp.ne.s32.totalorder %s183, %s197
      %p199 = scmp.eq.s32.totalorder %s54, 0
      %p200 = por %p198, %p199
      %s202 = sadd.s32 %s201, 1
      %p205 = scmp.eq.s32.totalorder %s48, 3
      %p206 = scmp.ne.s32.totalorder %s201, %s203
      %p207 = scmp.eq.s32.totalorder %s48, 0
      %p208 = por %p206, %p207
      %p209 = scmp.ne.s32.totalorder %s201, %s203
      %p210 = scmp.eq.s32.totalorder %s53, 3
      %p211 = por %p209, %p210
      %p212 = scmp.ne.s32.totalorder %s203, %s204
      %p213 = scmp.eq.s32.totalorder %s53, 0
      %p214 = por %p212, %p213
      %p215 = scmp.ne.s32.totalorder %s203, %s204
      %p216 = scmp.eq.s32.totalorder %s54, 3
      %p217 = por %p215, %p216
      %p219 = scmp.ne.s32.totalorder %s204, %s218
      %p220 = scmp.eq.s32.totalorder %s54, 0
      %p221 = por %p219, %p220
      %s223 = sadd.s32 %s222, 1
      %p226 = scmp.eq.s32.totalorder %s48, 3
      %p227 = scmp.ne.s32.totalorder %s222, %s224
      %p228 = scmp.eq.s32.totalorder %s48, 0
      %p229 = por %p227, %p228
      %p230 = scmp.ne.s32.totalorder %s222, %s224
      %p231 = scmp.eq.s32.totalorder %s53, 3
      %p232 = por %p230, %p231
      %p233 = scmp.ne.s32.totalorder %s224, %s225
      %p234 = scmp.eq.s32.totalorder %s53, 0
      %p235 = por %p233, %p234
      %p236 = scmp.ne.s32.totalorder %s224, %s225
      %p237 = scmp.eq.s32.totalorder %s54, 3
      %p238 = por %p236, %p237
      %p240 = scmp.ne.s32.totalorder %s225, %s239
      %p241 = scmp.eq.s32.totalorder %s54, 0
      %p242 = por %p240, %p241
      %s244 = sadd.s32 %s243, 1
      %p247 = scmp.eq.s32.totalorder %s48, 3
      %p248 = scmp.ne.s32.totalorder %s243, %s245
      %p249 = scmp.eq.s32.totalorder %s48, 0
      %p250 = por %p248, %p249
      %p251 = scmp.ne.s32.totalorder %s243, %s245
      %p252 = scmp.eq.s32.totalorder %s53, 3
      %p253 = por %p251, %p252
      %p254 = scmp.ne.s32.totalorder %s245, %s246
      %p255 = scmp.eq.s32.totalorder %s53, 0
      %p256 = por %p254, %p255
      %p257 = scmp.ne.s32.totalorder %s245, %s246
      %p258 = scmp.eq.s32.totalorder %s54, 3
      %p259 = por %p257, %p258
      %p261 = scmp.ne.s32.totalorder %s246, %s260
      %p262 = scmp.eq.s32.totalorder %s54, 0
      %p263 = por %p261, %p262
      %s265 = sadd.s32 %s264, 1
      %p268 = scmp.eq.s32.totalorder %s48, 3
      %p269 = scmp.ne.s32.totalorder %s264, %s266
      %p270 = scmp.eq.s32.totalorder %s48, 0
      %p271 = por %p269, %p270
      %p272 = scmp.ne.s32.totalorder %s264, %s266
      %p273 = scmp.eq.s32.totalorder %s53, 3
      %p274 = por %p272, %p273
      %p275 = scmp.ne.s32.totalorder %s266, %s267
      %p276 = scmp.eq.s32.totalorder %s53, 0
      %p277 = por %p275, %p276
      %p278 = scmp.ne.s32.totalorder %s266, %s267
      %p279 = scmp.eq.s32.totalorder %s54, 3
      %p280 = por %p278, %p279
      %p282 = scmp.ne.s32.totalorder %s267, %s281
      %p283 = scmp.eq.s32.totalorder %s54, 0
      %p284 = por %p282, %p283
      %s286 = sadd.s32 %s285, 1
      %p289 = scmp.eq.s32.totalorder %s48, 3
      %p290 = scmp.ne.s32.totalorder %s285, %s287
      %p291 = scmp.eq.s32.totalorder %s48, 0
      %p292 = por %p290, %p291
      %p293 = scmp.ne.s32.totalorder %s285, %s287
      %p294 = scmp.eq.s32.totalorder %s53, 3
      %p295 = por %p293, %p294
      %p296 = scmp.ne.s32.totalorder %s287, %s288
      %p297 = scmp.eq.s32.totalorder %s53, 0
      %p298 = por %p296, %p297
      %p299 = scmp.ne.s32.totalorder %s287, %s288
      %p300 = scmp.eq.s32.totalorder %s54, 3
      %p301 = por %p299, %p300
      %p303 = scmp.ne.s32.totalorder %s288, %s302
      %p304 = scmp.eq.s32.totalorder %s54, 0
      %p305 = por %p303, %p304
      %s307 = sadd.s32 %s306, 1
      %p310 = scmp.eq.s32.totalorder %s48, 3
      %p311 = scmp.ne.s32.totalorder %s306, %s308
      %p312 = scmp.eq.s32.totalorder %s48, 0
      %p313 = por %p311, %p312
      %p314 = scmp.ne.s32.totalorder %s306, %s308
      %p315 = scmp.eq.s32.totalorder %s53, 3
      %p316 = por %p314, %p315
      %p317 = scmp.ne.s32.totalorder %s308, %s309
      %p318 = scmp.eq.s32.totalorder %s53, 0
      %p319 = por %p317, %p318
      %p320 = scmp.ne.s32.totalorder %s308, %s309
      %p321 = scmp.eq.s32.totalorder %s54, 3
      %p322 = por %p320, %p321
      %p324 = scmp.ne.s32.totalorder %s309, %s323
      %p325 = scmp.eq.s32.totalorder %s54, 0
      %p326 = por %p324, %p325
      %s328 = sadd.s32 %s327, 1
      %p331 = scmp.eq.s32.totalorder %s48, 3
      %p332 = scmp.ne.s32.totalorder %s327, %s329
      %p333 = scmp.eq.s32.totalorder %s48, 0
      %p334 = por %p332, %p333
      %p335 = scmp.ne.s32.totalorder %s327, %s329
      %p336 = scmp.eq.s32.totalorder %s53, 3
      %p337 = por %p335, %p336
      %p338 = scmp.ne.s32.totalorder %s329, %s330
      %p339 = scmp.eq.s32.totalorder %s53, 0
      %p340 = por %p338, %p339
      %p341 = scmp.ne.s32.totalorder %s329, %s330
      %p342 = scmp.eq.s32.totalorder %s54, 3
      %p343 = por %p341, %p342
      %p345 = scmp.ne.s32.totalorder %s330, %s344
      %p346 = scmp.eq.s32.totalorder %s54, 0
      %p347 = por %p345, %p346
      %s349 = sadd.s32 %s348, 1
      %p352 = scmp.eq.s32.totalorder %s48, 3
      %p353 = scmp.ne.s32.totalorder %s348, %s350
      %p354 = scmp.eq.s32.totalorder %s48, 0
      %p355 = por %p353, %p354
      %p356 = scmp.ne.s32.totalorder %s348, %s350
      %p357 = scmp.eq.s32.totalorder %s53, 3
      %p358 = por %p356, %p357
      %p359 = scmp.ne.s32.totalorder %s350, %s351
      %p360 = scmp.eq.s32.totalorder %s53, 0
      %p361 = por %p359, %p360
      %p362 = scmp.ne.s32.totalorder %s350, %s351
      %p363 = scmp.eq.s32.totalorder %s54, 3
      %p364 = por %p362, %p363
      %p366 = scmp.ne.s32.totalorder %s351, %s365
      %p367 = scmp.eq.s32.totalorder %s54, 0
      %p368 = por %p366, %p367
      %s370 = sadd.s32 %s369, 1
      %p373 = scmp.eq.s32.totalorder %s48, 3
      %p374 = scmp.ne.s32.totalorder %s369, %s371
      %p375 = scmp.eq.s32.totalorder %s48, 0
      %p376 = por %p374, %p375
      %p377 = scmp.ne.s32.totalorder %s369, %s371
      %p378 = scmp.eq.s32.totalorder %s53, 3
      %p379 = por %p377, %p378
      %p380 = scmp.ne.s32.totalorder %s371, %s372
      %p381 = scmp.eq.s32.totalorder %s53, 0
      %p382 = por %p380, %p381
      %p383 = scmp.ne.s32.totalorder %s371, %s372
      %p384 = scmp.eq.s32.totalorder %s54, 3
      %p385 = por %p383, %p384
      %p387 = scmp.ne.s32.totalorder %s372, %s386
      %p388 = scmp.eq.s32.totalorder %s54, 0
      %p389 = por %p387, %p388
      %s391 = sadd.s32 %s390, 1
      %p394 = scmp.eq.s32.totalorder %s48, 3
      %p395 = scmp.ne.s32.totalorder %s390, %s392
      %p396 = scmp.eq.s32.totalorder %s48, 0
      %p397 = por %p395, %p396
      %p398 = scmp.ne.s32.totalorder %s390, %s392
      %p399 = scmp.eq.s32.totalorder %s53, 3
      %p400 = por %p398, %p399
      %p401 = scmp.ne.s32.totalorder %s392, %s393
      %p402 = scmp.eq.s32.totalorder %s53, 0
      %p403 = por %p401, %p402
      %p404 = scmp.ne.s32.totalorder %s392, %s393
      %p405 = scmp.eq.s32.totalorder %s54, 3
      %p406 = por %p404, %p405
      %p408 = scmp.ne.s32.totalorder %s393, %s407
      %p409 = scmp.eq.s32.totalorder %s54, 0
      %p410 = por %p408, %p409
      %s412 = sadd.s32 %s411, 1
      %p415 = scmp.eq.s32.totalorder %s48, 3
      %p416 = scmp.ne.s32.totalorder %s411, %s413
      %p417 = scmp.eq.s32.totalorder %s48, 0
      %p418 = por %p416, %p417
      %p419 = scmp.ne.s32.totalorder %s411, %s413
      %p420 = scmp.eq.s32.totalorder %s53, 3
      %p421 = por %p419, %p420
      %p422 = scmp.ne.s32.totalorder %s413, %s414
      %p423 = scmp.eq.s32.totalorder %s53, 0
      %p424 = por %p422, %p423
      %p425 = scmp.ne.s32.totalorder %s413, %s414
      %p426 = scmp.eq.s32.totalorder %s54, 3
      %p427 = por %p425, %p426
      %p429 = scmp.ne.s32.totalorder %s414, %s428
      %p430 = scmp.eq.s32.totalorder %s54, 0
      %p431 = por %p429, %p430
      %s433 = sadd.s32 %s432, 1
      %p436 = scmp.eq.s32.totalorder %s48, 3
      %p437 = scmp.ne.s32.totalorder %s432, %s434
      %p438 = scmp.eq.s32.totalorder %s48, 0
      %p439 = por %p437, %p438
      %p440 = scmp.ne.s32.totalorder %s432, %s434
      %p441 = scmp.eq.s32.totalorder %s53, 3
      %p442 = por %p440, %p441
      %p443 = scmp.ne.s32.totalorder %s434, %s435
      %p444 = scmp.eq.s32.totalorder %s53, 0
      %p445 = por %p443, %p444
      %p446 = scmp.ne.s32.totalorder %s434, %s435
      %p447 = scmp.eq.s32.totalorder %s54, 3
      %p448 = por %p446, %p447
      %p450 = scmp.ne.s32.totalorder %s435, %s449
      %p451 = scmp.eq.s32.totalorder %s54, 0
      %p452 = por %p450, %p451
      %s454 = sadd.s32 %s453, 1
      %p457 = scmp.eq.s32.totalorder %s48, 3
      %p458 = scmp.ne.s32.totalorder %s453, %s455
      %p459 = scmp.eq.s32.totalorder %s48, 0
      %p460 = por %p458, %p459
      %p461 = scmp.ne.s32.totalorder %s453, %s455
      %p462 = scmp.eq.s32.totalorder %s53, 3
      %p463 = por %p461, %p462
      %p464 = scmp.ne.s32.totalorder %s455, %s456
      %p465 = scmp.eq.s32.totalorder %s53, 0
      %p466 = por %p464, %p465
      %p467 = scmp.ne.s32.totalorder %s455, %s456
      %p468 = scmp.eq.s32.totalorder %s54, 3
      %p469 = por %p467, %p468
      %p471 = scmp.ne.s32.totalorder %s456, %s470
      %p472 = scmp.eq.s32.totalorder %s54, 0
      %p473 = por %p471, %p472
      %s475 = sadd.s32 %s474, 1
      %p478 = scmp.eq.s32.totalorder %s48, 3
      %p479 = scmp.ne.s32.totalorder %s474, %s476
      %p480 = scmp.eq.s32.totalorder %s48, 0
      %p481 = por %p479, %p480
      %p482 = scmp.ne.s32.totalorder %s474, %s476
      %p483 = scmp.eq.s32.totalorder %s53, 3
      %p484 = por %p482, %p483
      %p485 = scmp.ne.s32.totalorder %s476, %s477
      %p486 = scmp.eq.s32.totalorder %s53, 0
      %p487 = por %p485, %p486
      %p488 = scmp.ne.s32.totalorder %s476, %s477
      %p489 = scmp.eq.s32.totalorder %s54, 3
      %p490 = por %p488, %p489
      %p492 = scmp.ne.s32.totalorder %s477, %s491
      %p493 = scmp.eq.s32.totalorder %s54, 0
      %p494 = por %p492, %p493
      %s496 = sadd.s32 %s495, 1
      %p499 = scmp.eq.s32.totalorder %s48, 3
      %p500 = scmp.ne.s32.totalorder %s495, %s497
      %p501 = scmp.eq.s32.totalorder %s48, 0
      %p502 = por %p500, %p501
      %p503 = scmp.ne.s32.totalorder %s495, %s497
      %p504 = scmp.eq.s32.totalorder %s53, 3
      %p505 = por %p503, %p504
      %p506 = scmp.ne.s32.totalorder %s497, %s498
      %p507 = scmp.eq.s32.totalorder %s53, 0
      %p508 = por %p506, %p507
      %p509 = scmp.ne.s32.totalorder %s497, %s498
      %p510 = scmp.eq.s32.totalorder %s54, 3
      %p511 = por %p509, %p510
      %p513 = scmp.ne.s32.totalorder %s498, %s512
      %p514 = scmp.eq.s32.totalorder %s54, 0
      %p515 = por %p513, %p514
      %s517 = sadd.s32 %s516, 1
      %p520 = scmp.eq.s32.totalorder %s48, 3
      %p521 = scmp.ne.s32.totalorder %s516, %s518
      %p522 = scmp.eq.s32.totalorder %s48, 0
      %p523 = por %p521, %p522
      %p524 = scmp.ne.s32.totalorder %s516, %s518
      %p525 = scmp.eq.s32.totalorder %s53, 3
      %p526 = por %p524, %p525
      %p527 = scmp.ne.s32.totalorder %s518, %s519
      %p528 = scmp.eq.s32.totalorder %s53, 0
      %p529 = por %p527, %p528
      %p530 = scmp.ne.s32.totalorder %s518, %s519
      %p531 = scmp.eq.s32.totalorder %s54, 3
      %p532 = por %p530, %p531
      %p534 = scmp.ne.s32.totalorder %s519, %s533
      %p535 = scmp.eq.s32.totalorder %s54, 0
      %p536 = por %p534, %p535
      %s538 = sadd.s32 %s537, 1
      %p541 = scmp.eq.s32.totalorder %s48, 3
      %p542 = scmp.ne.s32.totalorder %s537, %s539
      %p543 = scmp.eq.s32.totalorder %s48, 0
      %p544 = por %p542, %p543
      %p545 = scmp.ne.s32.totalorder %s537, %s539
      %p546 = scmp.eq.s32.totalorder %s53, 3
      %p547 = por %p545, %p546
      %p548 = scmp.ne.s32.totalorder %s539, %s540
      %p549 = scmp.eq.s32.totalorder %s53, 0
      %p550 = por %p548, %p549
      %p551 = scmp.ne.s32.totalorder %s539, %s540
      %p552 = scmp.eq.s32.totalorder %s54, 3
      %p553 = por %p551, %p552
      %p555 = scmp.ne.s32.totalorder %s540, %s554
      %p556 = scmp.eq.s32.totalorder %s54, 0
      %p557 = por %p555, %p556
      %s558 = ssub.s32 %s55, %s67
      %s559 = ssub.s32 %s56, %s63
      %s560 = sor.u32 %s558, %s559
      %p561 = scmp.eq.s32.totalorder %s560, 0
      %s563 = sadd.s32 %s562, 1
      %s564 = scalar_select %p561, %s562, %s563
      %p567 = pneg %p561
      %p568 = scmp.eq.s32.totalorder %s48, 3
      %p569 = por %p567, %p568
      %p570 = scmp.ne.s32.totalorder %s562, %s565
      %p571 = scmp.eq.s32.totalorder %s48, 0
      %p572 = por %p570, %p571
      %p573 = scmp.ne.s32.totalorder %s562, %s565
      %p574 = scmp.eq.s32.totalorder %s53, 3
      %p575 = por %p573, %p574
      %p576 = scmp.ne.s32.totalorder %s565, %s566
      %p577 = scmp.eq.s32.totalorder %s53, 0
      %p578 = por %p576, %p577
      %p579 = scmp.ne.s32.totalorder %s565, %s566
      %p580 = scmp.eq.s32.totalorder %s54, 3
      %p581 = por %p579, %p580
      %p583 = scmp.ne.s32.totalorder %s566, %s582
      %p584 = scmp.eq.s32.totalorder %s54, 0
      %p585 = por %p583, %p584
      %s586 = ssub.s32 %s55, %s67
      %s587 = ssub.s32 %s56, %s63
      %s588 = sor.u32 %s586, %s587
      %p589 = scmp.eq.s32.totalorder %s588, 0
      %s591 = sadd.s32 %s590, 1
      %s592 = scalar_select %p589, %s590, %s591
      %p595 = pneg %p589
      %p596 = scmp.eq.s32.totalorder %s48, 3
      %p597 = por %p595, %p596
      %p598 = scmp.ne.s32.totalorder %s590, %s593
      %p599 = scmp.eq.s32.totalorder %s48, 0
      %p600 = por %p598, %p599
      %p601 = scmp.ne.s32.totalorder %s590, %s593
      %p602 = scmp.eq.s32.totalorder %s53, 3
      %p603 = por %p601, %p602
      %p604 = scmp.ne.s32.totalorder %s593, %s594
      %p605 = scmp.eq.s32.totalorder %s53, 0
      %p606 = por %p604, %p605
      %p607 = scmp.ne.s32.totalorder %s593, %s594
      %p608 = scmp.eq.s32.totalorder %s54, 3
      %p609 = por %p607, %p608
      %p611 = scmp.ne.s32.totalorder %s594, %s610
      %p612 = scmp.eq.s32.totalorder %s54, 0
      %p613 = por %p611, %p612
      %p614 = scmp.le.s32.totalorder 1, %s48
      %p615 = scmp.lt.s32.totalorder %s48, 5
      %p616 = pnand %p614, %p615
      %p617 = pneg %p616
      // Predicated region
      $region9: #{tpu_custom_call.1} parent=5 // pred_check
        _
      $region10: #{tpu_custom_call.1} parent=5 // pred_check_branch
        %619 = sbr.rel (%p616) target = $region12
      $region11: #{tpu_custom_call.1} parent=5 // pred_region
        %s620 = ssub.s32 %s48, 1
        // Predicated region
        $region13: #{tpu_custom_call.1} parent=11 // pred_check
          %p621 = pneg %p193
        $region14: #{tpu_custom_call.1} parent=11 // pred_check_branch
          %623 = sbr.rel (%p621) target = $region16
        $region15: #{tpu_custom_call.1} parent=11 // pred_region
          _
        $region16: #{tpu_custom_call.1} parent=11 // pred_fallthru
          _
        // Predicated region
        $region17: #{tpu_custom_call.1} parent=11 // pred_check
          %p624 = pneg %p214
        $region18: #{tpu_custom_call.1} parent=11 // pred_check_branch
          %626 = sbr.rel (%p624) target = $region20
        $region19: #{tpu_custom_call.1} parent=11 // pred_region
          _
        $region20: #{tpu_custom_call.1} parent=11 // pred_fallthru
          _
        // Predicated region
        $region21: #{tpu_custom_call.1} parent=11 // pred_check
          %p627 = pneg %p235
        $region22: #{tpu_custom_call.1} parent=11 // pred_check_branch
          %629 = sbr.rel (%p627) target = $region24
        $region23: #{tpu_custom_call.1} parent=11 // pred_region
          _
        $region24: #{tpu_custom_call.1} parent=11 // pred_fallthru
          _
        // Predicated region
        $region25: #{tpu_custom_call.1} parent=11 // pred_check
          %p630 = pneg %p256
        $region26: #{tpu_custom_call.1} parent=11 // pred_check_branch
          %632 = sbr.rel (%p630) target = $region28
        $region27: #{tpu_custom_call.1} parent=11 // pred_region
          _
        $region28: #{tpu_custom_call.1} parent=11 // pred_fallthru
          _
        // Predicated region
        $region29: #{tpu_custom_call.1} parent=11 // pred_check
          %p633 = pneg %p277
        $region30: #{tpu_custom_call.1} parent=11 // pred_check_branch
          %635 = sbr.rel (%p633) target = $region32
        $region31: #{tpu_custom_call.1} parent=11 // pred_region
          %s637 = ssub.s32 1024, 1024
          %638 = vsyncadd [#allocation9], %s637
          %s639 = sshll.u32 [#allocation10], 4
          %s640 = int_to_ptr.vmem [resolvable:$true] %s639
          %645 = dma.hbm_to_vmem [thread:$0]  %s8, 1024, %s640, [#allocation9], 64, 64, 4
        $region32: #{tpu_custom_call.1} parent=11 // pred_fallthru
          _
        // Predicated region
        $region33: #{tpu_custom_call.1} parent=11 // pred_check
          %p646 = pneg %p298
        $region34: #{tpu_custom_call.1} parent=11 // pred_check_branch
          %648 = sbr.rel (%p646) target = $region36
        $region35: #{tpu_custom_call.1} parent=11 // pred_region
          _
        $region36: #{tpu_custom_call.1} parent=11 // pred_fallthru
          _
        // Predicated region
        $region37: #{tpu_custom_call.1} parent=11 // pred_check
          %p649 = pneg %p319
        $region38: #{tpu_custom_call.1} parent=11 // pred_check_branch
          %651 = sbr.rel (%p649) target = $region40
        $region39: #{tpu_custom_call.1} parent=11 // pred_region
          %s653 = ssub.s32 1024, 1024
          %654 = vsyncadd [#allocation12], %s653
          %s655 = sshll.u32 [#allocation11], 4
          %s656 = int_to_ptr.vmem [resolvable:$true] %s655
          %661 = dma.hbm_to_vmem [thread:$0]  %s10, 1024, %s656, [#allocation12], 64, 64, 4
        $region40: #{tpu_custom_call.1} parent=11 // pred_fallthru
          _
        // Predicated region
        $region41: #{tpu_custom_call.1} parent=11 // pred_check
          %p662 = pneg %p340
        $region42: #{tpu_custom_call.1} parent=11 // pred_check_branch
          %664 = sbr.rel (%p662) target = $region44
        $region43: #{tpu_custom_call.1} parent=11 // pred_region
          _
        $region44: #{tpu_custom_call.1} parent=11 // pred_fallthru
          _
        // Predicated region
        $region45: #{tpu_custom_call.1} parent=11 // pred_check
          %p665 = pneg %p361
        $region46: #{tpu_custom_call.1} parent=11 // pred_check_branch
          %667 = sbr.rel (%p665) target = $region48
        $region47: #{tpu_custom_call.1} parent=11 // pred_region
          %s669 = ssub.s32 1024, 1024
          %670 = vsyncadd [#allocation12], %s669
          %s671 = sshll.u32 [#allocation13], 4
          %s672 = int_to_ptr.vmem [resolvable:$true] %s671
          %677 = dma.hbm_to_vmem [thread:$0]  %s12, 1024, %s672, [#allocation12], 64, 64, 4
        $region48: #{tpu_custom_call.1} parent=11 // pred_fallthru
          _
        // Predicated region
        $region49: #{tpu_custom_call.1} parent=11 // pred_check
          %p678 = pneg %p382
        $region50: #{tpu_custom_call.1} parent=11 // pred_check_branch
          %680 = sbr.rel (%p678) target = $region52
        $region51: #{tpu_custom_call.1} parent=11 // pred_region
          _
        $region52: #{tpu_custom_call.1} parent=11 // pred_fallthru
          _
        // Predicated region
        $region53: #{tpu_custom_call.1} parent=11 // pred_check
          %p681 = pneg %p403
        $region54: #{tpu_custom_call.1} parent=11 // pred_check_branch
          %683 = sbr.rel (%p681) target = $region56
        $region55: #{tpu_custom_call.1} parent=11 // pred_region
          %s685 = ssub.s32 1024, 1024
          %686 = vsyncadd [#allocation15], %s685
          %s687 = sshll.u32 [#allocation14], 4
          %s688 = int_to_ptr.vmem [resolvable:$true] %s687
          %693 = dma.hbm_to_vmem [thread:$0]  %s14, 1024, %s688, [#allocation15], 64, 64, 4
        $region56: #{tpu_custom_call.1} parent=11 // pred_fallthru
          _
        // Predicated region
        $region57: #{tpu_custom_call.1} parent=11 // pred_check
          %p694 = pneg %p424
        $region58: #{tpu_custom_call.1} parent=11 // pred_check_branch
          %696 = sbr.rel (%p694) target = $region60
        $region59: #{tpu_custom_call.1} parent=11 // pred_region
          _
        $region60: #{tpu_custom_call.1} parent=11 // pred_fallthru
          _
        // Predicated region
        $region61: #{tpu_custom_call.1} parent=11 // pred_check
          %p697 = pneg %p445
        $region62: #{tpu_custom_call.1} parent=11 // pred_check_branch
          %699 = sbr.rel (%p697) target = $region64
        $region63: #{tpu_custom_call.1} parent=11 // pred_region
          %s701 = ssub.s32 1024, 1024
          %702 = vsyncadd [#allocation15], %s701
          %s703 = sshll.u32 [#allocation16], 4
          %s704 = int_to_ptr.vmem [resolvable:$true] %s703
          %709 = dma.hbm_to_vmem [thread:$0]  %s16, 1024, %s704, [#allocation15], 64, 64, 4
        $region64: #{tpu_custom_call.1} parent=11 // pred_fallthru
          _
        // Predicated region
        $region65: #{tpu_custom_call.1} parent=11 // pred_check
          %p710 = pneg %p466
        $region66: #{tpu_custom_call.1} parent=11 // pred_check_branch
          %712 = sbr.rel (%p710) target = $region68
        $region67: #{tpu_custom_call.1} parent=11 // pred_region
          _
        $region68: #{tpu_custom_call.1} parent=11 // pred_fallthru
          _
        // Predicated region
        $region69: #{tpu_custom_call.1} parent=11 // pred_check
          %p713 = pneg %p487
        $region70: #{tpu_custom_call.1} parent=11 // pred_check_branch
          %715 = sbr.rel (%p713) target = $region72
        $region71: #{tpu_custom_call.1} parent=11 // pred_region
          %s717 = ssub.s32 1024, 1024
          %718 = vsyncadd [#allocation18], %s717
          %s719 = sshll.u32 [#allocation17], 4
          %s720 = int_to_ptr.vmem [resolvable:$true] %s719
          %725 = dma.hbm_to_vmem [thread:$0]  %s18, 1024, %s720, [#allocation18], 64, 64, 4
        $region72: #{tpu_custom_call.1} parent=11 // pred_fallthru
          _
        // Predicated region
        $region73: #{tpu_custom_call.1} parent=11 // pred_check
          %p726 = pneg %p508
        $region74: #{tpu_custom_call.1} parent=11 // pred_check_branch
          %728 = sbr.rel (%p726) target = $region76
        $region75: #{tpu_custom_call.1} parent=11 // pred_region
          _
        $region76: #{tpu_custom_call.1} parent=11 // pred_fallthru
          _
        // Predicated region
        $region77: #{tpu_custom_call.1} parent=11 // pred_check
          %p729 = pneg %p529
        $region78: #{tpu_custom_call.1} parent=11 // pred_check_branch
          %731 = sbr.rel (%p729) target = $region80
        $region79: #{tpu_custom_call.1} parent=11 // pred_region
          _
        $region80: #{tpu_custom_call.1} parent=11 // pred_fallthru
          _
        // Predicated region
        $region81: #{tpu_custom_call.1} parent=11 // pred_check
          %p732 = pneg %p550
        $region82: #{tpu_custom_call.1} parent=11 // pred_check_branch
          %734 = sbr.rel (%p732) target = $region84
        $region83: #{tpu_custom_call.1} parent=11 // pred_region
          _
        $region84: #{tpu_custom_call.1} parent=11 // pred_fallthru
          _
      $region12: #{tpu_custom_call.1} parent=5 // pred_fallthru
        _
      %p735 = scmp.lt.s32.totalorder %s48, 4
      // Predicated region
      $region85: #{tpu_custom_call.1} parent=5 // pred_check
        %p736 = pneg %p735
      $region86: #{tpu_custom_call.1} parent=5 // pred_check_branch
        %738 = sbr.rel (%p736) target = $region88
      $region87: #{tpu_custom_call.1} parent=5 // pred_region
        // Predicated region
        $region89: #{tpu_custom_call.1} parent=87 // pred_check
          %p739 = pneg %p82
        $region90: #{tpu_custom_call.1} parent=87 // pred_check_branch
          %741 = sbr.rel (%p739) target = $region92
        $region91: #{tpu_custom_call.1} parent=87 // pred_region
          %s742 = sand.u32 %s72, 1
          %s743 = scalar_lea.sflag [#allocation3], %s742
          %s744 = sand.u32 %s72, 1
          %s745 = smul.addr %s744, 128
          %s746 = scalar_lea.vmem [#allocation2], %s745
          %s747 = smul.u32 8, %s56
          %s749 = ssub.s32 2048, 2048
          %750 = vsyncadd %s743, %s749
          %s751 = smul.addr %s747, 2
          %s752 = smul.addr %s55, 32
          %s753 = sadd.s32 %s751, %s752
          %s754 = smul.addr %s753, 128
          %s755 = scalar_lea.hbm %s0, %s754
          %s756 = sshll.u32 %s746, 4
          %s757 = int_to_ptr.vmem [resolvable:$true] %s756
          %762 = dma.hbm_to_vmem [thread:$0]  %s755, 2048, %s757, %s743, 128, 128, 8
        $region92: #{tpu_custom_call.1} parent=87 // pred_fallthru
          _
        // Predicated region
        $region93: #{tpu_custom_call.1} parent=87 // pred_check
          %p763 = pneg %p110
        $region94: #{tpu_custom_call.1} parent=87 // pred_check_branch
          %765 = sbr.rel (%p763) target = $region96
        $region95: #{tpu_custom_call.1} parent=87 // pred_region
          %s766 = sand.u32 %s48, 1
          %s767 = scalar_lea.sflag [#allocation6], %s766
          %s768 = sand.u32 %s100, 1
          %s769 = smul.addr %s768, 128
          %s770 = scalar_lea.vmem [#allocation5], %s769
          %s771 = smul.u32 8, %s56
          %s773 = ssub.s32 2048, 2048
          %774 = vsyncadd %s767, %s773
          %s775 = smul.addr %s771, 2
          %s776 = smul.addr %s55, 32
          %s777 = sadd.s32 %s775, %s776
          %s778 = smul.addr %s777, 128
          %s779 = scalar_lea.hbm %s1, %s778
          %s780 = sshll.u32 %s770, 4
          %s781 = int_to_ptr.vmem [resolvable:$true] %s780
          %786 = dma.hbm_to_vmem [thread:$0]  %s779, 2048, %s781, %s767, 128, 128, 8
        $region96: #{tpu_custom_call.1} parent=87 // pred_fallthru
          _
        // Predicated region
        $region97: #{tpu_custom_call.1} parent=87 // pred_check
          %p787 = pneg %p138
        $region98: #{tpu_custom_call.1} parent=87 // pred_check_branch
          %789 = sbr.rel (%p787) target = $region100
        $region99: #{tpu_custom_call.1} parent=87 // pred_region
          %s790 = sand.u32 %s48, 1
          %s791 = scalar_lea.sflag [#allocation6], %s790
          %s792 = sand.u32 %s128, 1
          %s793 = smul.addr %s792, 64
          %s794 = scalar_lea.vmem [#allocation7], %s793
          %s795 = smul.u32 8, %s56
          %s797 = ssub.s32 1024, 1024
          %798 = vsyncadd %s791, %s797
          %s799 = smul.addr %s795, 2
          %s800 = smul.addr %s55, 32
          %s801 = sadd.s32 %s799, %s800
          %s802 = smul.addr %s801, 64
          %s803 = scalar_lea.hbm %s2, %s802
          %s804 = sshll.u32 %s794, 4
          %s805 = int_to_ptr.vmem [resolvable:$true] %s804
          %810 = dma.hbm_to_vmem [thread:$0]  %s803, 1024, %s805, %s791, 64, 64, 4
        $region100: #{tpu_custom_call.1} parent=87 // pred_fallthru
          _
        // Predicated region
        $region101: #{tpu_custom_call.1} parent=87 // pred_check
          %p811 = pneg %p166
        $region102: #{tpu_custom_call.1} parent=87 // pred_check_branch
          %813 = sbr.rel (%p811) target = $region104
        $region103: #{tpu_custom_call.1} parent=87 // pred_region
          %s814 = sand.u32 %s48, 1
          %s815 = scalar_lea.sflag [#allocation9], %s814
          %s816 = sand.u32 %s156, 1
          %s817 = smul.addr %s816, 64
          %s818 = scalar_lea.vmem [#allocation8], %s817
          %s819 = smul.u32 8, %s56
          %s821 = ssub.s32 1024, 1024
          %822 = vsyncadd %s815, %s821
          %s823 = smul.addr %s819, 2
          %s824 = smul.addr %s55, 32
          %s825 = sadd.s32 %s823, %s824
          %s826 = smul.addr %s825, 64
          %s827 = scalar_lea.hbm %s3, %s826
          %s828 = sshll.u32 %s818, 4
          %s829 = int_to_ptr.vmem [resolvable:$true] %s828
          %834 = dma.hbm_to_vmem [thread:$0]  %s827, 1024, %s829, %s815, 64, 64, 4
        $region104: #{tpu_custom_call.1} parent=87 // pred_fallthru
          _
      $region88: #{tpu_custom_call.1} parent=5 // pred_fallthru
        _
      %p835 = scmp.le.s32.totalorder 1, %s48
      %p836 = scmp.lt.s32.totalorder %s48, 5
      %p837 = pnand %p835, %p836
      %p838 = pneg %p837
      // Predicated region
      $region105: #{tpu_custom_call.1} parent=5 // pred_check
        _
      $region106: #{tpu_custom_call.1} parent=5 // pred_check_branch
        %840 = sbr.rel (%p837) target = $region108
      $region107: #{tpu_custom_call.1} parent=5 // pred_region
        %s841 = ssub.s32 %s48, 1
        %s842 = sand.u32 %s75, 1
        %s843 = scalar_lea.sflag [#allocation3], %s842
        %s844 = sand.u32 %s75, 1
        %s845 = smul.addr %s844, 128
        %s846 = scalar_lea.vmem [#allocation2], %s845
        // Predicated region
        $region109: #{tpu_custom_call.1} parent=107 // pred_check
          %p847 = pneg %p88
        $region110: #{tpu_custom_call.1} parent=107 // pred_check_branch
          %849 = sbr.rel (%p847) target = $region112
        $region111: #{tpu_custom_call.1} parent=107 // pred_region
          %850 = dma.done %s843, 2048
        $region112: #{tpu_custom_call.1} parent=107 // pred_fallthru
          _
        %s851 = sand.u32 %s53, 1
        %s852 = scalar_lea.sflag [#allocation6], %s851
        %s853 = sand.u32 %s103, 1
        %s854 = smul.addr %s853, 128
        %s855 = scalar_lea.vmem [#allocation5], %s854
        // Predicated region
        $region113: #{tpu_custom_call.1} parent=107 // pred_check
          %p856 = pneg %p116
        $region114: #{tpu_custom_call.1} parent=107 // pred_check_branch
          %858 = sbr.rel (%p856) target = $region116
        $region115: #{tpu_custom_call.1} parent=107 // pred_region
          %859 = dma.done %s852, 2048
        $region116: #{tpu_custom_call.1} parent=107 // pred_fallthru
          _
        %s860 = sand.u32 %s53, 1
        %s861 = scalar_lea.sflag [#allocation6], %s860
        %s862 = sand.u32 %s131, 1
        %s863 = smul.addr %s862, 64
        %s864 = scalar_lea.vmem [#allocation7], %s863
        // Predicated region
        $region117: #{tpu_custom_call.1} parent=107 // pred_check
          %p865 = pneg %p144
        $region118: #{tpu_custom_call.1} parent=107 // pred_check_branch
          %867 = sbr.rel (%p865) target = $region120
        $region119: #{tpu_custom_call.1} parent=107 // pred_region
          %868 = dma.done %s861, 1024
        $region120: #{tpu_custom_call.1} parent=107 // pred_fallthru
          _
        %s869 = sand.u32 %s53, 1
        %s870 = scalar_lea.sflag [#allocation9], %s869
        %s871 = sand.u32 %s159, 1
        %s872 = smul.addr %s871, 64
        %s873 = scalar_lea.vmem [#allocation8], %s872
        // Predicated region
        $region121: #{tpu_custom_call.1} parent=107 // pred_check
          %p874 = pneg %p172
        $region122: #{tpu_custom_call.1} parent=107 // pred_check_branch
          %876 = sbr.rel (%p874) target = $region124
        $region123: #{tpu_custom_call.1} parent=107 // pred_region
          %877 = dma.done %s870, 1024
        $region124: #{tpu_custom_call.1} parent=107 // pred_fallthru
          _
        // Predicated region
        $region125: #{tpu_custom_call.1} parent=107 // pred_check
          %p878 = pneg %p277
        $region126: #{tpu_custom_call.1} parent=107 // pred_check_branch
          %880 = sbr.rel (%p878) target = $region128
        $region127: #{tpu_custom_call.1} parent=107 // pred_region
          %881 = dma.done [#allocation9], 1024
        $region128: #{tpu_custom_call.1} parent=107 // pred_fallthru
          _
        // Predicated region
        $region129: #{tpu_custom_call.1} parent=107 // pred_check
          %p882 = pneg %p319
        $region130: #{tpu_custom_call.1} parent=107 // pred_check_branch
          %884 = sbr.rel (%p882) target = $region132
        $region131: #{tpu_custom_call.1} parent=107 // pred_region
          %885 = dma.done [#allocation12], 1024
        $region132: #{tpu_custom_call.1} parent=107 // pred_fallthru
          _
        // Predicated region
        $region133: #{tpu_custom_call.1} parent=107 // pred_check
          %p886 = pneg %p361
        $region134: #{tpu_custom_call.1} parent=107 // pred_check_branch
          %888 = sbr.rel (%p886) target = $region136
        $region135: #{tpu_custom_call.1} parent=107 // pred_region
          %889 = dma.done [#allocation12], 1024
        $region136: #{tpu_custom_call.1} parent=107 // pred_fallthru
          _
        // Predicated region
        $region137: #{tpu_custom_call.1} parent=107 // pred_check
          %p890 = pneg %p403
        $region138: #{tpu_custom_call.1} parent=107 // pred_check_branch
          %892 = sbr.rel (%p890) target = $region140
        $region139: #{tpu_custom_call.1} parent=107 // pred_region
          %893 = dma.done [#allocation15], 1024
        $region140: #{tpu_custom_call.1} parent=107 // pred_fallthru
          _
        // Predicated region
        $region141: #{tpu_custom_call.1} parent=107 // pred_check
          %p894 = pneg %p445
        $region142: #{tpu_custom_call.1} parent=107 // pred_check_branch
          %896 = sbr.rel (%p894) target = $region144
        $region143: #{tpu_custom_call.1} parent=107 // pred_region
          %897 = dma.done [#allocation15], 1024
        $region144: #{tpu_custom_call.1} parent=107 // pred_fallthru
          _
        // Predicated region
        $region145: #{tpu_custom_call.1} parent=107 // pred_check
          %p898 = pneg %p487
        $region146: #{tpu_custom_call.1} parent=107 // pred_check_branch
          %900 = sbr.rel (%p898) target = $region148
        $region147: #{tpu_custom_call.1} parent=107 // pred_region
          %901 = dma.done [#allocation18], 1024
        $region148: #{tpu_custom_call.1} parent=107 // pred_fallthru
          _
        %s902 = sand.u32 %s75, 1
        %s903 = scalar_lea.sflag [#allocation3], %s902
        %s904 = sand.u32 %s75, 1
        %s905 = smul.addr %s904, 128
        %s906 = scalar_lea.vmem [#allocation2], %s905
        %p907 = pneg %p88
        %p908 = pneg %p85
        %s909 = sand.u32 %s53, 1
        %s910 = scalar_lea.sflag [#allocation6], %s909
        %s911 = sand.u32 %s103, 1
        %s912 = smul.addr %s911, 128
        %s913 = scalar_lea.vmem [#allocation5], %s912
        %p914 = pneg %p116
        %p915 = pneg %p113
        %s916 = sand.u32 %s53, 1
        %s917 = scalar_lea.sflag [#allocation6], %s916
        %s918 = sand.u32 %s131, 1
        %s919 = smul.addr %s918, 64
        %s920 = scalar_lea.vmem [#allocation7], %s919
        %p921 = pneg %p144
        %p922 = pneg %p141
        %s923 = sand.u32 %s53, 1
        %s924 = scalar_lea.sflag [#allocation9], %s923
        %s925 = sand.u32 %s159, 1
        %s926 = smul.addr %s925, 64
        %s927 = scalar_lea.vmem [#allocation8], %s926
        %p928 = pneg %p172
        %p929 = pneg %p169
        %p930 = pneg %p193
        %p931 = pneg %p190
        %p932 = pneg %p214
        %p933 = pneg %p211
        %p934 = pneg %p235
        %p935 = pneg %p232
        %p936 = pneg %p256
        %p937 = pneg %p253
        %p938 = pneg %p277
        %p939 = pneg %p274
        %p940 = pneg %p298
        %p941 = pneg %p295
        %p942 = pneg %p319
        %p943 = pneg %p316
        %p944 = pneg %p340
        %p945 = pneg %p337
        %p946 = pneg %p361
        %p947 = pneg %p358
        %p948 = pneg %p382
        %p949 = pneg %p379
        %p950 = pneg %p403
        %p951 = pneg %p400
        %p952 = pneg %p424
        %p953 = pneg %p421
        %p954 = pneg %p445
        %p955 = pneg %p442
        %p956 = pneg %p466
        %p957 = pneg %p463
        %p958 = pneg %p487
        %p959 = pneg %p484
        %p960 = pneg %p508
        %p961 = pneg %p505
        %p962 = pneg %p529
        %p963 = pneg %p526
        %p964 = pneg %p550
        %p965 = pneg %p547
        %p966 = pneg %p578
        %p967 = pneg %p575
        %s968 = sand.u32 %s565, 1
        %s969 = scalar_lea.sflag [#allocation4], %s968
        %s970 = sand.u32 %s565, 1
        %s971 = smul.addr %s970, 128
        %s972 = scalar_lea.vmem [#allocation19], %s971
        %p973 = pneg %p606
        %p974 = pneg %p603
        %s975 = sand.u32 %s593, 1
        %s976 = scalar_lea.sflag [#allocation21], %s975
        %s977 = sand.u32 %s593, 1
        %s978 = smul.addr %s977, 128
        %s979 = scalar_lea.vmem [#allocation20], %s978
        %s980 = smul.u32 8, %s58
        %s981 = smul.u32 8, %s58
        %s982 = smul.u32 8, %s58
        %s983 = smul.u32 8, %s58
        %s984 = smul.u32 8, %s58
        %s985 = smul.u32 8, %s58
        %v987 = vld [vmem:[%s846] sm:$0xff]
        %v988 = vld [vmem:[%s846 + $0x8] sm:$0xff]
        %v989 = vld [vmem:[%s846 + $0x10] sm:$0xff]
        %v990 = vld [vmem:[%s846 + $0x18] sm:$0xff]
        %v991 = vld [vmem:[%s846 + $0x20] sm:$0xff]
        %v992 = vld [vmem:[%s846 + $0x28] sm:$0xff]
        %v993 = vld [vmem:[%s846 + $0x30] sm:$0xff]
        %v994 = vld [vmem:[%s846 + $0x38] sm:$0xff]
        %v995 = vld [vmem:[%s846 + $0x40] sm:$0xff]
        %v996 = vld [vmem:[%s846 + $0x48] sm:$0xff]
        %v997 = vld [vmem:[%s846 + $0x50] sm:$0xff]
        %v998 = vld [vmem:[%s846 + $0x58] sm:$0xff]
        %v999 = vld [vmem:[%s846 + $0x60] sm:$0xff]
        %v1000 = vld [vmem:[%s846 + $0x68] sm:$0xff]
        %v1001 = vld [vmem:[%s846 + $0x70] sm:$0xff]
        %v1002 = vld [vmem:[%s846 + $0x78] sm:$0xff]
        %v1003 = vld [vmem:[%s855] sm:$0xff]
        %v1004 = vld [vmem:[%s855 + $0x8] sm:$0xff]
        %v1005 = vld [vmem:[%s855 + $0x10] sm:$0xff]
        %v1006 = vld [vmem:[%s855 + $0x18] sm:$0xff]
        %v1007 = vld [vmem:[%s855 + $0x20] sm:$0xff]
        %v1008 = vld [vmem:[%s855 + $0x28] sm:$0xff]
        %v1009 = vld [vmem:[%s855 + $0x30] sm:$0xff]
        %v1010 = vld [vmem:[%s855 + $0x38] sm:$0xff]
        %v1011 = vld [vmem:[%s855 + $0x40] sm:$0xff]
        %v1012 = vld [vmem:[%s855 + $0x48] sm:$0xff]
        %v1013 = vld [vmem:[%s855 + $0x50] sm:$0xff]
        %v1014 = vld [vmem:[%s855 + $0x58] sm:$0xff]
        %v1015 = vld [vmem:[%s855 + $0x60] sm:$0xff]
        %v1016 = vld [vmem:[%s855 + $0x68] sm:$0xff]
        %v1017 = vld [vmem:[%s855 + $0x70] sm:$0xff]
        %v1018 = vld [vmem:[%s855 + $0x78] sm:$0xff]
        %v1019 = vld [vmem:[%s864] sm:$0xf]
        %v1020 = vld [vmem:[%s864 + $0x4] sm:$0xf]
        %v1021 = vld [vmem:[%s864 + $0x8] sm:$0xf]
        %v1022 = vld [vmem:[%s864 + $0xc] sm:$0xf]
        %v1023 = vld [vmem:[%s864 + $0x10] sm:$0xf]
        %v1024 = vld [vmem:[%s864 + $0x14] sm:$0xf]
        %v1025 = vld [vmem:[%s864 + $0x18] sm:$0xf]
        %v1026 = vld [vmem:[%s864 + $0x1c] sm:$0xf]
        %v1027 = vld [vmem:[%s864 + $0x20] sm:$0xf]
        %v1028 = vld [vmem:[%s864 + $0x24] sm:$0xf]
        %v1029 = vld [vmem:[%s864 + $0x28] sm:$0xf]
        %v1030 = vld [vmem:[%s864 + $0x2c] sm:$0xf]
        %v1031 = vld [vmem:[%s864 + $0x30] sm:$0xf]
        %v1032 = vld [vmem:[%s864 + $0x34] sm:$0xf]
        %v1033 = vld [vmem:[%s864 + $0x38] sm:$0xf]
        %v1034 = vld [vmem:[%s864 + $0x3c] sm:$0xf]
        %v1035 = vld [vmem:[%s873] sm:$0xf]
        %v1036 = vld [vmem:[%s873 + $0x4] sm:$0xf]
        %v1037 = vld [vmem:[%s873 + $0x8] sm:$0xf]
        %v1038 = vld [vmem:[%s873 + $0xc] sm:$0xf]
        %v1039 = vld [vmem:[%s873 + $0x10] sm:$0xf]
        %v1040 = vld [vmem:[%s873 + $0x14] sm:$0xf]
        %v1041 = vld [vmem:[%s873 + $0x18] sm:$0xf]
        %v1042 = vld [vmem:[%s873 + $0x1c] sm:$0xf]
        %v1043 = vld [vmem:[%s873 + $0x20] sm:$0xf]
        %v1044 = vld [vmem:[%s873 + $0x24] sm:$0xf]
        %v1045 = vld [vmem:[%s873 + $0x28] sm:$0xf]
        %v1046 = vld [vmem:[%s873 + $0x2c] sm:$0xf]
        %v1047 = vld [vmem:[%s873 + $0x30] sm:$0xf]
        %v1048 = vld [vmem:[%s873 + $0x34] sm:$0xf]
        %v1049 = vld [vmem:[%s873 + $0x38] sm:$0xf]
        %v1050 = vld [vmem:[%s873 + $0x3c] sm:$0xf]
        %1051 = vadd.xlane.f32.xlu0 %v987
        %v1052 = vpop.xlane.xlu0 %1051
        %1053 = vadd.xlane.f32.xlu0 %v988
        %v1054 = vpop.xlane.xlu0 %1053
        %1055 = vadd.xlane.f32.xlu0 %v989
        %v1056 = vpop.xlane.xlu0 %1055
        %1057 = vadd.xlane.f32.xlu0 %v990
        %v1058 = vpop.xlane.xlu0 %1057
        %1059 = vadd.xlane.f32.xlu0 %v991
        %v1060 = vpop.xlane.xlu0 %1059
        %1061 = vadd.xlane.f32.xlu0 %v992
        %v1062 = vpop.xlane.xlu0 %1061
        %1063 = vadd.xlane.f32.xlu0 %v993
        %v1064 = vpop.xlane.xlu0 %1063
        %1065 = vadd.xlane.f32.xlu0 %v994
        %v1066 = vpop.xlane.xlu0 %1065
        %1067 = vadd.xlane.f32.xlu0 %v995
        %v1068 = vpop.xlane.xlu0 %1067
        %1069 = vadd.xlane.f32.xlu0 %v996
        %v1070 = vpop.xlane.xlu0 %1069
        %1071 = vadd.xlane.f32.xlu0 %v997
        %v1072 = vpop.xlane.xlu0 %1071
        %1073 = vadd.xlane.f32.xlu0 %v998
        %v1074 = vpop.xlane.xlu0 %1073
        %1075 = vadd.xlane.f32.xlu0 %v999
        %v1076 = vpop.xlane.xlu0 %1075
        %1077 = vadd.xlane.f32.xlu0 %v1000
        %v1078 = vpop.xlane.xlu0 %1077
        %1079 = vadd.xlane.f32.xlu0 %v1001
        %v1080 = vpop.xlane.xlu0 %1079
        %1081 = vadd.xlane.f32.xlu0 %v1002
        %v1082 = vpop.xlane.xlu0 %1081
        %v1083 = vmul.f32 %v1052, 0.125
        %v1084 = vmul.f32 %v1054, 0.125
        %v1085 = vmul.f32 %v1056, 0.125
        %v1086 = vmul.f32 %v1058, 0.125
        %v1087 = vmul.f32 %v1060, 0.125
        %v1088 = vmul.f32 %v1062, 0.125
        %v1089 = vmul.f32 %v1064, 0.125
        %v1090 = vmul.f32 %v1066, 0.125
        %v1091 = vmul.f32 %v1068, 0.125
        %v1092 = vmul.f32 %v1070, 0.125
        %v1093 = vmul.f32 %v1072, 0.125
        %v1094 = vmul.f32 %v1074, 0.125
        %v1095 = vmul.f32 %v1076, 0.125
        %v1096 = vmul.f32 %v1078, 0.125
        %v1097 = vmul.f32 %v1080, 0.125
        %v1098 = vmul.f32 %v1082, 0.125
        %v1099 = vmul.f32 %v987, %v987
        %v1100 = vmul.f32 %v988, %v988
        %v1101 = vmul.f32 %v989, %v989
        %v1102 = vmul.f32 %v990, %v990
        %v1103 = vmul.f32 %v991, %v991
        %v1104 = vmul.f32 %v992, %v992
        %v1105 = vmul.f32 %v993, %v993
        %v1106 = vmul.f32 %v994, %v994
        %v1107 = vmul.f32 %v995, %v995
        %v1108 = vmul.f32 %v996, %v996
        %v1109 = vmul.f32 %v997, %v997
        %v1110 = vmul.f32 %v998, %v998
        %v1111 = vmul.f32 %v999, %v999
        %v1112 = vmul.f32 %v1000, %v1000
        %v1113 = vmul.f32 %v1001, %v1001
        %v1114 = vmul.f32 %v1002, %v1002
        %1115 = vadd.xlane.f32.xlu0 %v1099
        %v1116 = vpop.xlane.xlu0 %1115
        %1117 = vadd.xlane.f32.xlu0 %v1100
        %v1118 = vpop.xlane.xlu0 %1117
        %1119 = vadd.xlane.f32.xlu0 %v1101
        %v1120 = vpop.xlane.xlu0 %1119
        %1121 = vadd.xlane.f32.xlu0 %v1102
        %v1122 = vpop.xlane.xlu0 %1121
        %1123 = vadd.xlane.f32.xlu0 %v1103
        %v1124 = vpop.xlane.xlu0 %1123
        %1125 = vadd.xlane.f32.xlu0 %v1104
        %v1126 = vpop.xlane.xlu0 %1125
        %1127 = vadd.xlane.f32.xlu0 %v1105
        %v1128 = vpop.xlane.xlu0 %1127
        %1129 = vadd.xlane.f32.xlu0 %v1106
        %v1130 = vpop.xlane.xlu0 %1129
        %1131 = vadd.xlane.f32.xlu0 %v1107
        %v1132 = vpop.xlane.xlu0 %1131
        %1133 = vadd.xlane.f32.xlu0 %v1108
        %v1134 = vpop.xlane.xlu0 %1133
        %1135 = vadd.xlane.f32.xlu0 %v1109
        %v1136 = vpop.xlane.xlu0 %1135
        %1137 = vadd.xlane.f32.xlu0 %v1110
        %v1138 = vpop.xlane.xlu0 %1137
        %1139 = vadd.xlane.f32.xlu0 %v1111
        %v1140 = vpop.xlane.xlu0 %1139
        %1141 = vadd.xlane.f32.xlu0 %v1112
        %v1142 = vpop.xlane.xlu0 %1141
        %1143 = vadd.xlane.f32.xlu0 %v1113
        %v1144 = vpop.xlane.xlu0 %1143
        %1145 = vadd.xlane.f32.xlu0 %v1114
        %v1146 = vpop.xlane.xlu0 %1145
        %v1147 = vmul.f32 %v1116, 0.125
        %v1148 = vmul.f32 %v1118, 0.125
        %v1149 = vmul.f32 %v1120, 0.125
        %v1150 = vmul.f32 %v1122, 0.125
        %v1151 = vmul.f32 %v1124, 0.125
        %v1152 = vmul.f32 %v1126, 0.125
        %v1153 = vmul.f32 %v1128, 0.125
        %v1154 = vmul.f32 %v1130, 0.125
        %v1155 = vmul.f32 %v1132, 0.125
        %v1156 = vmul.f32 %v1134, 0.125
        %v1157 = vmul.f32 %v1136, 0.125
        %v1158 = vmul.f32 %v1138, 0.125
        %v1159 = vmul.f32 %v1140, 0.125
        %v1160 = vmul.f32 %v1142, 0.125
        %v1161 = vmul.f32 %v1144, 0.125
        %v1162 = vmul.f32 %v1146, 0.125
        %v1163 = vmul.f32 %v1083, %v1083
        %v1164 = vmul.f32 %v1084, %v1084
        %v1165 = vmul.f32 %v1085, %v1085
        %v1166 = vmul.f32 %v1086, %v1086
        %v1167 = vmul.f32 %v1087, %v1087
        %v1168 = vmul.f32 %v1088, %v1088
        %v1169 = vmul.f32 %v1089, %v1089
        %v1170 = vmul.f32 %v1090, %v1090
        %v1171 = vmul.f32 %v1091, %v1091
        %v1172 = vmul.f32 %v1092, %v1092
        %v1173 = vmul.f32 %v1093, %v1093
        %v1174 = vmul.f32 %v1094, %v1094
        %v1175 = vmul.f32 %v1095, %v1095
        %v1176 = vmul.f32 %v1096, %v1096
        %v1177 = vmul.f32 %v1097, %v1097
        %v1178 = vmul.f32 %v1098, %v1098
        %v1179 = vsub.f32 %v1147, %v1163
        %v1180 = vsub.f32 %v1148, %v1164
        %v1181 = vsub.f32 %v1149, %v1165
        %v1182 = vsub.f32 %v1150, %v1166
        %v1183 = vsub.f32 %v1151, %v1167
        %v1184 = vsub.f32 %v1152, %v1168
        %v1185 = vsub.f32 %v1153, %v1169
        %v1186 = vsub.f32 %v1154, %v1170
        %v1187 = vsub.f32 %v1155, %v1171
        %v1188 = vsub.f32 %v1156, %v1172
        %v1189 = vsub.f32 %v1157, %v1173
        %v1190 = vsub.f32 %v1158, %v1174
        %v1191 = vsub.f32 %v1159, %v1175
        %v1192 = vsub.f32 %v1160, %v1176
        %v1193 = vsub.f32 %v1161, %v1177
        %v1194 = vsub.f32 %v1162, %v1178
        %v1195 = vadd.f32 %v1179, 1e-06
        %v1196 = vadd.f32 %v1180, 1e-06
        %v1197 = vadd.f32 %v1181, 1e-06
        %v1198 = vadd.f32 %v1182, 1e-06
        %v1199 = vadd.f32 %v1183, 1e-06
        %v1200 = vadd.f32 %v1184, 1e-06
        %v1201 = vadd.f32 %v1185, 1e-06
        %v1202 = vadd.f32 %v1186, 1e-06
        %v1203 = vadd.f32 %v1187, 1e-06
        %v1204 = vadd.f32 %v1188, 1e-06
        %v1205 = vadd.f32 %v1189, 1e-06
        %v1206 = vadd.f32 %v1190, 1e-06
        %v1207 = vadd.f32 %v1191, 1e-06
        %v1208 = vadd.f32 %v1192, 1e-06
        %v1209 = vadd.f32 %v1193, 1e-06
        %v1210 = vadd.f32 %v1194, 1e-06
        %v1211 = vrsqrt.pop %v1195
        %v1212 = vrsqrt.pop %v1196
        %v1213 = vrsqrt.pop %v1197
        %v1214 = vrsqrt.pop %v1198
        %v1215 = vrsqrt.pop %v1199
        %v1216 = vrsqrt.pop %v1200
        %v1217 = vrsqrt.pop %v1201
        %v1218 = vrsqrt.pop %v1202
        %v1219 = vrsqrt.pop %v1203
        %v1220 = vrsqrt.pop %v1204
        %v1221 = vrsqrt.pop %v1205
        %v1222 = vrsqrt.pop %v1206
        %v1223 = vrsqrt.pop %v1207
        %v1224 = vrsqrt.pop %v1208
        %v1225 = vrsqrt.pop %v1209
        %v1226 = vrsqrt.pop %v1210
        %v1227 = vsub.f32 %v987, %v1083
        %v1228 = vsub.f32 %v988, %v1084
        %v1229 = vsub.f32 %v989, %v1085
        %v1230 = vsub.f32 %v990, %v1086
        %v1231 = vsub.f32 %v991, %v1087
        %v1232 = vsub.f32 %v992, %v1088
        %v1233 = vsub.f32 %v993, %v1089
        %v1234 = vsub.f32 %v994, %v1090
        %v1235 = vsub.f32 %v995, %v1091
        %v1236 = vsub.f32 %v996, %v1092
        %v1237 = vsub.f32 %v997, %v1093
        %v1238 = vsub.f32 %v998, %v1094
        %v1239 = vsub.f32 %v999, %v1095
        %v1240 = vsub.f32 %v1000, %v1096
        %v1241 = vsub.f32 %v1001, %v1097
        %v1242 = vsub.f32 %v1002, %v1098
        %v1243 = vmul.f32 %v1227, %v1211
        %v1244 = vmul.f32 %v1228, %v1212
        %v1245 = vmul.f32 %v1229, %v1213
        %v1246 = vmul.f32 %v1230, %v1214
        %v1247 = vmul.f32 %v1231, %v1215
        %v1248 = vmul.f32 %v1232, %v1216
        %v1249 = vmul.f32 %v1233, %v1217
        %v1250 = vmul.f32 %v1234, %v1218
        %v1251 = vmul.f32 %v1235, %v1219
        %v1252 = vmul.f32 %v1236, %v1220
        %v1253 = vmul.f32 %v1237, %v1221
        %v1254 = vmul.f32 %v1238, %v1222
        %v1255 = vmul.f32 %v1239, %v1223
        %v1256 = vmul.f32 %v1240, %v1224
        %v1257 = vmul.f32 %v1241, %v1225
        %v1258 = vmul.f32 %v1242, %v1226
        %v1259 = vld [vmem:[%s4] sm:$0x1]
        %v1261 = vlaneseq
        %v1262 = vshrl.u32 %v1261, 7
        %v1263 = vsub.s32 0, %v1262
        %v1264 = vrot.slane %v1259, %v1263
        %v1266 = vmul.f32 %v1243, %v1264
        %v1267 = vmul.f32 %v1244, %v1264
        %v1268 = vmul.f32 %v1245, %v1264
        %v1269 = vmul.f32 %v1246, %v1264
        %v1270 = vmul.f32 %v1247, %v1264
        %v1271 = vmul.f32 %v1248, %v1264
        %v1272 = vmul.f32 %v1249, %v1264
        %v1273 = vmul.f32 %v1250, %v1264
        %v1274 = vmul.f32 %v1251, %v1264
        %v1275 = vmul.f32 %v1252, %v1264
        %v1276 = vmul.f32 %v1253, %v1264
        %v1277 = vmul.f32 %v1254, %v1264
        %v1278 = vmul.f32 %v1255, %v1264
        %v1279 = vmul.f32 %v1256, %v1264
        %v1280 = vmul.f32 %v1257, %v1264
        %v1281 = vmul.f32 %v1258, %v1264
        %v1282 = vld [vmem:[%s5] sm:$0x1]
        %v1284 = vlaneseq
        %v1285 = vshrl.u32 %v1284, 7
        %v1286 = vsub.s32 0, %v1285
        %v1287 = vrot.slane %v1282, %v1286
        %v1289 = vadd.f32 %v1266, %v1287
        %v1290 = vadd.f32 %v1267, %v1287
        %v1291 = vadd.f32 %v1268, %v1287
        %v1292 = vadd.f32 %v1269, %v1287
        %v1293 = vadd.f32 %v1270, %v1287
        %v1294 = vadd.f32 %v1271, %v1287
        %v1295 = vadd.f32 %v1272, %v1287
        %v1296 = vadd.f32 %v1273, %v1287
        %v1297 = vadd.f32 %v1274, %v1287
        %v1298 = vadd.f32 %v1275, %v1287
        %v1299 = vadd.f32 %v1276, %v1287
        %v1300 = vadd.f32 %v1277, %v1287
        %v1301 = vadd.f32 %v1278, %v1287
        %v1302 = vadd.f32 %v1279, %v1287
        %v1303 = vadd.f32 %v1280, %v1287
        %v1304 = vadd.f32 %v1281, %v1287
        %v1305 = vpack.c.bf16 %v1290, %v1289
        %v1306 = vpack.c.bf16 %v1292, %v1291
        %v1307 = vpack.c.bf16 %v1294, %v1293
        %v1308 = vpack.c.bf16 %v1296, %v1295
        %v1309 = vpack.c.bf16 %v1298, %v1297
        %v1310 = vpack.c.bf16 %v1300, %v1299
        %v1311 = vpack.c.bf16 %v1302, %v1301
        %v1312 = vpack.c.bf16 %v1304, %v1303
        %1313 = vadd.xlane.f32.xlu0 %v1003
        %v1314 = vpop.xlane.xlu0 %1313
        %1315 = vadd.xlane.f32.xlu0 %v1004
        %v1316 = vpop.xlane.xlu0 %1315
        %1317 = vadd.xlane.f32.xlu0 %v1005
        %v1318 = vpop.xlane.xlu0 %1317
        %1319 = vadd.xlane.f32.xlu0 %v1006
        %v1320 = vpop.xlane.xlu0 %1319
        %1321 = vadd.xlane.f32.xlu0 %v1007
        %v1322 = vpop.xlane.xlu0 %1321
        %1323 = vadd.xlane.f32.xlu0 %v1008
        %v1324 = vpop.xlane.xlu0 %1323
        %1325 = vadd.xlane.f32.xlu0 %v1009
        %v1326 = vpop.xlane.xlu0 %1325
        %1327 = vadd.xlane.f32.xlu0 %v1010
        %v1328 = vpop.xlane.xlu0 %1327
        %1329 = vadd.xlane.f32.xlu0 %v1011
        %v1330 = vpop.xlane.xlu0 %1329
        %1331 = vadd.xlane.f32.xlu0 %v1012
        %v1332 = vpop.xlane.xlu0 %1331
        %1333 = vadd.xlane.f32.xlu0 %v1013
        %v1334 = vpop.xlane.xlu0 %1333
        %1335 = vadd.xlane.f32.xlu0 %v1014
        %v1336 = vpop.xlane.xlu0 %1335
        %1337 = vadd.xlane.f32.xlu0 %v1015
        %v1338 = vpop.xlane.xlu0 %1337
        %1339 = vadd.xlane.f32.xlu0 %v1016
        %v1340 = vpop.xlane.xlu0 %1339
        %1341 = vadd.xlane.f32.xlu0 %v1017
        %v1342 = vpop.xlane.xlu0 %1341
        %1343 = vadd.xlane.f32.xlu0 %v1018
        %v1344 = vpop.xlane.xlu0 %1343
        %v1345 = vmul.f32 %v1314, 0.125
        %v1346 = vmul.f32 %v1316, 0.125
        %v1347 = vmul.f32 %v1318, 0.125
        %v1348 = vmul.f32 %v1320, 0.125
        %v1349 = vmul.f32 %v1322, 0.125
        %v1350 = vmul.f32 %v1324, 0.125
        %v1351 = vmul.f32 %v1326, 0.125
        %v1352 = vmul.f32 %v1328, 0.125
        %v1353 = vmul.f32 %v1330, 0.125
        %v1354 = vmul.f32 %v1332, 0.125
        %v1355 = vmul.f32 %v1334, 0.125
        %v1356 = vmul.f32 %v1336, 0.125
        %v1357 = vmul.f32 %v1338, 0.125
        %v1358 = vmul.f32 %v1340, 0.125
        %v1359 = vmul.f32 %v1342, 0.125
        %v1360 = vmul.f32 %v1344, 0.125
        %v1361 = vmul.f32 %v1003, %v1003
        %v1362 = vmul.f32 %v1004, %v1004
        %v1363 = vmul.f32 %v1005, %v1005
        %v1364 = vmul.f32 %v1006, %v1006
        %v1365 = vmul.f32 %v1007, %v1007
        %v1366 = vmul.f32 %v1008, %v1008
        %v1367 = vmul.f32 %v1009, %v1009
        %v1368 = vmul.f32 %v1010, %v1010
        %v1369 = vmul.f32 %v1011, %v1011
        %v1370 = vmul.f32 %v1012, %v1012
        %v1371 = vmul.f32 %v1013, %v1013
        %v1372 = vmul.f32 %v1014, %v1014
        %v1373 = vmul.f32 %v1015, %v1015
        %v1374 = vmul.f32 %v1016, %v1016
        %v1375 = vmul.f32 %v1017, %v1017
        %v1376 = vmul.f32 %v1018, %v1018
        %1377 = vadd.xlane.f32.xlu0 %v1361
        %v1378 = vpop.xlane.xlu0 %1377
        %1379 = vadd.xlane.f32.xlu0 %v1362
        %v1380 = vpop.xlane.xlu0 %1379
        %1381 = vadd.xlane.f32.xlu0 %v1363
        %v1382 = vpop.xlane.xlu0 %1381
        %1383 = vadd.xlane.f32.xlu0 %v1364
        %v1384 = vpop.xlane.xlu0 %1383
        %1385 = vadd.xlane.f32.xlu0 %v1365
        %v1386 = vpop.xlane.xlu0 %1385
        %1387 = vadd.xlane.f32.xlu0 %v1366
        %v1388 = vpop.xlane.xlu0 %1387
        %1389 = vadd.xlane.f32.xlu0 %v1367
        %v1390 = vpop.xlane.xlu0 %1389
        %1391 = vadd.xlane.f32.xlu0 %v1368
        %v1392 = vpop.xlane.xlu0 %1391
        %1393 = vadd.xlane.f32.xlu0 %v1369
        %v1394 = vpop.xlane.xlu0 %1393
        %1395 = vadd.xlane.f32.xlu0 %v1370
        %v1396 = vpop.xlane.xlu0 %1395
        %1397 = vadd.xlane.f32.xlu0 %v1371
        %v1398 = vpop.xlane.xlu0 %1397
        %1399 = vadd.xlane.f32.xlu0 %v1372
        %v1400 = vpop.xlane.xlu0 %1399
        %1401 = vadd.xlane.f32.xlu0 %v1373
        %v1402 = vpop.xlane.xlu0 %1401
        %1403 = vadd.xlane.f32.xlu0 %v1374
        %v1404 = vpop.xlane.xlu0 %1403
        %1405 = vadd.xlane.f32.xlu0 %v1375
        %v1406 = vpop.xlane.xlu0 %1405
        %1407 = vadd.xlane.f32.xlu0 %v1376
        %v1408 = vpop.xlane.xlu0 %1407
        %v1409 = vmul.f32 %v1378, 0.125
        %v1410 = vmul.f32 %v1380, 0.125
        %v1411 = vmul.f32 %v1382, 0.125
        %v1412 = vmul.f32 %v1384, 0.125
        %v1413 = vmul.f32 %v1386, 0.125
        %v1414 = vmul.f32 %v1388, 0.125
        %v1415 = vmul.f32 %v1390, 0.125
        %v1416 = vmul.f32 %v1392, 0.125
        %v1417 = vmul.f32 %v1394, 0.125
        %v1418 = vmul.f32 %v1396, 0.125
        %v1419 = vmul.f32 %v1398, 0.125
        %v1420 = vmul.f32 %v1400, 0.125
        %v1421 = vmul.f32 %v1402, 0.125
        %v1422 = vmul.f32 %v1404, 0.125
        %v1423 = vmul.f32 %v1406, 0.125
        %v1424 = vmul.f32 %v1408, 0.125
        %v1425 = vmul.f32 %v1345, %v1345
        %v1426 = vmul.f32 %v1346, %v1346
        %v1427 = vmul.f32 %v1347, %v1347
        %v1428 = vmul.f32 %v1348, %v1348
        %v1429 = vmul.f32 %v1349, %v1349
        %v1430 = vmul.f32 %v1350, %v1350
        %v1431 = vmul.f32 %v1351, %v1351
        %v1432 = vmul.f32 %v1352, %v1352
        %v1433 = vmul.f32 %v1353, %v1353
        %v1434 = vmul.f32 %v1354, %v1354
        %v1435 = vmul.f32 %v1355, %v1355
        %v1436 = vmul.f32 %v1356, %v1356
        %v1437 = vmul.f32 %v1357, %v1357
        %v1438 = vmul.f32 %v1358, %v1358
        %v1439 = vmul.f32 %v1359, %v1359
        %v1440 = vmul.f32 %v1360, %v1360
        %v1441 = vsub.f32 %v1409, %v1425
        %v1442 = vsub.f32 %v1410, %v1426
        %v1443 = vsub.f32 %v1411, %v1427
        %v1444 = vsub.f32 %v1412, %v1428
        %v1445 = vsub.f32 %v1413, %v1429
        %v1446 = vsub.f32 %v1414, %v1430
        %v1447 = vsub.f32 %v1415, %v1431
        %v1448 = vsub.f32 %v1416, %v1432
        %v1449 = vsub.f32 %v1417, %v1433
        %v1450 = vsub.f32 %v1418, %v1434
        %v1451 = vsub.f32 %v1419, %v1435
        %v1452 = vsub.f32 %v1420, %v1436
        %v1453 = vsub.f32 %v1421, %v1437
        %v1454 = vsub.f32 %v1422, %v1438
        %v1455 = vsub.f32 %v1423, %v1439
        %v1456 = vsub.f32 %v1424, %v1440
        %v1457 = vadd.f32 %v1441, 1e-06
        %v1458 = vadd.f32 %v1442, 1e-06
        %v1459 = vadd.f32 %v1443, 1e-06
        %v1460 = vadd.f32 %v1444, 1e-06
        %v1461 = vadd.f32 %v1445, 1e-06
        %v1462 = vadd.f32 %v1446, 1e-06
        %v1463 = vadd.f32 %v1447, 1e-06
        %v1464 = vadd.f32 %v1448, 1e-06
        %v1465 = vadd.f32 %v1449, 1e-06
        %v1466 = vadd.f32 %v1450, 1e-06
        %v1467 = vadd.f32 %v1451, 1e-06
        %v1468 = vadd.f32 %v1452, 1e-06
        %v1469 = vadd.f32 %v1453, 1e-06
        %v1470 = vadd.f32 %v1454, 1e-06
        %v1471 = vadd.f32 %v1455, 1e-06
        %v1472 = vadd.f32 %v1456, 1e-06
        %v1473 = vrsqrt.pop %v1457
        %v1474 = vrsqrt.pop %v1458
        %v1475 = vrsqrt.pop %v1459
        %v1476 = vrsqrt.pop %v1460
        %v1477 = vrsqrt.pop %v1461
        %v1478 = vrsqrt.pop %v1462
        %v1479 = vrsqrt.pop %v1463
        %v1480 = vrsqrt.pop %v1464
        %v1481 = vrsqrt.pop %v1465
        %v1482 = vrsqrt.pop %v1466
        %v1483 = vrsqrt.pop %v1467
        %v1484 = vrsqrt.pop %v1468
        %v1485 = vrsqrt.pop %v1469
        %v1486 = vrsqrt.pop %v1470
        %v1487 = vrsqrt.pop %v1471
        %v1488 = vrsqrt.pop %v1472
        %v1489 = vsub.f32 %v1003, %v1345
        %v1490 = vsub.f32 %v1004, %v1346
        %v1491 = vsub.f32 %v1005, %v1347
        %v1492 = vsub.f32 %v1006, %v1348
        %v1493 = vsub.f32 %v1007, %v1349
        %v1494 = vsub.f32 %v1008, %v1350
        %v1495 = vsub.f32 %v1009, %v1351
        %v1496 = vsub.f32 %v1010, %v1352
        %v1497 = vsub.f32 %v1011, %v1353
        %v1498 = vsub.f32 %v1012, %v1354
        %v1499 = vsub.f32 %v1013, %v1355
        %v1500 = vsub.f32 %v1014, %v1356
        %v1501 = vsub.f32 %v1015, %v1357
        %v1502 = vsub.f32 %v1016, %v1358
        %v1503 = vsub.f32 %v1017, %v1359
        %v1504 = vsub.f32 %v1018, %v1360
        %v1505 = vmul.f32 %v1489, %v1473
        %v1506 = vmul.f32 %v1490, %v1474
        %v1507 = vmul.f32 %v1491, %v1475
        %v1508 = vmul.f32 %v1492, %v1476
        %v1509 = vmul.f32 %v1493, %v1477
        %v1510 = vmul.f32 %v1494, %v1478
        %v1511 = vmul.f32 %v1495, %v1479
        %v1512 = vmul.f32 %v1496, %v1480
        %v1513 = vmul.f32 %v1497, %v1481
        %v1514 = vmul.f32 %v1498, %v1482
        %v1515 = vmul.f32 %v1499, %v1483
        %v1516 = vmul.f32 %v1500, %v1484
        %v1517 = vmul.f32 %v1501, %v1485
        %v1518 = vmul.f32 %v1502, %v1486
        %v1519 = vmul.f32 %v1503, %v1487
        %v1520 = vmul.f32 %v1504, %v1488
        %v1521 = vld [vmem:[%s6] sm:$0x1]
        %v1523 = vlaneseq
        %v1524 = vshrl.u32 %v1523, 7
        %v1525 = vsub.s32 0, %v1524
        %v1526 = vrot.slane %v1521, %v1525
        %v1528 = vmul.f32 %v1505, %v1526
        %v1529 = vmul.f32 %v1506, %v1526
        %v1530 = vmul.f32 %v1507, %v1526
        %v1531 = vmul.f32 %v1508, %v1526
        %v1532 = vmul.f32 %v1509, %v1526
        %v1533 = vmul.f32 %v1510, %v1526
        %v1534 = vmul.f32 %v1511, %v1526
        %v1535 = vmul.f32 %v1512, %v1526
        %v1536 = vmul.f32 %v1513, %v1526
        %v1537 = vmul.f32 %v1514, %v1526
        %v1538 = vmul.f32 %v1515, %v1526
        %v1539 = vmul.f32 %v1516, %v1526
        %v1540 = vmul.f32 %v1517, %v1526
        %v1541 = vmul.f32 %v1518, %v1526
        %v1542 = vmul.f32 %v1519, %v1526
        %v1543 = vmul.f32 %v1520, %v1526
        %v1544 = vld [vmem:[%s7] sm:$0x1]
        %v1546 = vlaneseq
        %v1547 = vshrl.u32 %v1546, 7
        %v1548 = vsub.s32 0, %v1547
        %v1549 = vrot.slane %v1544, %v1548
        %v1551 = vadd.f32 %v1528, %v1549
        %v1552 = vadd.f32 %v1529, %v1549
        %v1553 = vadd.f32 %v1530, %v1549
        %v1554 = vadd.f32 %v1531, %v1549
        %v1555 = vadd.f32 %v1532, %v1549
        %v1556 = vadd.f32 %v1533, %v1549
        %v1557 = vadd.f32 %v1534, %v1549
        %v1558 = vadd.f32 %v1535, %v1549
        %v1559 = vadd.f32 %v1536, %v1549
        %v1560 = vadd.f32 %v1537, %v1549
        %v1561 = vadd.f32 %v1538, %v1549
        %v1562 = vadd.f32 %v1539, %v1549
        %v1563 = vadd.f32 %v1540, %v1549
        %v1564 = vadd.f32 %v1541, %v1549
        %v1565 = vadd.f32 %v1542, %v1549
        %v1566 = vadd.f32 %v1543, %v1549
        %v1567 = vpack.c.bf16 %v1552, %v1551
        %v1568 = vpack.c.bf16 %v1554, %v1553
        %v1569 = vpack.c.bf16 %v1556, %v1555
        %v1570 = vpack.c.bf16 %v1558, %v1557
        %v1571 = vpack.c.bf16 %v1560, %v1559
        %v1572 = vpack.c.bf16 %v1562, %v1561
        %v1573 = vpack.c.bf16 %v1564, %v1563
        %v1574 = vpack.c.bf16 %v1566, %v1565
        %v1575 = vld [vmem:[#allocation10] sm:$0xf]
        %v1576 = vld [vmem:[#allocation10 + $0x4] sm:$0xf]
        %v1577 = vld [vmem:[#allocation10 + $0x8] sm:$0xf]
        %v1578 = vld [vmem:[#allocation10 + $0xc] sm:$0xf]
        %v1579 = vld [vmem:[#allocation10 + $0x10] sm:$0xf]
        %v1580 = vld [vmem:[#allocation10 + $0x14] sm:$0xf]
        %v1581 = vld [vmem:[#allocation10 + $0x18] sm:$0xf]
        %v1582 = vld [vmem:[#allocation10 + $0x1c] sm:$0xf]
        %v1583 = vld [vmem:[#allocation10 + $0x20] sm:$0xf]
        %v1584 = vld [vmem:[#allocation10 + $0x24] sm:$0xf]
        %v1585 = vld [vmem:[#allocation10 + $0x28] sm:$0xf]
        %v1586 = vld [vmem:[#allocation10 + $0x2c] sm:$0xf]
        %v1587 = vld [vmem:[#allocation10 + $0x30] sm:$0xf]
        %v1588 = vld [vmem:[#allocation10 + $0x34] sm:$0xf]
        %v1589 = vld [vmem:[#allocation10 + $0x38] sm:$0xf]
        %v1590 = vld [vmem:[#allocation10 + $0x3c] sm:$0xf]
        %v1591 = vld [vmem:[%s9] sm:$0x1]
        %v1593 = vlaneseq
        %v1594 = vshrl.u32 %v1593, 7
        %v1595 = vsub.s32 0, %v1594
        %v1596 = vrot.slane %v1591, %v1595
        %v1614 = vunpack.c.l.b16 %v1575
        %v1615 = vunpack.c.l.b16 %v1576
        %v1616 = vunpack.c.l.b16 %v1577
        %v1617 = vunpack.c.l.b16 %v1578
        %v1618 = vunpack.c.l.b16 %v1579
        %v1619 = vunpack.c.l.b16 %v1580
        %v1620 = vunpack.c.l.b16 %v1581
        %v1621 = vunpack.c.l.b16 %v1582
        %v1622 = vunpack.c.l.b16 %v1583
        %v1623 = vunpack.c.l.b16 %v1584
        %v1624 = vunpack.c.l.b16 %v1585
        %v1625 = vunpack.c.l.b16 %v1586
        %v1626 = vunpack.c.l.b16 %v1587
        %v1627 = vunpack.c.l.b16 %v1588
        %v1628 = vunpack.c.l.b16 %v1589
        %v1629 = vunpack.c.l.b16 %v1590
        %v1630 = vpack.c.b16 %v1615, %v1614
        %v1631 = vpack.c.b16 %v1617, %v1616
        %v1632 = vpack.c.b16 %v1619, %v1618
        %v1633 = vpack.c.b16 %v1621, %v1620
        %v1634 = vpack.c.b16 %v1623, %v1622
        %v1635 = vpack.c.b16 %v1625, %v1624
        %v1636 = vpack.c.b16 %v1627, %v1626
        %v1637 = vpack.c.b16 %v1629, %v1628
        %1646 = vmatprep.subr.bf16.mxu0 0
        %1647 = vmatpush1.bf16.msra.mxu0 %v1637
        %1648 = vmatprep.subr.bf16.mxu0 0
        %1649 = vmatpush1.bf16.msra.mxu0 %v1636
        %1650 = vmatprep.subr.bf16.mxu0 0
        %1651 = vmatpush1.bf16.msra.mxu0 %v1635
        %1652 = vmatprep.subr.bf16.mxu0 0
        %1653 = vmatpush1.bf16.msra.mxu0 %v1634
        %1654 = vmatprep.subr.bf16.mxu0 0
        %1655 = vmatpush1.bf16.msra.mxu0 %v1633
        %1656 = vmatprep.subr.bf16.mxu0 0
        %1657 = vmatpush1.bf16.msra.mxu0 %v1632
        %1658 = vmatprep.subr.bf16.mxu0 0
        %1659 = vmatpush1.bf16.msra.mxu0 %v1631
        %1660 = vmatprep.subr.bf16.mxu0 0
        %1661 = vmatpush1.bf16.msra.mxu0 %v1630
        %1662 = vmatprep.subr.bf16.mxu0 0
        %1663 = vmatpush2.bf16.msra.mxu0 0
        %1664 = vmatprep.subr.bf16.mxu0 0
        %1665 = vmatpush2.bf16.msra.mxu0 0
        %1666 = vmatprep.subr.bf16.mxu0 0
        %1667 = vmatpush2.bf16.msra.mxu0 0
        %1668 = vmatprep.subr.bf16.mxu0 0
        %1669 = vmatpush2.bf16.msra.mxu0 0
        %1670 = vmatprep.subr.bf16.mxu0 0
        %1671 = vmatpush2.bf16.msra.mxu0 0
        %1672 = vmatprep.subr.bf16.mxu0 0
        %1673 = vmatpush2.bf16.msra.mxu0 0
        %1674 = vmatprep.subr.bf16.mxu0 0
        %1675 = vmatpush2.bf16.msra.mxu0 0
        %1676 = vmatprep.subr.bf16.mxu0 0
        %1677 = vmatpush2.bf16.msra.mxu0 0
        %1678 = vmatprep.mubr.bf16.mxu0 0
        %1679 = vmatmul.mubr.bf16.gmra.mxu0 %v1305
        %v1680 = vpop.f32.mrf.mxu0
        %v1681 = vadd.f32 %v1596, %v1680
        %v1682 = vpop.f32.mrf.mxu0
        %v1683 = vpop.f32.mrf.mxu0
        %v1684 = vadd.f32 %v1596, %v1683
        %v1685 = vpop.f32.mrf.mxu0
        %1686 = vmatprep.mubr.bf16.mxu0 0
        %1687 = vmatmul.mubr.bf16.gmra.mxu0 %v1306
        %v1688 = vpop.f32.mrf.mxu0
        %v1689 = vadd.f32 %v1596, %v1688
        %v1690 = vpop.f32.mrf.mxu0
        %v1691 = vpop.f32.mrf.mxu0
        %v1692 = vadd.f32 %v1596, %v1691
        %v1693 = vpop.f32.mrf.mxu0
        %1694 = vmatprep.mubr.bf16.mxu0 0
        %1695 = vmatmul.mubr.bf16.gmra.mxu0 %v1307
        %v1696 = vpop.f32.mrf.mxu0
        %v1697 = vadd.f32 %v1596, %v1696
        %v1698 = vpop.f32.mrf.mxu0
        %v1699 = vpop.f32.mrf.mxu0
        %v1700 = vadd.f32 %v1596, %v1699
        %v1701 = vpop.f32.mrf.mxu0
        %1702 = vmatprep.mubr.bf16.mxu0 0
        %1703 = vmatmul.mubr.bf16.gmra.mxu0 %v1308
        %v1704 = vpop.f32.mrf.mxu0
        %v1705 = vadd.f32 %v1596, %v1704
        %v1706 = vpop.f32.mrf.mxu0
        %v1707 = vpop.f32.mrf.mxu0
        %v1708 = vadd.f32 %v1596, %v1707
        %v1709 = vpop.f32.mrf.mxu0
        %1710 = vmatprep.mubr.bf16.mxu0 0
        %1711 = vmatmul.mubr.bf16.gmra.mxu0 %v1309
        %v1712 = vpop.f32.mrf.mxu0
        %v1713 = vadd.f32 %v1596, %v1712
        %v1714 = vpop.f32.mrf.mxu0
        %v1715 = vpop.f32.mrf.mxu0
        %v1716 = vadd.f32 %v1596, %v1715
        %v1717 = vpop.f32.mrf.mxu0
        %1718 = vmatprep.mubr.bf16.mxu0 0
        %1719 = vmatmul.mubr.bf16.gmra.mxu0 %v1310
        %v1720 = vpop.f32.mrf.mxu0
        %v1721 = vadd.f32 %v1596, %v1720
        %v1722 = vpop.f32.mrf.mxu0
        %v1723 = vpop.f32.mrf.mxu0
        %v1724 = vadd.f32 %v1596, %v1723
        %v1725 = vpop.f32.mrf.mxu0
        %1726 = vmatprep.mubr.bf16.mxu0 0
        %1727 = vmatmul.mubr.bf16.gmra.mxu0 %v1311
        %v1728 = vpop.f32.mrf.mxu0
        %v1729 = vadd.f32 %v1596, %v1728
        %v1730 = vpop.f32.mrf.mxu0
        %v1731 = vpop.f32.mrf.mxu0
        %v1732 = vadd.f32 %v1596, %v1731
        %v1733 = vpop.f32.mrf.mxu0
        %1734 = vmatprep.mubr.bf16.mxu0 0
        %1735 = vmatmul.mubr.bf16.gmra.mxu0 %v1312
        %v1736 = vpop.f32.mrf.mxu0
        %v1737 = vadd.f32 %v1596, %v1736
        %v1738 = vpop.f32.mrf.mxu0
        %v1739 = vpop.f32.mrf.mxu0
        %v1740 = vadd.f32 %v1596, %v1739
        %v1741 = vpop.f32.mrf.mxu0
        %1742 = vdwg.mxu0
        %v1743 = vmul.f32 %v1681, 0.35355338
        %v1744 = vmul.f32 %v1684, 0.35355338
        %v1745 = vmul.f32 %v1689, 0.35355338
        %v1746 = vmul.f32 %v1692, 0.35355338
        %v1747 = vmul.f32 %v1697, 0.35355338
        %v1748 = vmul.f32 %v1700, 0.35355338
        %v1749 = vmul.f32 %v1705, 0.35355338
        %v1750 = vmul.f32 %v1708, 0.35355338
        %v1751 = vmul.f32 %v1713, 0.35355338
        %v1752 = vmul.f32 %v1716, 0.35355338
        %v1753 = vmul.f32 %v1721, 0.35355338
        %v1754 = vmul.f32 %v1724, 0.35355338
        %v1755 = vmul.f32 %v1729, 0.35355338
        %v1756 = vmul.f32 %v1732, 0.35355338
        %v1757 = vmul.f32 %v1737, 0.35355338
        %v1758 = vmul.f32 %v1740, 0.35355338
        %v1759 = vld [vmem:[#allocation11] sm:$0xf]
        %v1760 = vld [vmem:[#allocation11 + $0x4] sm:$0xf]
        %v1761 = vld [vmem:[#allocation11 + $0x8] sm:$0xf]
        %v1762 = vld [vmem:[#allocation11 + $0xc] sm:$0xf]
        %v1763 = vld [vmem:[#allocation11 + $0x10] sm:$0xf]
        %v1764 = vld [vmem:[#allocation11 + $0x14] sm:$0xf]
        %v1765 = vld [vmem:[#allocation11 + $0x18] sm:$0xf]
        %v1766 = vld [vmem:[#allocation11 + $0x1c] sm:$0xf]
        %v1767 = vld [vmem:[#allocation11 + $0x20] sm:$0xf]
        %v1768 = vld [vmem:[#allocation11 + $0x24] sm:$0xf]
        %v1769 = vld [vmem:[#allocation11 + $0x28] sm:$0xf]
        %v1770 = vld [vmem:[#allocation11 + $0x2c] sm:$0xf]
        %v1771 = vld [vmem:[#allocation11 + $0x30] sm:$0xf]
        %v1772 = vld [vmem:[#allocation11 + $0x34] sm:$0xf]
        %v1773 = vld [vmem:[#allocation11 + $0x38] sm:$0xf]
        %v1774 = vld [vmem:[#allocation11 + $0x3c] sm:$0xf]
        %v1775 = vld [vmem:[%s11] sm:$0x1]
        %v1777 = vlaneseq
        %v1778 = vshrl.u32 %v1777, 7
        %v1779 = vsub.s32 0, %v1778
        %v1780 = vrot.slane %v1775, %v1779
        %v1798 = vunpack.c.l.b16 %v1759
        %v1799 = vunpack.c.l.b16 %v1760
        %v1800 = vunpack.c.l.b16 %v1761
        %v1801 = vunpack.c.l.b16 %v1762
        %v1802 = vunpack.c.l.b16 %v1763
        %v1803 = vunpack.c.l.b16 %v1764
        %v1804 = vunpack.c.l.b16 %v1765
        %v1805 = vunpack.c.l.b16 %v1766
        %v1806 = vunpack.c.l.b16 %v1767
        %v1807 = vunpack.c.l.b16 %v1768
        %v1808 = vunpack.c.l.b16 %v1769
        %v1809 = vunpack.c.l.b16 %v1770
        %v1810 = vunpack.c.l.b16 %v1771
        %v1811 = vunpack.c.l.b16 %v1772
        %v1812 = vunpack.c.l.b16 %v1773
        %v1813 = vunpack.c.l.b16 %v1774
        %v1814 = vpack.c.b16 %v1799, %v1798
        %v1815 = vpack.c.b16 %v1801, %v1800
        %v1816 = vpack.c.b16 %v1803, %v1802
        %v1817 = vpack.c.b16 %v1805, %v1804
        %v1818 = vpack.c.b16 %v1807, %v1806
        %v1819 = vpack.c.b16 %v1809, %v1808
        %v1820 = vpack.c.b16 %v1811, %v1810
        %v1821 = vpack.c.b16 %v1813, %v1812
        %1830 = vmatprep.subr.bf16.mxu0 0
        %1831 = vmatpush1.bf16.msra.mxu0 %v1821
        %1832 = vmatprep.subr.bf16.mxu0 0
        %1833 = vmatpush1.bf16.msra.mxu0 %v1820
        %1834 = vmatprep.subr.bf16.mxu0 0
        %1835 = vmatpush1.bf16.msra.mxu0 %v1819
        %1836 = vmatprep.subr.bf16.mxu0 0
        %1837 = vmatpush1.bf16.msra.mxu0 %v1818
        %1838 = vmatprep.subr.bf16.mxu0 0
        %1839 = vmatpush1.bf16.msra.mxu0 %v1817
        %1840 = vmatprep.subr.bf16.mxu0 0
        %1841 = vmatpush1.bf16.msra.mxu0 %v1816
        %1842 = vmatprep.subr.bf16.mxu0 0
        %1843 = vmatpush1.bf16.msra.mxu0 %v1815
        %1844 = vmatprep.subr.bf16.mxu0 0
        %1845 = vmatpush1.bf16.msra.mxu0 %v1814
        %1846 = vmatprep.subr.bf16.mxu0 0
        %1847 = vmatpush2.bf16.msra.mxu0 0
        %1848 = vmatprep.subr.bf16.mxu0 0
        %1849 = vmatpush2.bf16.msra.mxu0 0
        %1850 = vmatprep.subr.bf16.mxu0 0
        %1851 = vmatpush2.bf16.msra.mxu0 0
        %1852 = vmatprep.subr.bf16.mxu0 0
        %1853 = vmatpush2.bf16.msra.mxu0 0
        %1854 = vmatprep.subr.bf16.mxu0 0
        %1855 = vmatpush2.bf16.msra.mxu0 0
        %1856 = vmatprep.subr.bf16.mxu0 0
        %1857 = vmatpush2.bf16.msra.mxu0 0
        %1858 = vmatprep.subr.bf16.mxu0 0
        %1859 = vmatpush2.bf16.msra.mxu0 0
        %1860 = vmatprep.subr.bf16.mxu0 0
        %1861 = vmatpush2.bf16.msra.mxu0 0
        %1862 = vmatprep.mubr.bf16.mxu0 0
        %1863 = vmatmul.mubr.bf16.gmra.mxu0 %v1567
        %v1864 = vpop.f32.mrf.mxu0
        %v1865 = vadd.f32 %v1780, %v1864
        %v1866 = vpop.f32.mrf.mxu0
        %v1867 = vpop.f32.mrf.mxu0
        %v1868 = vadd.f32 %v1780, %v1867
        %v1869 = vpop.f32.mrf.mxu0
        %1870 = vmatprep.mubr.bf16.mxu0 0
        %1871 = vmatmul.mubr.bf16.gmra.mxu0 %v1568
        %v1872 = vpop.f32.mrf.mxu0
        %v1873 = vadd.f32 %v1780, %v1872
        %v1874 = vpop.f32.mrf.mxu0
        %v1875 = vpop.f32.mrf.mxu0
        %v1876 = vadd.f32 %v1780, %v1875
        %v1877 = vpop.f32.mrf.mxu0
        %1878 = vmatprep.mubr.bf16.mxu0 0
        %1879 = vmatmul.mubr.bf16.gmra.mxu0 %v1569
        %v1880 = vpop.f32.mrf.mxu0
        %v1881 = vadd.f32 %v1780, %v1880
        %v1882 = vpop.f32.mrf.mxu0
        %v1883 = vpop.f32.mrf.mxu0
        %v1884 = vadd.f32 %v1780, %v1883
        %v1885 = vpop.f32.mrf.mxu0
        %1886 = vmatprep.mubr.bf16.mxu0 0
        %1887 = vmatmul.mubr.bf16.gmra.mxu0 %v1570
        %v1888 = vpop.f32.mrf.mxu0
        %v1889 = vadd.f32 %v1780, %v1888
        %v1890 = vpop.f32.mrf.mxu0
        %v1891 = vpop.f32.mrf.mxu0
        %v1892 = vadd.f32 %v1780, %v1891
        %v1893 = vpop.f32.mrf.mxu0
        %1894 = vmatprep.mubr.bf16.mxu0 0
        %1895 = vmatmul.mubr.bf16.gmra.mxu0 %v1571
        %v1896 = vpop.f32.mrf.mxu0
        %v1897 = vadd.f32 %v1780, %v1896
        %v1898 = vpop.f32.mrf.mxu0
        %v1899 = vpop.f32.mrf.mxu0
        %v1900 = vadd.f32 %v1780, %v1899
        %v1901 = vpop.f32.mrf.mxu0
        %1902 = vmatprep.mubr.bf16.mxu0 0
        %1903 = vmatmul.mubr.bf16.gmra.mxu0 %v1572
        %v1904 = vpop.f32.mrf.mxu0
        %v1905 = vadd.f32 %v1780, %v1904
        %v1906 = vpop.f32.mrf.mxu0
        %v1907 = vpop.f32.mrf.mxu0
        %v1908 = vadd.f32 %v1780, %v1907
        %v1909 = vpop.f32.mrf.mxu0
        %1910 = vmatprep.mubr.bf16.mxu0 0
        %1911 = vmatmul.mubr.bf16.gmra.mxu0 %v1573
        %v1912 = vpop.f32.mrf.mxu0
        %v1913 = vadd.f32 %v1780, %v1912
        %v1914 = vpop.f32.mrf.mxu0
        %v1915 = vpop.f32.mrf.mxu0
        %v1916 = vadd.f32 %v1780, %v1915
        %v1917 = vpop.f32.mrf.mxu0
        %1918 = vmatprep.mubr.bf16.mxu0 0
        %1919 = vmatmul.mubr.bf16.gmra.mxu0 %v1574
        %v1920 = vpop.f32.mrf.mxu0
        %v1921 = vadd.f32 %v1780, %v1920
        %v1922 = vpop.f32.mrf.mxu0
        %v1923 = vpop.f32.mrf.mxu0
        %v1924 = vadd.f32 %v1780, %v1923
        %v1925 = vpop.f32.mrf.mxu0
        %1926 = vdwg.mxu0
        %v1927 = vmul.f32 %v1865, 0.35355338
        %v1928 = vmul.f32 %v1868, 0.35355338
        %v1929 = vmul.f32 %v1873, 0.35355338
        %v1930 = vmul.f32 %v1876, 0.35355338
        %v1931 = vmul.f32 %v1881, 0.35355338
        %v1932 = vmul.f32 %v1884, 0.35355338
        %v1933 = vmul.f32 %v1889, 0.35355338
        %v1934 = vmul.f32 %v1892, 0.35355338
        %v1935 = vmul.f32 %v1897, 0.35355338
        %v1936 = vmul.f32 %v1900, 0.35355338
        %v1937 = vmul.f32 %v1905, 0.35355338
        %v1938 = vmul.f32 %v1908, 0.35355338
        %v1939 = vmul.f32 %v1913, 0.35355338
        %v1940 = vmul.f32 %v1916, 0.35355338
        %v1941 = vmul.f32 %v1921, 0.35355338
        %v1942 = vmul.f32 %v1924, 0.35355338
        %v1943 = vpack.c.bf16 %v988, %v987
        %v1944 = vpack.c.bf16 %v990, %v989
        %v1945 = vpack.c.bf16 %v992, %v991
        %v1946 = vpack.c.bf16 %v994, %v993
        %v1947 = vpack.c.bf16 %v996, %v995
        %v1948 = vpack.c.bf16 %v998, %v997
        %v1949 = vpack.c.bf16 %v1000, %v999
        %v1950 = vpack.c.bf16 %v1002, %v1001
        %v1951 = vld [vmem:[#allocation13] sm:$0xf]
        %v1952 = vld [vmem:[#allocation13 + $0x4] sm:$0xf]
        %v1953 = vld [vmem:[#allocation13 + $0x8] sm:$0xf]
        %v1954 = vld [vmem:[#allocation13 + $0xc] sm:$0xf]
        %v1955 = vld [vmem:[#allocation13 + $0x10] sm:$0xf]
        %v1956 = vld [vmem:[#allocation13 + $0x14] sm:$0xf]
        %v1957 = vld [vmem:[#allocation13 + $0x18] sm:$0xf]
        %v1958 = vld [vmem:[#allocation13 + $0x1c] sm:$0xf]
        %v1959 = vld [vmem:[#allocation13 + $0x20] sm:$0xf]
        %v1960 = vld [vmem:[#allocation13 + $0x24] sm:$0xf]
        %v1961 = vld [vmem:[#allocation13 + $0x28] sm:$0xf]
        %v1962 = vld [vmem:[#allocation13 + $0x2c] sm:$0xf]
        %v1963 = vld [vmem:[#allocation13 + $0x30] sm:$0xf]
        %v1964 = vld [vmem:[#allocation13 + $0x34] sm:$0xf]
        %v1965 = vld [vmem:[#allocation13 + $0x38] sm:$0xf]
        %v1966 = vld [vmem:[#allocation13 + $0x3c] sm:$0xf]
        %v1967 = vld [vmem:[%s13] sm:$0x1]
        %v1969 = vlaneseq
        %v1970 = vshrl.u32 %v1969, 7
        %v1971 = vsub.s32 0, %v1970
        %v1972 = vrot.slane %v1967, %v1971
        %v1990 = vunpack.c.l.b16 %v1951
        %v1991 = vunpack.c.l.b16 %v1952
        %v1992 = vunpack.c.l.b16 %v1953
        %v1993 = vunpack.c.l.b16 %v1954
        %v1994 = vunpack.c.l.b16 %v1955
        %v1995 = vunpack.c.l.b16 %v1956
        %v1996 = vunpack.c.l.b16 %v1957
        %v1997 = vunpack.c.l.b16 %v1958
        %v1998 = vunpack.c.l.b16 %v1959
        %v1999 = vunpack.c.l.b16 %v1960
        %v2000 = vunpack.c.l.b16 %v1961
        %v2001 = vunpack.c.l.b16 %v1962
        %v2002 = vunpack.c.l.b16 %v1963
        %v2003 = vunpack.c.l.b16 %v1964
        %v2004 = vunpack.c.l.b16 %v1965
        %v2005 = vunpack.c.l.b16 %v1966
        %v2006 = vpack.c.b16 %v1991, %v1990
        %v2007 = vpack.c.b16 %v1993, %v1992
        %v2008 = vpack.c.b16 %v1995, %v1994
        %v2009 = vpack.c.b16 %v1997, %v1996
        %v2010 = vpack.c.b16 %v1999, %v1998
        %v2011 = vpack.c.b16 %v2001, %v2000
        %v2012 = vpack.c.b16 %v2003, %v2002
        %v2013 = vpack.c.b16 %v2005, %v2004
        %2022 = vmatprep.subr.bf16.mxu0 0
        %2023 = vmatpush1.bf16.msra.mxu0 %v2013
        %2024 = vmatprep.subr.bf16.mxu0 0
        %2025 = vmatpush1.bf16.msra.mxu0 %v2012
        %2026 = vmatprep.subr.bf16.mxu0 0
        %2027 = vmatpush1.bf16.msra.mxu0 %v2011
        %2028 = vmatprep.subr.bf16.mxu0 0
        %2029 = vmatpush1.bf16.msra.mxu0 %v2010
        %2030 = vmatprep.subr.bf16.mxu0 0
        %2031 = vmatpush1.bf16.msra.mxu0 %v2009
        %2032 = vmatprep.subr.bf16.mxu0 0
        %2033 = vmatpush1.bf16.msra.mxu0 %v2008
        %2034 = vmatprep.subr.bf16.mxu0 0
        %2035 = vmatpush1.bf16.msra.mxu0 %v2007
        %2036 = vmatprep.subr.bf16.mxu0 0
        %2037 = vmatpush1.bf16.msra.mxu0 %v2006
        %2038 = vmatprep.subr.bf16.mxu0 0
        %2039 = vmatpush2.bf16.msra.mxu0 0
        %2040 = vmatprep.subr.bf16.mxu0 0
        %2041 = vmatpush2.bf16.msra.mxu0 0
        %2042 = vmatprep.subr.bf16.mxu0 0
        %2043 = vmatpush2.bf16.msra.mxu0 0
        %2044 = vmatprep.subr.bf16.mxu0 0
        %2045 = vmatpush2.bf16.msra.mxu0 0
        %2046 = vmatprep.subr.bf16.mxu0 0
        %2047 = vmatpush2.bf16.msra.mxu0 0
        %2048 = vmatprep.subr.bf16.mxu0 0
        %2049 = vmatpush2.bf16.msra.mxu0 0
        %2050 = vmatprep.subr.bf16.mxu0 0
        %2051 = vmatpush2.bf16.msra.mxu0 0
        %2052 = vmatprep.subr.bf16.mxu0 0
        %2053 = vmatpush2.bf16.msra.mxu0 0
        %2054 = vmatprep.mubr.bf16.mxu0 0
        %2055 = vmatmul.mubr.bf16.gmra.mxu0 %v1943
        %v2056 = vpop.f32.mrf.mxu0
        %v2057 = vadd.f32 %v1972, %v2056
        %v2058 = vpop.f32.mrf.mxu0
        %v2059 = vpop.f32.mrf.mxu0
        %v2060 = vadd.f32 %v1972, %v2059
        %v2061 = vpop.f32.mrf.mxu0
        %2062 = vmatprep.mubr.bf16.mxu0 0
        %2063 = vmatmul.mubr.bf16.gmra.mxu0 %v1944
        %v2064 = vpop.f32.mrf.mxu0
        %v2065 = vadd.f32 %v1972, %v2064
        %v2066 = vpop.f32.mrf.mxu0
        %v2067 = vpop.f32.mrf.mxu0
        %v2068 = vadd.f32 %v1972, %v2067
        %v2069 = vpop.f32.mrf.mxu0
        %2070 = vmatprep.mubr.bf16.mxu0 0
        %2071 = vmatmul.mubr.bf16.gmra.mxu0 %v1945
        %v2072 = vpop.f32.mrf.mxu0
        %v2073 = vadd.f32 %v1972, %v2072
        %v2074 = vpop.f32.mrf.mxu0
        %v2075 = vpop.f32.mrf.mxu0
        %v2076 = vadd.f32 %v1972, %v2075
        %v2077 = vpop.f32.mrf.mxu0
        %2078 = vmatprep.mubr.bf16.mxu0 0
        %2079 = vmatmul.mubr.bf16.gmra.mxu0 %v1946
        %v2080 = vpop.f32.mrf.mxu0
        %v2081 = vadd.f32 %v1972, %v2080
        %v2082 = vpop.f32.mrf.mxu0
        %v2083 = vpop.f32.mrf.mxu0
        %v2084 = vadd.f32 %v1972, %v2083
        %v2085 = vpop.f32.mrf.mxu0
        %2086 = vmatprep.mubr.bf16.mxu0 0
        %2087 = vmatmul.mubr.bf16.gmra.mxu0 %v1947
        %v2088 = vpop.f32.mrf.mxu0
        %v2089 = vadd.f32 %v1972, %v2088
        %v2090 = vpop.f32.mrf.mxu0
        %v2091 = vpop.f32.mrf.mxu0
        %v2092 = vadd.f32 %v1972, %v2091
        %v2093 = vpop.f32.mrf.mxu0
        %2094 = vmatprep.mubr.bf16.mxu0 0
        %2095 = vmatmul.mubr.bf16.gmra.mxu0 %v1948
        %v2096 = vpop.f32.mrf.mxu0
        %v2097 = vadd.f32 %v1972, %v2096
        %v2098 = vpop.f32.mrf.mxu0
        %v2099 = vpop.f32.mrf.mxu0
        %v2100 = vadd.f32 %v1972, %v2099
        %v2101 = vpop.f32.mrf.mxu0
        %2102 = vmatprep.mubr.bf16.mxu0 0
        %2103 = vmatmul.mubr.bf16.gmra.mxu0 %v1949
        %v2104 = vpop.f32.mrf.mxu0
        %v2105 = vadd.f32 %v1972, %v2104
        %v2106 = vpop.f32.mrf.mxu0
        %v2107 = vpop.f32.mrf.mxu0
        %v2108 = vadd.f32 %v1972, %v2107
        %v2109 = vpop.f32.mrf.mxu0
        %2110 = vmatprep.mubr.bf16.mxu0 0
        %2111 = vmatmul.mubr.bf16.gmra.mxu0 %v1950
        %v2112 = vpop.f32.mrf.mxu0
        %v2113 = vadd.f32 %v1972, %v2112
        %v2114 = vpop.f32.mrf.mxu0
        %v2115 = vpop.f32.mrf.mxu0
        %v2116 = vadd.f32 %v1972, %v2115
        %v2117 = vpop.f32.mrf.mxu0
        %2118 = vdwg.mxu0
        %v2119 = vpack.c.bf16 %v1004, %v1003
        %v2120 = vpack.c.bf16 %v1006, %v1005
        %v2121 = vpack.c.bf16 %v1008, %v1007
        %v2122 = vpack.c.bf16 %v1010, %v1009
        %v2123 = vpack.c.bf16 %v1012, %v1011
        %v2124 = vpack.c.bf16 %v1014, %v1013
        %v2125 = vpack.c.bf16 %v1016, %v1015
        %v2126 = vpack.c.bf16 %v1018, %v1017
        %v2127 = vld [vmem:[#allocation14] sm:$0xf]
        %v2128 = vld [vmem:[#allocation14 + $0x4] sm:$0xf]
        %v2129 = vld [vmem:[#allocation14 + $0x8] sm:$0xf]
        %v2130 = vld [vmem:[#allocation14 + $0xc] sm:$0xf]
        %v2131 = vld [vmem:[#allocation14 + $0x10] sm:$0xf]
        %v2132 = vld [vmem:[#allocation14 + $0x14] sm:$0xf]
        %v2133 = vld [vmem:[#allocation14 + $0x18] sm:$0xf]
        %v2134 = vld [vmem:[#allocation14 + $0x1c] sm:$0xf]
        %v2135 = vld [vmem:[#allocation14 + $0x20] sm:$0xf]
        %v2136 = vld [vmem:[#allocation14 + $0x24] sm:$0xf]
        %v2137 = vld [vmem:[#allocation14 + $0x28] sm:$0xf]
        %v2138 = vld [vmem:[#allocation14 + $0x2c] sm:$0xf]
        %v2139 = vld [vmem:[#allocation14 + $0x30] sm:$0xf]
        %v2140 = vld [vmem:[#allocation14 + $0x34] sm:$0xf]
        %v2141 = vld [vmem:[#allocation14 + $0x38] sm:$0xf]
        %v2142 = vld [vmem:[#allocation14 + $0x3c] sm:$0xf]
        %v2143 = vld [vmem:[%s15] sm:$0x1]
        %v2145 = vlaneseq
        %v2146 = vshrl.u32 %v2145, 7
        %v2147 = vsub.s32 0, %v2146
        %v2148 = vrot.slane %v2143, %v2147
        %v2166 = vunpack.c.l.b16 %v2127
        %v2167 = vunpack.c.l.b16 %v2128
        %v2168 = vunpack.c.l.b16 %v2129
        %v2169 = vunpack.c.l.b16 %v2130
        %v2170 = vunpack.c.l.b16 %v2131
        %v2171 = vunpack.c.l.b16 %v2132
        %v2172 = vunpack.c.l.b16 %v2133
        %v2173 = vunpack.c.l.b16 %v2134
        %v2174 = vunpack.c.l.b16 %v2135
        %v2175 = vunpack.c.l.b16 %v2136
        %v2176 = vunpack.c.l.b16 %v2137
        %v2177 = vunpack.c.l.b16 %v2138
        %v2178 = vunpack.c.l.b16 %v2139
        %v2179 = vunpack.c.l.b16 %v2140
        %v2180 = vunpack.c.l.b16 %v2141
        %v2181 = vunpack.c.l.b16 %v2142
        %v2182 = vpack.c.b16 %v2167, %v2166
        %v2183 = vpack.c.b16 %v2169, %v2168
        %v2184 = vpack.c.b16 %v2171, %v2170
        %v2185 = vpack.c.b16 %v2173, %v2172
        %v2186 = vpack.c.b16 %v2175, %v2174
        %v2187 = vpack.c.b16 %v2177, %v2176
        %v2188 = vpack.c.b16 %v2179, %v2178
        %v2189 = vpack.c.b16 %v2181, %v2180
        %2198 = vmatprep.subr.bf16.mxu0 0
        %2199 = vmatpush1.bf16.msra.mxu0 %v2189
        %2200 = vmatprep.subr.bf16.mxu0 0
        %2201 = vmatpush1.bf16.msra.mxu0 %v2188
        %2202 = vmatprep.subr.bf16.mxu0 0
        %2203 = vmatpush1.bf16.msra.mxu0 %v2187
        %2204 = vmatprep.subr.bf16.mxu0 0
        %2205 = vmatpush1.bf16.msra.mxu0 %v2186
        %2206 = vmatprep.subr.bf16.mxu0 0
        %2207 = vmatpush1.bf16.msra.mxu0 %v2185
        %2208 = vmatprep.subr.bf16.mxu0 0
        %2209 = vmatpush1.bf16.msra.mxu0 %v2184
        %2210 = vmatprep.subr.bf16.mxu0 0
        %2211 = vmatpush1.bf16.msra.mxu0 %v2183
        %2212 = vmatprep.subr.bf16.mxu0 0
        %2213 = vmatpush1.bf16.msra.mxu0 %v2182
        %2214 = vmatprep.subr.bf16.mxu0 0
        %2215 = vmatpush2.bf16.msra.mxu0 0
        %2216 = vmatprep.subr.bf16.mxu0 0
        %2217 = vmatpush2.bf16.msra.mxu0 0
        %2218 = vmatprep.subr.bf16.mxu0 0
        %2219 = vmatpush2.bf16.msra.mxu0 0
        %2220 = vmatprep.subr.bf16.mxu0 0
        %2221 = vmatpush2.bf16.msra.mxu0 0
        %2222 = vmatprep.subr.bf16.mxu0 0
        %2223 = vmatpush2.bf16.msra.mxu0 0
        %2224 = vmatprep.subr.bf16.mxu0 0
        %2225 = vmatpush2.bf16.msra.mxu0 0
        %2226 = vmatprep.subr.bf16.mxu0 0
        %2227 = vmatpush2.bf16.msra.mxu0 0
        %2228 = vmatprep.subr.bf16.mxu0 0
        %2229 = vmatpush2.bf16.msra.mxu0 0
        %2230 = vmatprep.mubr.bf16.mxu0 0
        %2231 = vmatmul.mubr.bf16.gmra.mxu0 %v2119
        %v2232 = vpop.f32.mrf.mxu0
        %v2233 = vadd.f32 %v2148, %v2232
        %v2234 = vpop.f32.mrf.mxu0
        %v2235 = vpop.f32.mrf.mxu0
        %v2236 = vadd.f32 %v2148, %v2235
        %v2237 = vpop.f32.mrf.mxu0
        %2238 = vmatprep.mubr.bf16.mxu0 0
        %2239 = vmatmul.mubr.bf16.gmra.mxu0 %v2120
        %v2240 = vpop.f32.mrf.mxu0
        %v2241 = vadd.f32 %v2148, %v2240
        %v2242 = vpop.f32.mrf.mxu0
        %v2243 = vpop.f32.mrf.mxu0
        %v2244 = vadd.f32 %v2148, %v2243
        %v2245 = vpop.f32.mrf.mxu0
        %2246 = vmatprep.mubr.bf16.mxu0 0
        %2247 = vmatmul.mubr.bf16.gmra.mxu0 %v2121
        %v2248 = vpop.f32.mrf.mxu0
        %v2249 = vadd.f32 %v2148, %v2248
        %v2250 = vpop.f32.mrf.mxu0
        %v2251 = vpop.f32.mrf.mxu0
        %v2252 = vadd.f32 %v2148, %v2251
        %v2253 = vpop.f32.mrf.mxu0
        %2254 = vmatprep.mubr.bf16.mxu0 0
        %2255 = vmatmul.mubr.bf16.gmra.mxu0 %v2122
        %v2256 = vpop.f32.mrf.mxu0
        %v2257 = vadd.f32 %v2148, %v2256
        %v2258 = vpop.f32.mrf.mxu0
        %v2259 = vpop.f32.mrf.mxu0
        %v2260 = vadd.f32 %v2148, %v2259
        %v2261 = vpop.f32.mrf.mxu0
        %2262 = vmatprep.mubr.bf16.mxu0 0
        %2263 = vmatmul.mubr.bf16.gmra.mxu0 %v2123
        %v2264 = vpop.f32.mrf.mxu0
        %v2265 = vadd.f32 %v2148, %v2264
        %v2266 = vpop.f32.mrf.mxu0
        %v2267 = vpop.f32.mrf.mxu0
        %v2268 = vadd.f32 %v2148, %v2267
        %v2269 = vpop.f32.mrf.mxu0
        %2270 = vmatprep.mubr.bf16.mxu0 0
        %2271 = vmatmul.mubr.bf16.gmra.mxu0 %v2124
        %v2272 = vpop.f32.mrf.mxu0
        %v2273 = vadd.f32 %v2148, %v2272
        %v2274 = vpop.f32.mrf.mxu0
        %v2275 = vpop.f32.mrf.mxu0
        %v2276 = vadd.f32 %v2148, %v2275
        %v2277 = vpop.f32.mrf.mxu0
        %2278 = vmatprep.mubr.bf16.mxu0 0
        %2279 = vmatmul.mubr.bf16.gmra.mxu0 %v2125
        %v2280 = vpop.f32.mrf.mxu0
        %v2281 = vadd.f32 %v2148, %v2280
        %v2282 = vpop.f32.mrf.mxu0
        %v2283 = vpop.f32.mrf.mxu0
        %v2284 = vadd.f32 %v2148, %v2283
        %v2285 = vpop.f32.mrf.mxu0
        %2286 = vmatprep.mubr.bf16.mxu0 0
        %2287 = vmatmul.mubr.bf16.gmra.mxu0 %v2126
        %v2288 = vpop.f32.mrf.mxu0
        %v2289 = vadd.f32 %v2148, %v2288
        %v2290 = vpop.f32.mrf.mxu0
        %v2291 = vpop.f32.mrf.mxu0
        %v2292 = vadd.f32 %v2148, %v2291
        %v2293 = vpop.f32.mrf.mxu0
        %2294 = vdwg.mxu0
        %v2295 = vld [vmem:[#allocation16] sm:$0xf]
        %v2296 = vld [vmem:[#allocation16 + $0x4] sm:$0xf]
        %v2297 = vld [vmem:[#allocation16 + $0x8] sm:$0xf]
        %v2298 = vld [vmem:[#allocation16 + $0xc] sm:$0xf]
        %v2299 = vld [vmem:[#allocation16 + $0x10] sm:$0xf]
        %v2300 = vld [vmem:[#allocation16 + $0x14] sm:$0xf]
        %v2301 = vld [vmem:[#allocation16 + $0x18] sm:$0xf]
        %v2302 = vld [vmem:[#allocation16 + $0x1c] sm:$0xf]
        %v2303 = vld [vmem:[#allocation16 + $0x20] sm:$0xf]
        %v2304 = vld [vmem:[#allocation16 + $0x24] sm:$0xf]
        %v2305 = vld [vmem:[#allocation16 + $0x28] sm:$0xf]
        %v2306 = vld [vmem:[#allocation16 + $0x2c] sm:$0xf]
        %v2307 = vld [vmem:[#allocation16 + $0x30] sm:$0xf]
        %v2308 = vld [vmem:[#allocation16 + $0x34] sm:$0xf]
        %v2309 = vld [vmem:[#allocation16 + $0x38] sm:$0xf]
        %v2310 = vld [vmem:[#allocation16 + $0x3c] sm:$0xf]
        %v2311 = vld [vmem:[%s17] sm:$0x1]
        %v2313 = vlaneseq
        %v2314 = vshrl.u32 %v2313, 7
        %v2315 = vsub.s32 0, %v2314
        %v2316 = vrot.slane %v2311, %v2315
        %v2334 = vunpack.c.l.b16 %v1019
        %v2335 = vunpack.c.l.b16 %v1020
        %v2336 = vunpack.c.l.b16 %v1021
        %v2337 = vunpack.c.l.b16 %v1022
        %v2338 = vunpack.c.l.b16 %v1023
        %v2339 = vunpack.c.l.b16 %v1024
        %v2340 = vunpack.c.l.b16 %v1025
        %v2341 = vunpack.c.l.b16 %v1026
        %v2342 = vunpack.c.l.b16 %v1027
        %v2343 = vunpack.c.l.b16 %v1028
        %v2344 = vunpack.c.l.b16 %v1029
        %v2345 = vunpack.c.l.b16 %v1030
        %v2346 = vunpack.c.l.b16 %v1031
        %v2347 = vunpack.c.l.b16 %v1032
        %v2348 = vunpack.c.l.b16 %v1033
        %v2349 = vunpack.c.l.b16 %v1034
        %v2350 = vpack.c.b16 %v2335, %v2334
        %v2351 = vpack.c.b16 %v2337, %v2336
        %v2352 = vpack.c.b16 %v2339, %v2338
        %v2353 = vpack.c.b16 %v2341, %v2340
        %v2354 = vpack.c.b16 %v2343, %v2342
        %v2355 = vpack.c.b16 %v2345, %v2344
        %v2356 = vpack.c.b16 %v2347, %v2346
        %v2357 = vpack.c.b16 %v2349, %v2348
        %v2382 = vunpack.c.l.b16 %v2295
        %v2383 = vunpack.c.l.b16 %v2296
        %v2384 = vunpack.c.l.b16 %v2297
        %v2385 = vunpack.c.l.b16 %v2298
        %v2386 = vunpack.c.l.b16 %v2299
        %v2387 = vunpack.c.l.b16 %v2300
        %v2388 = vunpack.c.l.b16 %v2301
        %v2389 = vunpack.c.l.b16 %v2302
        %v2390 = vunpack.c.l.b16 %v2303
        %v2391 = vunpack.c.l.b16 %v2304
        %v2392 = vunpack.c.l.b16 %v2305
        %v2393 = vunpack.c.l.b16 %v2306
        %v2394 = vunpack.c.l.b16 %v2307
        %v2395 = vunpack.c.l.b16 %v2308
        %v2396 = vunpack.c.l.b16 %v2309
        %v2397 = vunpack.c.l.b16 %v2310
        %v2398 = vpack.c.b16 %v2383, %v2382
        %v2399 = vpack.c.b16 %v2385, %v2384
        %v2400 = vpack.c.b16 %v2387, %v2386
        %v2401 = vpack.c.b16 %v2389, %v2388
        %v2402 = vpack.c.b16 %v2391, %v2390
        %v2403 = vpack.c.b16 %v2393, %v2392
        %v2404 = vpack.c.b16 %v2395, %v2394
        %v2405 = vpack.c.b16 %v2397, %v2396
        %2414 = vmatprep.subr.bf16.mxu0 0
        %2415 = vmatpush1.bf16.msra.mxu0 %v2405
        %2416 = vmatprep.subr.bf16.mxu0 0
        %2417 = vmatpush1.bf16.msra.mxu0 %v2404
        %2418 = vmatprep.subr.bf16.mxu0 0
        %2419 = vmatpush1.bf16.msra.mxu0 %v2403
        %2420 = vmatprep.subr.bf16.mxu0 0
        %2421 = vmatpush1.bf16.msra.mxu0 %v2402
        %2422 = vmatprep.subr.bf16.mxu0 0
        %2423 = vmatpush1.bf16.msra.mxu0 %v2401
        %2424 = vmatprep.subr.bf16.mxu0 0
        %2425 = vmatpush1.bf16.msra.mxu0 %v2400
        %2426 = vmatprep.subr.bf16.mxu0 0
        %2427 = vmatpush1.bf16.msra.mxu0 %v2399
        %2428 = vmatprep.subr.bf16.mxu0 0
        %2429 = vmatpush1.bf16.msra.mxu0 %v2398
        %2430 = vmatprep.subr.bf16.mxu0 0
        %2431 = vmatpush2.bf16.msra.mxu0 0
        %2432 = vmatprep.subr.bf16.mxu0 0
        %2433 = vmatpush2.bf16.msra.mxu0 0
        %2434 = vmatprep.subr.bf16.mxu0 0
        %2435 = vmatpush2.bf16.msra.mxu0 0
        %2436 = vmatprep.subr.bf16.mxu0 0
        %2437 = vmatpush2.bf16.msra.mxu0 0
        %2438 = vmatprep.subr.bf16.mxu0 0
        %2439 = vmatpush2.bf16.msra.mxu0 0
        %2440 = vmatprep.subr.bf16.mxu0 0
        %2441 = vmatpush2.bf16.msra.mxu0 0
        %2442 = vmatprep.subr.bf16.mxu0 0
        %2443 = vmatpush2.bf16.msra.mxu0 0
        %2444 = vmatprep.subr.bf16.mxu0 0
        %2445 = vmatpush2.bf16.msra.mxu0 0
        %2446 = vmatprep.mubr.bf16.mxu0 0
        %2447 = vmatmul.mubr.bf16.gmra.mxu0 %v2350
        %v2448 = vpop.f32.mrf.mxu0
        %v2449 = vadd.f32 %v2316, %v2448
        %v2450 = vpop.f32.mrf.mxu0
        %v2451 = vpop.f32.mrf.mxu0
        %v2452 = vadd.f32 %v2316, %v2451
        %v2453 = vpop.f32.mrf.mxu0
        %2454 = vmatprep.mubr.bf16.mxu0 0
        %2455 = vmatmul.mubr.bf16.gmra.mxu0 %v2351
        %v2456 = vpop.f32.mrf.mxu0
        %v2457 = vadd.f32 %v2316, %v2456
        %v2458 = vpop.f32.mrf.mxu0
        %v2459 = vpop.f32.mrf.mxu0
        %v2460 = vadd.f32 %v2316, %v2459
        %v2461 = vpop.f32.mrf.mxu0
        %2462 = vmatprep.mubr.bf16.mxu0 0
        %2463 = vmatmul.mubr.bf16.gmra.mxu0 %v2352
        %v2464 = vpop.f32.mrf.mxu0
        %v2465 = vadd.f32 %v2316, %v2464
        %v2466 = vpop.f32.mrf.mxu0
        %v2467 = vpop.f32.mrf.mxu0
        %v2468 = vadd.f32 %v2316, %v2467
        %v2469 = vpop.f32.mrf.mxu0
        %2470 = vmatprep.mubr.bf16.mxu0 0
        %2471 = vmatmul.mubr.bf16.gmra.mxu0 %v2353
        %v2472 = vpop.f32.mrf.mxu0
        %v2473 = vadd.f32 %v2316, %v2472
        %v2474 = vpop.f32.mrf.mxu0
        %v2475 = vpop.f32.mrf.mxu0
        %v2476 = vadd.f32 %v2316, %v2475
        %v2477 = vpop.f32.mrf.mxu0
        %2478 = vmatprep.mubr.bf16.mxu0 0
        %2479 = vmatmul.mubr.bf16.gmra.mxu0 %v2354
        %v2480 = vpop.f32.mrf.mxu0
        %v2481 = vadd.f32 %v2316, %v2480
        %v2482 = vpop.f32.mrf.mxu0
        %v2483 = vpop.f32.mrf.mxu0
        %v2484 = vadd.f32 %v2316, %v2483
        %v2485 = vpop.f32.mrf.mxu0
        %2486 = vmatprep.mubr.bf16.mxu0 0
        %2487 = vmatmul.mubr.bf16.gmra.mxu0 %v2355
        %v2488 = vpop.f32.mrf.mxu0
        %v2489 = vadd.f32 %v2316, %v2488
        %v2490 = vpop.f32.mrf.mxu0
        %v2491 = vpop.f32.mrf.mxu0
        %v2492 = vadd.f32 %v2316, %v2491
        %v2493 = vpop.f32.mrf.mxu0
        %2494 = vmatprep.mubr.bf16.mxu0 0
        %2495 = vmatmul.mubr.bf16.gmra.mxu0 %v2356
        %v2496 = vpop.f32.mrf.mxu0
        %v2497 = vadd.f32 %v2316, %v2496
        %v2498 = vpop.f32.mrf.mxu0
        %v2499 = vpop.f32.mrf.mxu0
        %v2500 = vadd.f32 %v2316, %v2499
        %v2501 = vpop.f32.mrf.mxu0
        %2502 = vmatprep.mubr.bf16.mxu0 0
        %2503 = vmatmul.mubr.bf16.gmra.mxu0 %v2357
        %v2504 = vpop.f32.mrf.mxu0
        %v2505 = vadd.f32 %v2316, %v2504
        %v2506 = vpop.f32.mrf.mxu0
        %v2507 = vpop.f32.mrf.mxu0
        %v2508 = vadd.f32 %v2316, %v2507
        %v2509 = vpop.f32.mrf.mxu0
        %2510 = vdwg.mxu0
        %v2511 = vld [vmem:[#allocation17] sm:$0xf]
        %v2512 = vld [vmem:[#allocation17 + $0x4] sm:$0xf]
        %v2513 = vld [vmem:[#allocation17 + $0x8] sm:$0xf]
        %v2514 = vld [vmem:[#allocation17 + $0xc] sm:$0xf]
        %v2515 = vld [vmem:[#allocation17 + $0x10] sm:$0xf]
        %v2516 = vld [vmem:[#allocation17 + $0x14] sm:$0xf]
        %v2517 = vld [vmem:[#allocation17 + $0x18] sm:$0xf]
        %v2518 = vld [vmem:[#allocation17 + $0x1c] sm:$0xf]
        %v2519 = vld [vmem:[#allocation17 + $0x20] sm:$0xf]
        %v2520 = vld [vmem:[#allocation17 + $0x24] sm:$0xf]
        %v2521 = vld [vmem:[#allocation17 + $0x28] sm:$0xf]
        %v2522 = vld [vmem:[#allocation17 + $0x2c] sm:$0xf]
        %v2523 = vld [vmem:[#allocation17 + $0x30] sm:$0xf]
        %v2524 = vld [vmem:[#allocation17 + $0x34] sm:$0xf]
        %v2525 = vld [vmem:[#allocation17 + $0x38] sm:$0xf]
        %v2526 = vld [vmem:[#allocation17 + $0x3c] sm:$0xf]
        %v2527 = vld [vmem:[%s19] sm:$0x1]
        %v2529 = vlaneseq
        %v2530 = vshrl.u32 %v2529, 7
        %v2531 = vsub.s32 0, %v2530
        %v2532 = vrot.slane %v2527, %v2531
        %v2550 = vunpack.c.l.b16 %v1035
        %v2551 = vunpack.c.l.b16 %v1036
        %v2552 = vunpack.c.l.b16 %v1037
        %v2553 = vunpack.c.l.b16 %v1038
        %v2554 = vunpack.c.l.b16 %v1039
        %v2555 = vunpack.c.l.b16 %v1040
        %v2556 = vunpack.c.l.b16 %v1041
        %v2557 = vunpack.c.l.b16 %v1042
        %v2558 = vunpack.c.l.b16 %v1043
        %v2559 = vunpack.c.l.b16 %v1044
        %v2560 = vunpack.c.l.b16 %v1045
        %v2561 = vunpack.c.l.b16 %v1046
        %v2562 = vunpack.c.l.b16 %v1047
        %v2563 = vunpack.c.l.b16 %v1048
        %v2564 = vunpack.c.l.b16 %v1049
        %v2565 = vunpack.c.l.b16 %v1050
        %v2566 = vpack.c.b16 %v2551, %v2550
        %v2567 = vpack.c.b16 %v2553, %v2552
        %v2568 = vpack.c.b16 %v2555, %v2554
        %v2569 = vpack.c.b16 %v2557, %v2556
        %v2570 = vpack.c.b16 %v2559, %v2558
        %v2571 = vpack.c.b16 %v2561, %v2560
        %v2572 = vpack.c.b16 %v2563, %v2562
        %v2573 = vpack.c.b16 %v2565, %v2564
        %v2598 = vunpack.c.l.b16 %v2511
        %v2599 = vunpack.c.l.b16 %v2512
        %v2600 = vunpack.c.l.b16 %v2513
        %v2601 = vunpack.c.l.b16 %v2514
        %v2602 = vunpack.c.l.b16 %v2515
        %v2603 = vunpack.c.l.b16 %v2516
        %v2604 = vunpack.c.l.b16 %v2517
        %v2605 = vunpack.c.l.b16 %v2518
        %v2606 = vunpack.c.l.b16 %v2519
        %v2607 = vunpack.c.l.b16 %v2520
        %v2608 = vunpack.c.l.b16 %v2521
        %v2609 = vunpack.c.l.b16 %v2522
        %v2610 = vunpack.c.l.b16 %v2523
        %v2611 = vunpack.c.l.b16 %v2524
        %v2612 = vunpack.c.l.b16 %v2525
        %v2613 = vunpack.c.l.b16 %v2526
        %v2614 = vpack.c.b16 %v2599, %v2598
        %v2615 = vpack.c.b16 %v2601, %v2600
        %v2616 = vpack.c.b16 %v2603, %v2602
        %v2617 = vpack.c.b16 %v2605, %v2604
        %v2618 = vpack.c.b16 %v2607, %v2606
        %v2619 = vpack.c.b16 %v2609, %v2608
        %v2620 = vpack.c.b16 %v2611, %v2610
        %v2621 = vpack.c.b16 %v2613, %v2612
        %2630 = vmatprep.subr.bf16.mxu0 0
        %2631 = vmatpush1.bf16.msra.mxu0 %v2621
        %2632 = vmatprep.subr.bf16.mxu0 0
        %2633 = vmatpush1.bf16.msra.mxu0 %v2620
        %2634 = vmatprep.subr.bf16.mxu0 0
        %2635 = vmatpush1.bf16.msra.mxu0 %v2619
        %2636 = vmatprep.subr.bf16.mxu0 0
        %2637 = vmatpush1.bf16.msra.mxu0 %v2618
        %2638 = vmatprep.subr.bf16.mxu0 0
        %2639 = vmatpush1.bf16.msra.mxu0 %v2617
        %2640 = vmatprep.subr.bf16.mxu0 0
        %2641 = vmatpush1.bf16.msra.mxu0 %v2616
        %2642 = vmatprep.subr.bf16.mxu0 0
        %2643 = vmatpush1.bf16.msra.mxu0 %v2615
        %2644 = vmatprep.subr.bf16.mxu0 0
        %2645 = vmatpush1.bf16.msra.mxu0 %v2614
        %2646 = vmatprep.subr.bf16.mxu0 0
        %2647 = vmatpush2.bf16.msra.mxu0 0
        %2648 = vmatprep.subr.bf16.mxu0 0
        %2649 = vmatpush2.bf16.msra.mxu0 0
        %2650 = vmatprep.subr.bf16.mxu0 0
        %2651 = vmatpush2.bf16.msra.mxu0 0
        %2652 = vmatprep.subr.bf16.mxu0 0
        %2653 = vmatpush2.bf16.msra.mxu0 0
        %2654 = vmatprep.subr.bf16.mxu0 0
        %2655 = vmatpush2.bf16.msra.mxu0 0
        %2656 = vmatprep.subr.bf16.mxu0 0
        %2657 = vmatpush2.bf16.msra.mxu0 0
        %2658 = vmatprep.subr.bf16.mxu0 0
        %2659 = vmatpush2.bf16.msra.mxu0 0
        %2660 = vmatprep.subr.bf16.mxu0 0
        %2661 = vmatpush2.bf16.msra.mxu0 0
        %2662 = vmatprep.mubr.bf16.mxu0 0
        %2663 = vmatmul.mubr.bf16.gmra.mxu0 %v2566
        %v2664 = vpop.f32.mrf.mxu0
        %v2665 = vadd.f32 %v2532, %v2664
        %v2666 = vpop.f32.mrf.mxu0
        %v2667 = vpop.f32.mrf.mxu0
        %v2668 = vadd.f32 %v2532, %v2667
        %v2669 = vpop.f32.mrf.mxu0
        %2670 = vmatprep.mubr.bf16.mxu0 0
        %2671 = vmatmul.mubr.bf16.gmra.mxu0 %v2567
        %v2672 = vpop.f32.mrf.mxu0
        %v2673 = vadd.f32 %v2532, %v2672
        %v2674 = vpop.f32.mrf.mxu0
        %v2675 = vpop.f32.mrf.mxu0
        %v2676 = vadd.f32 %v2532, %v2675
        %v2677 = vpop.f32.mrf.mxu0
        %2678 = vmatprep.mubr.bf16.mxu0 0
        %2679 = vmatmul.mubr.bf16.gmra.mxu0 %v2568
        %v2680 = vpop.f32.mrf.mxu0
        %v2681 = vadd.f32 %v2532, %v2680
        %v2682 = vpop.f32.mrf.mxu0
        %v2683 = vpop.f32.mrf.mxu0
        %v2684 = vadd.f32 %v2532, %v2683
        %v2685 = vpop.f32.mrf.mxu0
        %2686 = vmatprep.mubr.bf16.mxu0 0
        %2687 = vmatmul.mubr.bf16.gmra.mxu0 %v2569
        %v2688 = vpop.f32.mrf.mxu0
        %v2689 = vadd.f32 %v2532, %v2688
        %v2690 = vpop.f32.mrf.mxu0
        %v2691 = vpop.f32.mrf.mxu0
        %v2692 = vadd.f32 %v2532, %v2691
        %v2693 = vpop.f32.mrf.mxu0
        %2694 = vmatprep.mubr.bf16.mxu0 0
        %2695 = vmatmul.mubr.bf16.gmra.mxu0 %v2570
        %v2696 = vpop.f32.mrf.mxu0
        %v2697 = vadd.f32 %v2532, %v2696
        %v2698 = vpop.f32.mrf.mxu0
        %v2699 = vpop.f32.mrf.mxu0
        %v2700 = vadd.f32 %v2532, %v2699
        %v2701 = vpop.f32.mrf.mxu0
        %2702 = vmatprep.mubr.bf16.mxu0 0
        %2703 = vmatmul.mubr.bf16.gmra.mxu0 %v2571
        %v2704 = vpop.f32.mrf.mxu0
        %v2705 = vadd.f32 %v2532, %v2704
        %v2706 = vpop.f32.mrf.mxu0
        %v2707 = vpop.f32.mrf.mxu0
        %v2708 = vadd.f32 %v2532, %v2707
        %v2709 = vpop.f32.mrf.mxu0
        %2710 = vmatprep.mubr.bf16.mxu0 0
        %2711 = vmatmul.mubr.bf16.gmra.mxu0 %v2572
        %v2712 = vpop.f32.mrf.mxu0
        %v2713 = vadd.f32 %v2532, %v2712
        %v2714 = vpop.f32.mrf.mxu0
        %v2715 = vpop.f32.mrf.mxu0
        %v2716 = vadd.f32 %v2532, %v2715
        %v2717 = vpop.f32.mrf.mxu0
        %2718 = vmatprep.mubr.bf16.mxu0 0
        %2719 = vmatmul.mubr.bf16.gmra.mxu0 %v2573
        %v2720 = vpop.f32.mrf.mxu0
        %v2721 = vadd.f32 %v2532, %v2720
        %v2722 = vpop.f32.mrf.mxu0
        %v2723 = vpop.f32.mrf.mxu0
        %v2724 = vadd.f32 %v2532, %v2723
        %v2725 = vpop.f32.mrf.mxu0
        %2726 = vdwg.mxu0
        %v2727 = vpack.c.bf16 %v1744, %v1743
        %v2728 = vpack.c.bf16 %v1746, %v1745
        %v2729 = vpack.c.bf16 %v1748, %v1747
        %v2730 = vpack.c.bf16 %v1750, %v1749
        %v2731 = vpack.c.bf16 %v1752, %v1751
        %v2732 = vpack.c.bf16 %v1754, %v1753
        %v2733 = vpack.c.bf16 %v1756, %v1755
        %v2734 = vpack.c.bf16 %v1758, %v1757
        %v2735 = vpack.c.bf16 %v2668, %v2665
        %v2736 = vpack.c.bf16 %v2676, %v2673
        %v2737 = vpack.c.bf16 %v2684, %v2681
        %v2738 = vpack.c.bf16 %v2692, %v2689
        %v2739 = vpack.c.bf16 %v2700, %v2697
        %v2740 = vpack.c.bf16 %v2708, %v2705
        %v2741 = vpack.c.bf16 %v2716, %v2713
        %v2742 = vpack.c.bf16 %v2724, %v2721
        %2743 = vmatprep.subr.bf16.mxu0 0
        %2744 = vmatpush1.bf16.xpose.msra.mxu0 0
        %2745 = vmatprep.subr.bf16.mxu0 0
        %2746 = vmatpush1.bf16.xpose.msra.mxu0 0
        %2747 = vmatprep.subr.bf16.mxu0 0
        %2748 = vmatpush1.bf16.xpose.msra.mxu0 0
        %2749 = vmatprep.subr.bf16.mxu0 0
        %2750 = vmatpush1.bf16.xpose.msra.mxu0 0
        %2751 = vmatprep.subr.bf16.mxu0 0
        %2752 = vmatpush1.bf16.xpose.msra.mxu0 0
        %2753 = vmatprep.subr.bf16.mxu0 0
        %2754 = vmatpush1.bf16.xpose.msra.mxu0 0
        %2755 = vmatprep.subr.bf16.mxu0 0
        %2756 = vmatpush1.bf16.xpose.msra.mxu0 0
        %2757 = vmatprep.subr.bf16.mxu0 0
        %2758 = vmatpush1.bf16.xpose.msra.mxu0 %v2735
        %2759 = vmatprep.subr.bf16.mxu0 0
        %2760 = vmatpush2.bf16.xpose.msra.mxu0 0
        %2761 = vmatprep.subr.bf16.mxu0 0
        %2762 = vmatpush2.bf16.xpose.msra.mxu0 0
        %2763 = vmatprep.subr.bf16.mxu0 0
        %2764 = vmatpush2.bf16.xpose.msra.mxu0 0
        %2765 = vmatprep.subr.bf16.mxu0 0
        %2766 = vmatpush2.bf16.xpose.msra.mxu0 0
        %2767 = vmatprep.subr.bf16.mxu0 0
        %2768 = vmatpush2.bf16.xpose.msra.mxu0 0
        %2769 = vmatprep.subr.bf16.mxu0 0
        %2770 = vmatpush2.bf16.xpose.msra.mxu0 0
        %2771 = vmatprep.subr.bf16.mxu0 0
        %2772 = vmatpush2.bf16.xpose.msra.mxu0 0
        %2773 = vmatprep.subr.bf16.mxu0 0
        %2774 = vmatpush2.bf16.xpose.msra.mxu0 0
        %2775 = vmatprep.mubr.bf16.mxu0 0
        %2776 = vmatmul.mubr.bf16.gmra.mxu0 %v2727
        %v2777 = vpop.f32.mrf.mxu0
        %v2778 = vadd.f32 0.0, %v2777
        %v2779 = vpop.f32.mrf.mxu0
        %v2780 = vpop.f32.mrf.mxu0
        %v2781 = vadd.f32 0.0, %v2780
        %v2782 = vpop.f32.mrf.mxu0
        %2783 = vdwg.mxu0
        %2784 = vmatprep.subr.bf16.mxu0 0
        %2785 = vmatpush1.bf16.xpose.msra.mxu0 0
        %2786 = vmatprep.subr.bf16.mxu0 0
        %2787 = vmatpush1.bf16.xpose.msra.mxu0 0
        %2788 = vmatprep.subr.bf16.mxu0 0
        %2789 = vmatpush1.bf16.xpose.msra.mxu0 0
        %2790 = vmatprep.subr.bf16.mxu0 0
        %2791 = vmatpush1.bf16.xpose.msra.mxu0 0
        %2792 = vmatprep.subr.bf16.mxu0 0
        %2793 = vmatpush1.bf16.xpose.msra.mxu0 0
        %2794 = vmatprep.subr.bf16.mxu0 0
        %2795 = vmatpush1.bf16.xpose.msra.mxu0 0
        %2796 = vmatprep.subr.bf16.mxu0 0
        %2797 = vmatpush1.bf16.xpose.msra.mxu0 0
        %2798 = vmatprep.subr.bf16.mxu0 0
        %2799 = vmatpush1.bf16.xpose.msra.mxu0 %v2736
        %2800 = vmatprep.subr.bf16.mxu0 0
        %2801 = vmatpush2.bf16.xpose.msra.mxu0 0
        %2802 = vmatprep.subr.bf16.mxu0 0
        %2803 = vmatpush2.bf16.xpose.msra.mxu0 0
        %2804 = vmatprep.subr.bf16.mxu0 0
        %2805 = vmatpush2.bf16.xpose.msra.mxu0 0
        %2806 = vmatprep.subr.bf16.mxu0 0
        %2807 = vmatpush2.bf16.xpose.msra.mxu0 0
        %2808 = vmatprep.subr.bf16.mxu0 0
        %2809 = vmatpush2.bf16.xpose.msra.mxu0 0
        %2810 = vmatprep.subr.bf16.mxu0 0
        %2811 = vmatpush2.bf16.xpose.msra.mxu0 0
        %2812 = vmatprep.subr.bf16.mxu0 0
        %2813 = vmatpush2.bf16.xpose.msra.mxu0 0
        %2814 = vmatprep.subr.bf16.mxu0 0
        %2815 = vmatpush2.bf16.xpose.msra.mxu0 0
        %2816 = vmatprep.mubr.bf16.mxu0 0
        %2817 = vmatmul.mubr.bf16.gmra.mxu0 %v2728
        %v2818 = vpop.f32.mrf.mxu0
        %v2819 = vadd.f32 0.0, %v2818
        %v2820 = vpop.f32.mrf.mxu0
        %v2821 = vpop.f32.mrf.mxu0
        %v2822 = vadd.f32 0.0, %v2821
        %v2823 = vpop.f32.mrf.mxu0
        %2824 = vdwg.mxu0
        %2825 = vmatprep.subr.bf16.mxu0 0
        %2826 = vmatpush1.bf16.xpose.msra.mxu0 0
        %2827 = vmatprep.subr.bf16.mxu0 0
        %2828 = vmatpush1.bf16.xpose.msra.mxu0 0
        %2829 = vmatprep.subr.bf16.mxu0 0
        %2830 = vmatpush1.bf16.xpose.msra.mxu0 0
        %2831 = vmatprep.subr.bf16.mxu0 0
        %2832 = vmatpush1.bf16.xpose.msra.mxu0 0
        %2833 = vmatprep.subr.bf16.mxu0 0
        %2834 = vmatpush1.bf16.xpose.msra.mxu0 0
        %2835 = vmatprep.subr.bf16.mxu0 0
        %2836 = vmatpush1.bf16.xpose.msra.mxu0 0
        %2837 = vmatprep.subr.bf16.mxu0 0
        %2838 = vmatpush1.bf16.xpose.msra.mxu0 0
        %2839 = vmatprep.subr.bf16.mxu0 0
        %2840 = vmatpush1.bf16.xpose.msra.mxu0 %v2737
        %2841 = vmatprep.subr.bf16.mxu0 0
        %2842 = vmatpush2.bf16.xpose.msra.mxu0 0
        %2843 = vmatprep.subr.bf16.mxu0 0
        %2844 = vmatpush2.bf16.xpose.msra.mxu0 0
        %2845 = vmatprep.subr.bf16.mxu0 0
        %2846 = vmatpush2.bf16.xpose.msra.mxu0 0
        %2847 = vmatprep.subr.bf16.mxu0 0
        %2848 = vmatpush2.bf16.xpose.msra.mxu0 0
        %2849 = vmatprep.subr.bf16.mxu0 0
        %2850 = vmatpush2.bf16.xpose.msra.mxu0 0
        %2851 = vmatprep.subr.bf16.mxu0 0
        %2852 = vmatpush2.bf16.xpose.msra.mxu0 0
        %2853 = vmatprep.subr.bf16.mxu0 0
        %2854 = vmatpush2.bf16.xpose.msra.mxu0 0
        %2855 = vmatprep.subr.bf16.mxu0 0
        %2856 = vmatpush2.bf16.xpose.msra.mxu0 0
        %2857 = vmatprep.mubr.bf16.mxu0 0
        %2858 = vmatmul.mubr.bf16.gmra.mxu0 %v2729
        %v2859 = vpop.f32.mrf.mxu0
        %v2860 = vadd.f32 0.0, %v2859
        %v2861 = vpop.f32.mrf.mxu0
        %v2862 = vpop.f32.mrf.mxu0
        %v2863 = vadd.f32 0.0, %v2862
        %v2864 = vpop.f32.mrf.mxu0
        %2865 = vdwg.mxu0
        %2866 = vmatprep.subr.bf16.mxu0 0
        %2867 = vmatpush1.bf16.xpose.msra.mxu0 0
        %2868 = vmatprep.subr.bf16.mxu0 0
        %2869 = vmatpush1.bf16.xpose.msra.mxu0 0
        %2870 = vmatprep.subr.bf16.mxu0 0
        %2871 = vmatpush1.bf16.xpose.msra.mxu0 0
        %2872 = vmatprep.subr.bf16.mxu0 0
        %2873 = vmatpush1.bf16.xpose.msra.mxu0 0
        %2874 = vmatprep.subr.bf16.mxu0 0
        %2875 = vmatpush1.bf16.xpose.msra.mxu0 0
        %2876 = vmatprep.subr.bf16.mxu0 0
        %2877 = vmatpush1.bf16.xpose.msra.mxu0 0
        %2878 = vmatprep.subr.bf16.mxu0 0
        %2879 = vmatpush1.bf16.xpose.msra.mxu0 0
        %2880 = vmatprep.subr.bf16.mxu0 0
        %2881 = vmatpush1.bf16.xpose.msra.mxu0 %v2738
        %2882 = vmatprep.subr.bf16.mxu0 0
        %2883 = vmatpush2.bf16.xpose.msra.mxu0 0
        %2884 = vmatprep.subr.bf16.mxu0 0
        %2885 = vmatpush2.bf16.xpose.msra.mxu0 0
        %2886 = vmatprep.subr.bf16.mxu0 0
        %2887 = vmatpush2.bf16.xpose.msra.mxu0 0
        %2888 = vmatprep.subr.bf16.mxu0 0
        %2889 = vmatpush2.bf16.xpose.msra.mxu0 0
        %2890 = vmatprep.subr.bf16.mxu0 0
        %2891 = vmatpush2.bf16.xpose.msra.mxu0 0
        %2892 = vmatprep.subr.bf16.mxu0 0
        %2893 = vmatpush2.bf16.xpose.msra.mxu0 0
        %2894 = vmatprep.subr.bf16.mxu0 0
        %2895 = vmatpush2.bf16.xpose.msra.mxu0 0
        %2896 = vmatprep.subr.bf16.mxu0 0
        %2897 = vmatpush2.bf16.xpose.msra.mxu0 0
        %2898 = vmatprep.mubr.bf16.mxu0 0
        %2899 = vmatmul.mubr.bf16.gmra.mxu0 %v2730
        %v2900 = vpop.f32.mrf.mxu0
        %v2901 = vadd.f32 0.0, %v2900
        %v2902 = vpop.f32.mrf.mxu0
        %v2903 = vpop.f32.mrf.mxu0
        %v2904 = vadd.f32 0.0, %v2903
        %v2905 = vpop.f32.mrf.mxu0
        %2906 = vdwg.mxu0
        %2907 = vmatprep.subr.bf16.mxu0 0
        %2908 = vmatpush1.bf16.xpose.msra.mxu0 0
        %2909 = vmatprep.subr.bf16.mxu0 0
        %2910 = vmatpush1.bf16.xpose.msra.mxu0 0
        %2911 = vmatprep.subr.bf16.mxu0 0
        %2912 = vmatpush1.bf16.xpose.msra.mxu0 0
        %2913 = vmatprep.subr.bf16.mxu0 0
        %2914 = vmatpush1.bf16.xpose.msra.mxu0 0
        %2915 = vmatprep.subr.bf16.mxu0 0
        %2916 = vmatpush1.bf16.xpose.msra.mxu0 0
        %2917 = vmatprep.subr.bf16.mxu0 0
        %2918 = vmatpush1.bf16.xpose.msra.mxu0 0
        %2919 = vmatprep.subr.bf16.mxu0 0
        %2920 = vmatpush1.bf16.xpose.msra.mxu0 0
        %2921 = vmatprep.subr.bf16.mxu0 0
        %2922 = vmatpush1.bf16.xpose.msra.mxu0 %v2739
        %2923 = vmatprep.subr.bf16.mxu0 0
        %2924 = vmatpush2.bf16.xpose.msra.mxu0 0
        %2925 = vmatprep.subr.bf16.mxu0 0
        %2926 = vmatpush2.bf16.xpose.msra.mxu0 0
        %2927 = vmatprep.subr.bf16.mxu0 0
        %2928 = vmatpush2.bf16.xpose.msra.mxu0 0
        %2929 = vmatprep.subr.bf16.mxu0 0
        %2930 = vmatpush2.bf16.xpose.msra.mxu0 0
        %2931 = vmatprep.subr.bf16.mxu0 0
        %2932 = vmatpush2.bf16.xpose.msra.mxu0 0
        %2933 = vmatprep.subr.bf16.mxu0 0
        %2934 = vmatpush2.bf16.xpose.msra.mxu0 0
        %2935 = vmatprep.subr.bf16.mxu0 0
        %2936 = vmatpush2.bf16.xpose.msra.mxu0 0
        %2937 = vmatprep.subr.bf16.mxu0 0
        %2938 = vmatpush2.bf16.xpose.msra.mxu0 0
        %2939 = vmatprep.mubr.bf16.mxu0 0
        %2940 = vmatmul.mubr.bf16.gmra.mxu0 %v2731
        %v2941 = vpop.f32.mrf.mxu0
        %v2942 = vadd.f32 0.0, %v2941
        %v2943 = vpop.f32.mrf.mxu0
        %v2944 = vpop.f32.mrf.mxu0
        %v2945 = vadd.f32 0.0, %v2944
        %v2946 = vpop.f32.mrf.mxu0
        %2947 = vdwg.mxu0
        %2948 = vmatprep.subr.bf16.mxu0 0
        %2949 = vmatpush1.bf16.xpose.msra.mxu0 0
        %2950 = vmatprep.subr.bf16.mxu0 0
        %2951 = vmatpush1.bf16.xpose.msra.mxu0 0
        %2952 = vmatprep.subr.bf16.mxu0 0
        %2953 = vmatpush1.bf16.xpose.msra.mxu0 0
        %2954 = vmatprep.subr.bf16.mxu0 0
        %2955 = vmatpush1.bf16.xpose.msra.mxu0 0
        %2956 = vmatprep.subr.bf16.mxu0 0
        %2957 = vmatpush1.bf16.xpose.msra.mxu0 0
        %2958 = vmatprep.subr.bf16.mxu0 0
        %2959 = vmatpush1.bf16.xpose.msra.mxu0 0
        %2960 = vmatprep.subr.bf16.mxu0 0
        %2961 = vmatpush1.bf16.xpose.msra.mxu0 0
        %2962 = vmatprep.subr.bf16.mxu0 0
        %2963 = vmatpush1.bf16.xpose.msra.mxu0 %v2740
        %2964 = vmatprep.subr.bf16.mxu0 0
        %2965 = vmatpush2.bf16.xpose.msra.mxu0 0
        %2966 = vmatprep.subr.bf16.mxu0 0
        %2967 = vmatpush2.bf16.xpose.msra.mxu0 0
        %2968 = vmatprep.subr.bf16.mxu0 0
        %2969 = vmatpush2.bf16.xpose.msra.mxu0 0
        %2970 = vmatprep.subr.bf16.mxu0 0
        %2971 = vmatpush2.bf16.xpose.msra.mxu0 0
        %2972 = vmatprep.subr.bf16.mxu0 0
        %2973 = vmatpush2.bf16.xpose.msra.mxu0 0
        %2974 = vmatprep.subr.bf16.mxu0 0
        %2975 = vmatpush2.bf16.xpose.msra.mxu0 0
        %2976 = vmatprep.subr.bf16.mxu0 0
        %2977 = vmatpush2.bf16.xpose.msra.mxu0 0
        %2978 = vmatprep.subr.bf16.mxu0 0
        %2979 = vmatpush2.bf16.xpose.msra.mxu0 0
        %2980 = vmatprep.mubr.bf16.mxu0 0
        %2981 = vmatmul.mubr.bf16.gmra.mxu0 %v2732
        %v2982 = vpop.f32.mrf.mxu0
        %v2983 = vadd.f32 0.0, %v2982
        %v2984 = vpop.f32.mrf.mxu0
        %v2985 = vpop.f32.mrf.mxu0
        %v2986 = vadd.f32 0.0, %v2985
        %v2987 = vpop.f32.mrf.mxu0
        %2988 = vdwg.mxu0
        %2989 = vmatprep.subr.bf16.mxu0 0
        %2990 = vmatpush1.bf16.xpose.msra.mxu0 0
        %2991 = vmatprep.subr.bf16.mxu0 0
        %2992 = vmatpush1.bf16.xpose.msra.mxu0 0
        %2993 = vmatprep.subr.bf16.mxu0 0
        %2994 = vmatpush1.bf16.xpose.msra.mxu0 0
        %2995 = vmatprep.subr.bf16.mxu0 0
        %2996 = vmatpush1.bf16.xpose.msra.mxu0 0
        %2997 = vmatprep.subr.bf16.mxu0 0
        %2998 = vmatpush1.bf16.xpose.msra.mxu0 0
        %2999 = vmatprep.subr.bf16.mxu0 0
        %3000 = vmatpush1.bf16.xpose.msra.mxu0 0
        %3001 = vmatprep.subr.bf16.mxu0 0
        %3002 = vmatpush1.bf16.xpose.msra.mxu0 0
        %3003 = vmatprep.subr.bf16.mxu0 0
        %3004 = vmatpush1.bf16.xpose.msra.mxu0 %v2741
        %3005 = vmatprep.subr.bf16.mxu0 0
        %3006 = vmatpush2.bf16.xpose.msra.mxu0 0
        %3007 = vmatprep.subr.bf16.mxu0 0
        %3008 = vmatpush2.bf16.xpose.msra.mxu0 0
        %3009 = vmatprep.subr.bf16.mxu0 0
        %3010 = vmatpush2.bf16.xpose.msra.mxu0 0
        %3011 = vmatprep.subr.bf16.mxu0 0
        %3012 = vmatpush2.bf16.xpose.msra.mxu0 0
        %3013 = vmatprep.subr.bf16.mxu0 0
        %3014 = vmatpush2.bf16.xpose.msra.mxu0 0
        %3015 = vmatprep.subr.bf16.mxu0 0
        %3016 = vmatpush2.bf16.xpose.msra.mxu0 0
        %3017 = vmatprep.subr.bf16.mxu0 0
        %3018 = vmatpush2.bf16.xpose.msra.mxu0 0
        %3019 = vmatprep.subr.bf16.mxu0 0
        %3020 = vmatpush2.bf16.xpose.msra.mxu0 0
        %3021 = vmatprep.mubr.bf16.mxu0 0
        %3022 = vmatmul.mubr.bf16.gmra.mxu0 %v2733
        %v3023 = vpop.f32.mrf.mxu0
        %v3024 = vadd.f32 0.0, %v3023
        %v3025 = vpop.f32.mrf.mxu0
        %v3026 = vpop.f32.mrf.mxu0
        %v3027 = vadd.f32 0.0, %v3026
        %v3028 = vpop.f32.mrf.mxu0
        %3029 = vdwg.mxu0
        %3030 = vmatprep.subr.bf16.mxu0 0
        %3031 = vmatpush1.bf16.xpose.msra.mxu0 0
        %3032 = vmatprep.subr.bf16.mxu0 0
        %3033 = vmatpush1.bf16.xpose.msra.mxu0 0
        %3034 = vmatprep.subr.bf16.mxu0 0
        %3035 = vmatpush1.bf16.xpose.msra.mxu0 0
        %3036 = vmatprep.subr.bf16.mxu0 0
        %3037 = vmatpush1.bf16.xpose.msra.mxu0 0
        %3038 = vmatprep.subr.bf16.mxu0 0
        %3039 = vmatpush1.bf16.xpose.msra.mxu0 0
        %3040 = vmatprep.subr.bf16.mxu0 0
        %3041 = vmatpush1.bf16.xpose.msra.mxu0 0
        %3042 = vmatprep.subr.bf16.mxu0 0
        %3043 = vmatpush1.bf16.xpose.msra.mxu0 0
        %3044 = vmatprep.subr.bf16.mxu0 0
        %3045 = vmatpush1.bf16.xpose.msra.mxu0 %v2742
        %3046 = vmatprep.subr.bf16.mxu0 0
        %3047 = vmatpush2.bf16.xpose.msra.mxu0 0
        %3048 = vmatprep.subr.bf16.mxu0 0
        %3049 = vmatpush2.bf16.xpose.msra.mxu0 0
        %3050 = vmatprep.subr.bf16.mxu0 0
        %3051 = vmatpush2.bf16.xpose.msra.mxu0 0
        %3052 = vmatprep.subr.bf16.mxu0 0
        %3053 = vmatpush2.bf16.xpose.msra.mxu0 0
        %3054 = vmatprep.subr.bf16.mxu0 0
        %3055 = vmatpush2.bf16.xpose.msra.mxu0 0
        %3056 = vmatprep.subr.bf16.mxu0 0
        %3057 = vmatpush2.bf16.xpose.msra.mxu0 0
        %3058 = vmatprep.subr.bf16.mxu0 0
        %3059 = vmatpush2.bf16.xpose.msra.mxu0 0
        %3060 = vmatprep.subr.bf16.mxu0 0
        %3061 = vmatpush2.bf16.xpose.msra.mxu0 0
        %3062 = vmatprep.mubr.bf16.mxu0 0
        %3063 = vmatmul.mubr.bf16.gmra.mxu0 %v2734
        %v3064 = vpop.f32.mrf.mxu0
        %v3065 = vadd.f32 0.0, %v3064
        %v3066 = vpop.f32.mrf.mxu0
        %v3067 = vpop.f32.mrf.mxu0
        %v3068 = vadd.f32 0.0, %v3067
        %v3069 = vpop.f32.mrf.mxu0
        %3070 = vdwg.mxu0
        %vm3071 = vcmask 130048
        %v3072 = vsel %vm3071, %v2778, -inf
        %3073 = vmax.xlane.f32.xlu0 %v3072
        %v3074 = vpop.xlane.xlu0 %3073
        %v3075 = vsel %vm3071, %v2781, -inf
        %3076 = vmax.xlane.f32.xlu0 %v3075
        %v3077 = vpop.xlane.xlu0 %3076
        %v3078 = vsel %vm3071, %v2819, -inf
        %3079 = vmax.xlane.f32.xlu0 %v3078
        %v3080 = vpop.xlane.xlu0 %3079
        %v3081 = vsel %vm3071, %v2822, -inf
        %3082 = vmax.xlane.f32.xlu0 %v3081
        %v3083 = vpop.xlane.xlu0 %3082
        %v3084 = vsel %vm3071, %v2860, -inf
        %3085 = vmax.xlane.f32.xlu0 %v3084
        %v3086 = vpop.xlane.xlu0 %3085
        %v3087 = vsel %vm3071, %v2863, -inf
        %3088 = vmax.xlane.f32.xlu0 %v3087
        %v3089 = vpop.xlane.xlu0 %3088
        %v3090 = vsel %vm3071, %v2901, -inf
        %3091 = vmax.xlane.f32.xlu0 %v3090
        %v3092 = vpop.xlane.xlu0 %3091
        %v3093 = vsel %vm3071, %v2904, -inf
        %3094 = vmax.xlane.f32.xlu0 %v3093
        %v3095 = vpop.xlane.xlu0 %3094
        %v3096 = vsel %vm3071, %v2942, -inf
        %3097 = vmax.xlane.f32.xlu0 %v3096
        %v3098 = vpop.xlane.xlu0 %3097
        %v3099 = vsel %vm3071, %v2945, -inf
        %3100 = vmax.xlane.f32.xlu0 %v3099
        %v3101 = vpop.xlane.xlu0 %3100
        %v3102 = vsel %vm3071, %v2983, -inf
        %3103 = vmax.xlane.f32.xlu0 %v3102
        %v3104 = vpop.xlane.xlu0 %3103
        %v3105 = vsel %vm3071, %v2986, -inf
        %3106 = vmax.xlane.f32.xlu0 %v3105
        %v3107 = vpop.xlane.xlu0 %3106
        %v3108 = vsel %vm3071, %v3024, -inf
        %3109 = vmax.xlane.f32.xlu0 %v3108
        %v3110 = vpop.xlane.xlu0 %3109
        %v3111 = vsel %vm3071, %v3027, -inf
        %3112 = vmax.xlane.f32.xlu0 %v3111
        %v3113 = vpop.xlane.xlu0 %3112
        %v3114 = vsel %vm3071, %v3065, -inf
        %3115 = vmax.xlane.f32.xlu0 %v3114
        %v3116 = vpop.xlane.xlu0 %3115
        %v3117 = vsel %vm3071, %v3068, -inf
        %3118 = vmax.xlane.f32.xlu0 %v3117
        %v3119 = vpop.xlane.xlu0 %3118
        %v3120 = vsub.f32 %v2778, %v3074
        %v3121 = vsub.f32 %v2781, %v3077
        %v3122 = vsub.f32 %v2819, %v3080
        %v3123 = vsub.f32 %v2822, %v3083
        %v3124 = vsub.f32 %v2860, %v3086
        %v3125 = vsub.f32 %v2863, %v3089
        %v3126 = vsub.f32 %v2901, %v3092
        %v3127 = vsub.f32 %v2904, %v3095
        %v3128 = vsub.f32 %v2942, %v3098
        %v3129 = vsub.f32 %v2945, %v3101
        %v3130 = vsub.f32 %v2983, %v3104
        %v3131 = vsub.f32 %v2986, %v3107
        %v3132 = vsub.f32 %v3024, %v3110
        %v3133 = vsub.f32 %v3027, %v3113
        %v3134 = vsub.f32 %v3065, %v3116
        %v3135 = vsub.f32 %v3068, %v3119
        %v3136 = vmul.f32 %v3120, 1.442695
        %v3137 = vpow.pop %v3136
        %v3138 = vmul.f32 %v3121, 1.442695
        %v3139 = vpow.pop %v3138
        %v3140 = vmul.f32 %v3122, 1.442695
        %v3141 = vpow.pop %v3140
        %v3142 = vmul.f32 %v3123, 1.442695
        %v3143 = vpow.pop %v3142
        %v3144 = vmul.f32 %v3124, 1.442695
        %v3145 = vpow.pop %v3144
        %v3146 = vmul.f32 %v3125, 1.442695
        %v3147 = vpow.pop %v3146
        %v3148 = vmul.f32 %v3126, 1.442695
        %v3149 = vpow.pop %v3148
        %v3150 = vmul.f32 %v3127, 1.442695
        %v3151 = vpow.pop %v3150
        %v3152 = vmul.f32 %v3128, 1.442695
        %v3153 = vpow.pop %v3152
        %v3154 = vmul.f32 %v3129, 1.442695
        %v3155 = vpow.pop %v3154
        %v3156 = vmul.f32 %v3130, 1.442695
        %v3157 = vpow.pop %v3156
        %v3158 = vmul.f32 %v3131, 1.442695
        %v3159 = vpow.pop %v3158
        %v3160 = vmul.f32 %v3132, 1.442695
        %v3161 = vpow.pop %v3160
        %v3162 = vmul.f32 %v3133, 1.442695
        %v3163 = vpow.pop %v3162
        %v3164 = vmul.f32 %v3134, 1.442695
        %v3165 = vpow.pop %v3164
        %v3166 = vmul.f32 %v3135, 1.442695
        %v3167 = vpow.pop %v3166
        %v3168 = vsel %vm3071, %v3137, 0.0
        %3169 = vadd.xlane.f32.xlu0 %v3168
        %v3170 = vpop.xlane.xlu0 %3169
        %v3171 = vsel %vm3071, %v3139, 0.0
        %3172 = vadd.xlane.f32.xlu0 %v3171
        %v3173 = vpop.xlane.xlu0 %3172
        %v3174 = vsel %vm3071, %v3141, 0.0
        %3175 = vadd.xlane.f32.xlu0 %v3174
        %v3176 = vpop.xlane.xlu0 %3175
        %v3177 = vsel %vm3071, %v3143, 0.0
        %3178 = vadd.xlane.f32.xlu0 %v3177
        %v3179 = vpop.xlane.xlu0 %3178
        %v3180 = vsel %vm3071, %v3145, 0.0
        %3181 = vadd.xlane.f32.xlu0 %v3180
        %v3182 = vpop.xlane.xlu0 %3181
        %v3183 = vsel %vm3071, %v3147, 0.0
        %3184 = vadd.xlane.f32.xlu0 %v3183
        %v3185 = vpop.xlane.xlu0 %3184
        %v3186 = vsel %vm3071, %v3149, 0.0
        %3187 = vadd.xlane.f32.xlu0 %v3186
        %v3188 = vpop.xlane.xlu0 %3187
        %v3189 = vsel %vm3071, %v3151, 0.0
        %3190 = vadd.xlane.f32.xlu0 %v3189
        %v3191 = vpop.xlane.xlu0 %3190
        %v3192 = vsel %vm3071, %v3153, 0.0
        %3193 = vadd.xlane.f32.xlu0 %v3192
        %v3194 = vpop.xlane.xlu0 %3193
        %v3195 = vsel %vm3071, %v3155, 0.0
        %3196 = vadd.xlane.f32.xlu0 %v3195
        %v3197 = vpop.xlane.xlu0 %3196
        %v3198 = vsel %vm3071, %v3157, 0.0
        %3199 = vadd.xlane.f32.xlu0 %v3198
        %v3200 = vpop.xlane.xlu0 %3199
        %v3201 = vsel %vm3071, %v3159, 0.0
        %3202 = vadd.xlane.f32.xlu0 %v3201
        %v3203 = vpop.xlane.xlu0 %3202
        %v3204 = vsel %vm3071, %v3161, 0.0
        %3205 = vadd.xlane.f32.xlu0 %v3204
        %v3206 = vpop.xlane.xlu0 %3205
        %v3207 = vsel %vm3071, %v3163, 0.0
        %3208 = vadd.xlane.f32.xlu0 %v3207
        %v3209 = vpop.xlane.xlu0 %3208
        %v3210 = vsel %vm3071, %v3165, 0.0
        %3211 = vadd.xlane.f32.xlu0 %v3210
        %v3212 = vpop.xlane.xlu0 %3211
        %v3213 = vsel %vm3071, %v3167, 0.0
        %3214 = vadd.xlane.f32.xlu0 %v3213
        %v3215 = vpop.xlane.xlu0 %3214
        %v3216 = vrcp.pop %v3170
        %v3217 = vrcp.pop %v3173
        %v3218 = vrcp.pop %v3176
        %v3219 = vrcp.pop %v3179
        %v3220 = vrcp.pop %v3182
        %v3221 = vrcp.pop %v3185
        %v3222 = vrcp.pop %v3188
        %v3223 = vrcp.pop %v3191
        %v3224 = vrcp.pop %v3194
        %v3225 = vrcp.pop %v3197
        %v3226 = vrcp.pop %v3200
        %v3227 = vrcp.pop %v3203
        %v3228 = vrcp.pop %v3206
        %v3229 = vrcp.pop %v3209
        %v3230 = vrcp.pop %v3212
        %v3231 = vrcp.pop %v3215
        %v3232 = vmul.f32 %v3137, %v3216
        %v3233 = vmul.f32 %v3139, %v3217
        %v3234 = vmul.f32 %v3141, %v3218
        %v3235 = vmul.f32 %v3143, %v3219
        %v3236 = vmul.f32 %v3145, %v3220
        %v3237 = vmul.f32 %v3147, %v3221
        %v3238 = vmul.f32 %v3149, %v3222
        %v3239 = vmul.f32 %v3151, %v3223
        %v3240 = vmul.f32 %v3153, %v3224
        %v3241 = vmul.f32 %v3155, %v3225
        %v3242 = vmul.f32 %v3157, %v3226
        %v3243 = vmul.f32 %v3159, %v3227
        %v3244 = vmul.f32 %v3161, %v3228
        %v3245 = vmul.f32 %v3163, %v3229
        %v3246 = vmul.f32 %v3165, %v3230
        %v3247 = vmul.f32 %v3167, %v3231
        %v3248 = vpack.c.bf16 %v3233, %v3232
        %v3249 = vpack.c.bf16 %v3235, %v3234
        %v3250 = vpack.c.bf16 %v3237, %v3236
        %v3251 = vpack.c.bf16 %v3239, %v3238
        %v3252 = vpack.c.bf16 %v3241, %v3240
        %v3253 = vpack.c.bf16 %v3243, %v3242
        %v3254 = vpack.c.bf16 %v3245, %v3244
        %v3255 = vpack.c.bf16 %v3247, %v3246
        %v3256 = vpack.c.bf16 %v2236, %v2233
        %v3257 = vpack.c.bf16 %v2244, %v2241
        %v3258 = vpack.c.bf16 %v2252, %v2249
        %v3259 = vpack.c.bf16 %v2260, %v2257
        %v3260 = vpack.c.bf16 %v2268, %v2265
        %v3261 = vpack.c.bf16 %v2276, %v2273
        %v3262 = vpack.c.bf16 %v2284, %v2281
        %v3263 = vpack.c.bf16 %v2292, %v2289
        %v3265 = vsel %vm3071, %v3248, 0
        %3267 = vmatprep.subr.bf16.mxu0 0
        %3268 = vmatpush1.bf16.msra.mxu0 0
        %3269 = vmatprep.subr.bf16.mxu0 0
        %3270 = vmatpush1.bf16.msra.mxu0 0
        %3271 = vmatprep.subr.bf16.mxu0 0
        %3272 = vmatpush1.bf16.msra.mxu0 0
        %3273 = vmatprep.subr.bf16.mxu0 0
        %3274 = vmatpush1.bf16.msra.mxu0 0
        %3275 = vmatprep.subr.bf16.mxu0 0
        %3276 = vmatpush1.bf16.msra.mxu0 0
        %3277 = vmatprep.subr.bf16.mxu0 0
        %3278 = vmatpush1.bf16.msra.mxu0 0
        %3279 = vmatprep.subr.bf16.mxu0 0
        %3280 = vmatpush1.bf16.msra.mxu0 0
        %3281 = vmatprep.subr.bf16.mxu0 0
        %3282 = vmatpush1.bf16.msra.mxu0 %v3256
        %3283 = vmatprep.subr.bf16.mxu0 0
        %3284 = vmatpush2.bf16.msra.mxu0 0
        %3285 = vmatprep.subr.bf16.mxu0 0
        %3286 = vmatpush2.bf16.msra.mxu0 0
        %3287 = vmatprep.subr.bf16.mxu0 0
        %3288 = vmatpush2.bf16.msra.mxu0 0
        %3289 = vmatprep.subr.bf16.mxu0 0
        %3290 = vmatpush2.bf16.msra.mxu0 0
        %3291 = vmatprep.subr.bf16.mxu0 0
        %3292 = vmatpush2.bf16.msra.mxu0 0
        %3293 = vmatprep.subr.bf16.mxu0 0
        %3294 = vmatpush2.bf16.msra.mxu0 0
        %3295 = vmatprep.subr.bf16.mxu0 0
        %3296 = vmatpush2.bf16.msra.mxu0 0
        %3297 = vmatprep.subr.bf16.mxu0 0
        %3298 = vmatpush2.bf16.msra.mxu0 0
        %3299 = vmatprep.mubr.bf16.mxu0 0
        %3300 = vmatmul.mubr.bf16.gmra.mxu0 %v3265
        %v3301 = vpop.f32.mrf.mxu0
        %v3302 = vadd.f32 0.0, %v3301
        %v3303 = vpop.f32.mrf.mxu0
        %v3304 = vpop.f32.mrf.mxu0
        %v3305 = vadd.f32 0.0, %v3304
        %v3306 = vpop.f32.mrf.mxu0
        %3307 = vdwg.mxu0
        %v3309 = vsel %vm3071, %v3249, 0
        %3311 = vmatprep.subr.bf16.mxu0 0
        %3312 = vmatpush1.bf16.msra.mxu0 0
        %3313 = vmatprep.subr.bf16.mxu0 0
        %3314 = vmatpush1.bf16.msra.mxu0 0
        %3315 = vmatprep.subr.bf16.mxu0 0
        %3316 = vmatpush1.bf16.msra.mxu0 0
        %3317 = vmatprep.subr.bf16.mxu0 0
        %3318 = vmatpush1.bf16.msra.mxu0 0
        %3319 = vmatprep.subr.bf16.mxu0 0
        %3320 = vmatpush1.bf16.msra.mxu0 0
        %3321 = vmatprep.subr.bf16.mxu0 0
        %3322 = vmatpush1.bf16.msra.mxu0 0
        %3323 = vmatprep.subr.bf16.mxu0 0
        %3324 = vmatpush1.bf16.msra.mxu0 0
        %3325 = vmatprep.subr.bf16.mxu0 0
        %3326 = vmatpush1.bf16.msra.mxu0 %v3257
        %3327 = vmatprep.subr.bf16.mxu0 0
        %3328 = vmatpush2.bf16.msra.mxu0 0
        %3329 = vmatprep.subr.bf16.mxu0 0
        %3330 = vmatpush2.bf16.msra.mxu0 0
        %3331 = vmatprep.subr.bf16.mxu0 0
        %3332 = vmatpush2.bf16.msra.mxu0 0
        %3333 = vmatprep.subr.bf16.mxu0 0
        %3334 = vmatpush2.bf16.msra.mxu0 0
        %3335 = vmatprep.subr.bf16.mxu0 0
        %3336 = vmatpush2.bf16.msra.mxu0 0
        %3337 = vmatprep.subr.bf16.mxu0 0
        %3338 = vmatpush2.bf16.msra.mxu0 0
        %3339 = vmatprep.subr.bf16.mxu0 0
        %3340 = vmatpush2.bf16.msra.mxu0 0
        %3341 = vmatprep.subr.bf16.mxu0 0
        %3342 = vmatpush2.bf16.msra.mxu0 0
        %3343 = vmatprep.mubr.bf16.mxu0 0
        %3344 = vmatmul.mubr.bf16.gmra.mxu0 %v3309
        %v3345 = vpop.f32.mrf.mxu0
        %v3346 = vadd.f32 0.0, %v3345
        %v3347 = vpop.f32.mrf.mxu0
        %v3348 = vpop.f32.mrf.mxu0
        %v3349 = vadd.f32 0.0, %v3348
        %v3350 = vpop.f32.mrf.mxu0
        %3351 = vdwg.mxu0
        %v3353 = vsel %vm3071, %v3250, 0
        %3355 = vmatprep.subr.bf16.mxu0 0
        %3356 = vmatpush1.bf16.msra.mxu0 0
        %3357 = vmatprep.subr.bf16.mxu0 0
        %3358 = vmatpush1.bf16.msra.mxu0 0
        %3359 = vmatprep.subr.bf16.mxu0 0
        %3360 = vmatpush1.bf16.msra.mxu0 0
        %3361 = vmatprep.subr.bf16.mxu0 0
        %3362 = vmatpush1.bf16.msra.mxu0 0
        %3363 = vmatprep.subr.bf16.mxu0 0
        %3364 = vmatpush1.bf16.msra.mxu0 0
        %3365 = vmatprep.subr.bf16.mxu0 0
        %3366 = vmatpush1.bf16.msra.mxu0 0
        %3367 = vmatprep.subr.bf16.mxu0 0
        %3368 = vmatpush1.bf16.msra.mxu0 0
        %3369 = vmatprep.subr.bf16.mxu0 0
        %3370 = vmatpush1.bf16.msra.mxu0 %v3258
        %3371 = vmatprep.subr.bf16.mxu0 0
        %3372 = vmatpush2.bf16.msra.mxu0 0
        %3373 = vmatprep.subr.bf16.mxu0 0
        %3374 = vmatpush2.bf16.msra.mxu0 0
        %3375 = vmatprep.subr.bf16.mxu0 0
        %3376 = vmatpush2.bf16.msra.mxu0 0
        %3377 = vmatprep.subr.bf16.mxu0 0
        %3378 = vmatpush2.bf16.msra.mxu0 0
        %3379 = vmatprep.subr.bf16.mxu0 0
        %3380 = vmatpush2.bf16.msra.mxu0 0
        %3381 = vmatprep.subr.bf16.mxu0 0
        %3382 = vmatpush2.bf16.msra.mxu0 0
        %3383 = vmatprep.subr.bf16.mxu0 0
        %3384 = vmatpush2.bf16.msra.mxu0 0
        %3385 = vmatprep.subr.bf16.mxu0 0
        %3386 = vmatpush2.bf16.msra.mxu0 0
        %3387 = vmatprep.mubr.bf16.mxu0 0
        %3388 = vmatmul.mubr.bf16.gmra.mxu0 %v3353
        %v3389 = vpop.f32.mrf.mxu0
        %v3390 = vadd.f32 0.0, %v3389
        %v3391 = vpop.f32.mrf.mxu0
        %v3392 = vpop.f32.mrf.mxu0
        %v3393 = vadd.f32 0.0, %v3392
        %v3394 = vpop.f32.mrf.mxu0
        %3395 = vdwg.mxu0
        %v3397 = vsel %vm3071, %v3251, 0
        %3399 = vmatprep.subr.bf16.mxu0 0
        %3400 = vmatpush1.bf16.msra.mxu0 0
        %3401 = vmatprep.subr.bf16.mxu0 0
        %3402 = vmatpush1.bf16.msra.mxu0 0
        %3403 = vmatprep.subr.bf16.mxu0 0
        %3404 = vmatpush1.bf16.msra.mxu0 0
        %3405 = vmatprep.subr.bf16.mxu0 0
        %3406 = vmatpush1.bf16.msra.mxu0 0
        %3407 = vmatprep.subr.bf16.mxu0 0
        %3408 = vmatpush1.bf16.msra.mxu0 0
        %3409 = vmatprep.subr.bf16.mxu0 0
        %3410 = vmatpush1.bf16.msra.mxu0 0
        %3411 = vmatprep.subr.bf16.mxu0 0
        %3412 = vmatpush1.bf16.msra.mxu0 0
        %3413 = vmatprep.subr.bf16.mxu0 0
        %3414 = vmatpush1.bf16.msra.mxu0 %v3259
        %3415 = vmatprep.subr.bf16.mxu0 0
        %3416 = vmatpush2.bf16.msra.mxu0 0
        %3417 = vmatprep.subr.bf16.mxu0 0
        %3418 = vmatpush2.bf16.msra.mxu0 0
        %3419 = vmatprep.subr.bf16.mxu0 0
        %3420 = vmatpush2.bf16.msra.mxu0 0
        %3421 = vmatprep.subr.bf16.mxu0 0
        %3422 = vmatpush2.bf16.msra.mxu0 0
        %3423 = vmatprep.subr.bf16.mxu0 0
        %3424 = vmatpush2.bf16.msra.mxu0 0
        %3425 = vmatprep.subr.bf16.mxu0 0
        %3426 = vmatpush2.bf16.msra.mxu0 0
        %3427 = vmatprep.subr.bf16.mxu0 0
        %3428 = vmatpush2.bf16.msra.mxu0 0
        %3429 = vmatprep.subr.bf16.mxu0 0
        %3430 = vmatpush2.bf16.msra.mxu0 0
        %3431 = vmatprep.mubr.bf16.mxu0 0
        %3432 = vmatmul.mubr.bf16.gmra.mxu0 %v3397
        %v3433 = vpop.f32.mrf.mxu0
        %v3434 = vadd.f32 0.0, %v3433
        %v3435 = vpop.f32.mrf.mxu0
        %v3436 = vpop.f32.mrf.mxu0
        %v3437 = vadd.f32 0.0, %v3436
        %v3438 = vpop.f32.mrf.mxu0
        %3439 = vdwg.mxu0
        %v3441 = vsel %vm3071, %v3252, 0
        %3443 = vmatprep.subr.bf16.mxu0 0
        %3444 = vmatpush1.bf16.msra.mxu0 0
        %3445 = vmatprep.subr.bf16.mxu0 0
        %3446 = vmatpush1.bf16.msra.mxu0 0
        %3447 = vmatprep.subr.bf16.mxu0 0
        %3448 = vmatpush1.bf16.msra.mxu0 0
        %3449 = vmatprep.subr.bf16.mxu0 0
        %3450 = vmatpush1.bf16.msra.mxu0 0
        %3451 = vmatprep.subr.bf16.mxu0 0
        %3452 = vmatpush1.bf16.msra.mxu0 0
        %3453 = vmatprep.subr.bf16.mxu0 0
        %3454 = vmatpush1.bf16.msra.mxu0 0
        %3455 = vmatprep.subr.bf16.mxu0 0
        %3456 = vmatpush1.bf16.msra.mxu0 0
        %3457 = vmatprep.subr.bf16.mxu0 0
        %3458 = vmatpush1.bf16.msra.mxu0 %v3260
        %3459 = vmatprep.subr.bf16.mxu0 0
        %3460 = vmatpush2.bf16.msra.mxu0 0
        %3461 = vmatprep.subr.bf16.mxu0 0
        %3462 = vmatpush2.bf16.msra.mxu0 0
        %3463 = vmatprep.subr.bf16.mxu0 0
        %3464 = vmatpush2.bf16.msra.mxu0 0
        %3465 = vmatprep.subr.bf16.mxu0 0
        %3466 = vmatpush2.bf16.msra.mxu0 0
        %3467 = vmatprep.subr.bf16.mxu0 0
        %3468 = vmatpush2.bf16.msra.mxu0 0
        %3469 = vmatprep.subr.bf16.mxu0 0
        %3470 = vmatpush2.bf16.msra.mxu0 0
        %3471 = vmatprep.subr.bf16.mxu0 0
        %3472 = vmatpush2.bf16.msra.mxu0 0
        %3473 = vmatprep.subr.bf16.mxu0 0
        %3474 = vmatpush2.bf16.msra.mxu0 0
        %3475 = vmatprep.mubr.bf16.mxu0 0
        %3476 = vmatmul.mubr.bf16.gmra.mxu0 %v3441
        %v3477 = vpop.f32.mrf.mxu0
        %v3478 = vadd.f32 0.0, %v3477
        %v3479 = vpop.f32.mrf.mxu0
        %v3480 = vpop.f32.mrf.mxu0
        %v3481 = vadd.f32 0.0, %v3480
        %v3482 = vpop.f32.mrf.mxu0
        %3483 = vdwg.mxu0
        %v3485 = vsel %vm3071, %v3253, 0
        %3487 = vmatprep.subr.bf16.mxu0 0
        %3488 = vmatpush1.bf16.msra.mxu0 0
        %3489 = vmatprep.subr.bf16.mxu0 0
        %3490 = vmatpush1.bf16.msra.mxu0 0
        %3491 = vmatprep.subr.bf16.mxu0 0
        %3492 = vmatpush1.bf16.msra.mxu0 0
        %3493 = vmatprep.subr.bf16.mxu0 0
        %3494 = vmatpush1.bf16.msra.mxu0 0
        %3495 = vmatprep.subr.bf16.mxu0 0
        %3496 = vmatpush1.bf16.msra.mxu0 0
        %3497 = vmatprep.subr.bf16.mxu0 0
        %3498 = vmatpush1.bf16.msra.mxu0 0
        %3499 = vmatprep.subr.bf16.mxu0 0
        %3500 = vmatpush1.bf16.msra.mxu0 0
        %3501 = vmatprep.subr.bf16.mxu0 0
        %3502 = vmatpush1.bf16.msra.mxu0 %v3261
        %3503 = vmatprep.subr.bf16.mxu0 0
        %3504 = vmatpush2.bf16.msra.mxu0 0
        %3505 = vmatprep.subr.bf16.mxu0 0
        %3506 = vmatpush2.bf16.msra.mxu0 0
        %3507 = vmatprep.subr.bf16.mxu0 0
        %3508 = vmatpush2.bf16.msra.mxu0 0
        %3509 = vmatprep.subr.bf16.mxu0 0
        %3510 = vmatpush2.bf16.msra.mxu0 0
        %3511 = vmatprep.subr.bf16.mxu0 0
        %3512 = vmatpush2.bf16.msra.mxu0 0
        %3513 = vmatprep.subr.bf16.mxu0 0
        %3514 = vmatpush2.bf16.msra.mxu0 0
        %3515 = vmatprep.subr.bf16.mxu0 0
        %3516 = vmatpush2.bf16.msra.mxu0 0
        %3517 = vmatprep.subr.bf16.mxu0 0
        %3518 = vmatpush2.bf16.msra.mxu0 0
        %3519 = vmatprep.mubr.bf16.mxu0 0
        %3520 = vmatmul.mubr.bf16.gmra.mxu0 %v3485
        %v3521 = vpop.f32.mrf.mxu0
        %v3522 = vadd.f32 0.0, %v3521
        %v3523 = vpop.f32.mrf.mxu0
        %v3524 = vpop.f32.mrf.mxu0
        %v3525 = vadd.f32 0.0, %v3524
        %v3526 = vpop.f32.mrf.mxu0
        %3527 = vdwg.mxu0
        %v3529 = vsel %vm3071, %v3254, 0
        %3531 = vmatprep.subr.bf16.mxu0 0
        %3532 = vmatpush1.bf16.msra.mxu0 0
        %3533 = vmatprep.subr.bf16.mxu0 0
        %3534 = vmatpush1.bf16.msra.mxu0 0
        %3535 = vmatprep.subr.bf16.mxu0 0
        %3536 = vmatpush1.bf16.msra.mxu0 0
        %3537 = vmatprep.subr.bf16.mxu0 0
        %3538 = vmatpush1.bf16.msra.mxu0 0
        %3539 = vmatprep.subr.bf16.mxu0 0
        %3540 = vmatpush1.bf16.msra.mxu0 0
        %3541 = vmatprep.subr.bf16.mxu0 0
        %3542 = vmatpush1.bf16.msra.mxu0 0
        %3543 = vmatprep.subr.bf16.mxu0 0
        %3544 = vmatpush1.bf16.msra.mxu0 0
        %3545 = vmatprep.subr.bf16.mxu0 0
        %3546 = vmatpush1.bf16.msra.mxu0 %v3262
        %3547 = vmatprep.subr.bf16.mxu0 0
        %3548 = vmatpush2.bf16.msra.mxu0 0
        %3549 = vmatprep.subr.bf16.mxu0 0
        %3550 = vmatpush2.bf16.msra.mxu0 0
        %3551 = vmatprep.subr.bf16.mxu0 0
        %3552 = vmatpush2.bf16.msra.mxu0 0
        %3553 = vmatprep.subr.bf16.mxu0 0
        %3554 = vmatpush2.bf16.msra.mxu0 0
        %3555 = vmatprep.subr.bf16.mxu0 0
        %3556 = vmatpush2.bf16.msra.mxu0 0
        %3557 = vmatprep.subr.bf16.mxu0 0
        %3558 = vmatpush2.bf16.msra.mxu0 0
        %3559 = vmatprep.subr.bf16.mxu0 0
        %3560 = vmatpush2.bf16.msra.mxu0 0
        %3561 = vmatprep.subr.bf16.mxu0 0
        %3562 = vmatpush2.bf16.msra.mxu0 0
        %3563 = vmatprep.mubr.bf16.mxu0 0
        %3564 = vmatmul.mubr.bf16.gmra.mxu0 %v3529
        %v3565 = vpop.f32.mrf.mxu0
        %v3566 = vadd.f32 0.0, %v3565
        %v3567 = vpop.f32.mrf.mxu0
        %v3568 = vpop.f32.mrf.mxu0
        %v3569 = vadd.f32 0.0, %v3568
        %v3570 = vpop.f32.mrf.mxu0
        %3571 = vdwg.mxu0
        %v3573 = vsel %vm3071, %v3255, 0
        %3575 = vmatprep.subr.bf16.mxu0 0
        %3576 = vmatpush1.bf16.msra.mxu0 0
        %3577 = vmatprep.subr.bf16.mxu0 0
        %3578 = vmatpush1.bf16.msra.mxu0 0
        %3579 = vmatprep.subr.bf16.mxu0 0
        %3580 = vmatpush1.bf16.msra.mxu0 0
        %3581 = vmatprep.subr.bf16.mxu0 0
        %3582 = vmatpush1.bf16.msra.mxu0 0
        %3583 = vmatprep.subr.bf16.mxu0 0
        %3584 = vmatpush1.bf16.msra.mxu0 0
        %3585 = vmatprep.subr.bf16.mxu0 0
        %3586 = vmatpush1.bf16.msra.mxu0 0
        %3587 = vmatprep.subr.bf16.mxu0 0
        %3588 = vmatpush1.bf16.msra.mxu0 0
        %3589 = vmatprep.subr.bf16.mxu0 0
        %3590 = vmatpush1.bf16.msra.mxu0 %v3263
        %3591 = vmatprep.subr.bf16.mxu0 0
        %3592 = vmatpush2.bf16.msra.mxu0 0
        %3593 = vmatprep.subr.bf16.mxu0 0
        %3594 = vmatpush2.bf16.msra.mxu0 0
        %3595 = vmatprep.subr.bf16.mxu0 0
        %3596 = vmatpush2.bf16.msra.mxu0 0
        %3597 = vmatprep.subr.bf16.mxu0 0
        %3598 = vmatpush2.bf16.msra.mxu0 0
        %3599 = vmatprep.subr.bf16.mxu0 0
        %3600 = vmatpush2.bf16.msra.mxu0 0
        %3601 = vmatprep.subr.bf16.mxu0 0
        %3602 = vmatpush2.bf16.msra.mxu0 0
        %3603 = vmatprep.subr.bf16.mxu0 0
        %3604 = vmatpush2.bf16.msra.mxu0 0
        %3605 = vmatprep.subr.bf16.mxu0 0
        %3606 = vmatpush2.bf16.msra.mxu0 0
        %3607 = vmatprep.mubr.bf16.mxu0 0
        %3608 = vmatmul.mubr.bf16.gmra.mxu0 %v3573
        %v3609 = vpop.f32.mrf.mxu0
        %v3610 = vadd.f32 0.0, %v3609
        %v3611 = vpop.f32.mrf.mxu0
        %v3612 = vpop.f32.mrf.mxu0
        %v3613 = vadd.f32 0.0, %v3612
        %v3614 = vpop.f32.mrf.mxu0
        %3615 = vdwg.mxu0
        %v3616 = vpack.c.bf16 %v1928, %v1927
        %v3617 = vpack.c.bf16 %v1930, %v1929
        %v3618 = vpack.c.bf16 %v1932, %v1931
        %v3619 = vpack.c.bf16 %v1934, %v1933
        %v3620 = vpack.c.bf16 %v1936, %v1935
        %v3621 = vpack.c.bf16 %v1938, %v1937
        %v3622 = vpack.c.bf16 %v1940, %v1939
        %v3623 = vpack.c.bf16 %v1942, %v1941
        %v3624 = vpack.c.bf16 %v2452, %v2449
        %v3625 = vpack.c.bf16 %v2460, %v2457
        %v3626 = vpack.c.bf16 %v2468, %v2465
        %v3627 = vpack.c.bf16 %v2476, %v2473
        %v3628 = vpack.c.bf16 %v2484, %v2481
        %v3629 = vpack.c.bf16 %v2492, %v2489
        %v3630 = vpack.c.bf16 %v2500, %v2497
        %v3631 = vpack.c.bf16 %v2508, %v2505
        %3632 = vmatprep.subr.bf16.mxu0 0
        %3633 = vmatpush1.bf16.xpose.msra.mxu0 0
        %3634 = vmatprep.subr.bf16.mxu0 0
        %3635 = vmatpush1.bf16.xpose.msra.mxu0 0
        %3636 = vmatprep.subr.bf16.mxu0 0
        %3637 = vmatpush1.bf16.xpose.msra.mxu0 0
        %3638 = vmatprep.subr.bf16.mxu0 0
        %3639 = vmatpush1.bf16.xpose.msra.mxu0 0
        %3640 = vmatprep.subr.bf16.mxu0 0
        %3641 = vmatpush1.bf16.xpose.msra.mxu0 0
        %3642 = vmatprep.subr.bf16.mxu0 0
        %3643 = vmatpush1.bf16.xpose.msra.mxu0 0
        %3644 = vmatprep.subr.bf16.mxu0 0
        %3645 = vmatpush1.bf16.xpose.msra.mxu0 0
        %3646 = vmatprep.subr.bf16.mxu0 0
        %3647 = vmatpush1.bf16.xpose.msra.mxu0 %v3624
        %3648 = vmatprep.subr.bf16.mxu0 0
        %3649 = vmatpush2.bf16.xpose.msra.mxu0 0
        %3650 = vmatprep.subr.bf16.mxu0 0
        %3651 = vmatpush2.bf16.xpose.msra.mxu0 0
        %3652 = vmatprep.subr.bf16.mxu0 0
        %3653 = vmatpush2.bf16.xpose.msra.mxu0 0
        %3654 = vmatprep.subr.bf16.mxu0 0
        %3655 = vmatpush2.bf16.xpose.msra.mxu0 0
        %3656 = vmatprep.subr.bf16.mxu0 0
        %3657 = vmatpush2.bf16.xpose.msra.mxu0 0
        %3658 = vmatprep.subr.bf16.mxu0 0
        %3659 = vmatpush2.bf16.xpose.msra.mxu0 0
        %3660 = vmatprep.subr.bf16.mxu0 0
        %3661 = vmatpush2.bf16.xpose.msra.mxu0 0
        %3662 = vmatprep.subr.bf16.mxu0 0
        %3663 = vmatpush2.bf16.xpose.msra.mxu0 0
        %3664 = vmatprep.mubr.bf16.mxu0 0
        %3665 = vmatmul.mubr.bf16.gmra.mxu0 %v3616
        %v3666 = vpop.f32.mrf.mxu0
        %v3667 = vadd.f32 0.0, %v3666
        %v3668 = vpop.f32.mrf.mxu0
        %v3669 = vpop.f32.mrf.mxu0
        %v3670 = vadd.f32 0.0, %v3669
        %v3671 = vpop.f32.mrf.mxu0
        %3672 = vdwg.mxu0
        %3673 = vmatprep.subr.bf16.mxu0 0
        %3674 = vmatpush1.bf16.xpose.msra.mxu0 0
        %3675 = vmatprep.subr.bf16.mxu0 0
        %3676 = vmatpush1.bf16.xpose.msra.mxu0 0
        %3677 = vmatprep.subr.bf16.mxu0 0
        %3678 = vmatpush1.bf16.xpose.msra.mxu0 0
        %3679 = vmatprep.subr.bf16.mxu0 0
        %3680 = vmatpush1.bf16.xpose.msra.mxu0 0
        %3681 = vmatprep.subr.bf16.mxu0 0
        %3682 = vmatpush1.bf16.xpose.msra.mxu0 0
        %3683 = vmatprep.subr.bf16.mxu0 0
        %3684 = vmatpush1.bf16.xpose.msra.mxu0 0
        %3685 = vmatprep.subr.bf16.mxu0 0
        %3686 = vmatpush1.bf16.xpose.msra.mxu0 0
        %3687 = vmatprep.subr.bf16.mxu0 0
        %3688 = vmatpush1.bf16.xpose.msra.mxu0 %v3625
        %3689 = vmatprep.subr.bf16.mxu0 0
        %3690 = vmatpush2.bf16.xpose.msra.mxu0 0
        %3691 = vmatprep.subr.bf16.mxu0 0
        %3692 = vmatpush2.bf16.xpose.msra.mxu0 0
        %3693 = vmatprep.subr.bf16.mxu0 0
        %3694 = vmatpush2.bf16.xpose.msra.mxu0 0
        %3695 = vmatprep.subr.bf16.mxu0 0
        %3696 = vmatpush2.bf16.xpose.msra.mxu0 0
        %3697 = vmatprep.subr.bf16.mxu0 0
        %3698 = vmatpush2.bf16.xpose.msra.mxu0 0
        %3699 = vmatprep.subr.bf16.mxu0 0
        %3700 = vmatpush2.bf16.xpose.msra.mxu0 0
        %3701 = vmatprep.subr.bf16.mxu0 0
        %3702 = vmatpush2.bf16.xpose.msra.mxu0 0
        %3703 = vmatprep.subr.bf16.mxu0 0
        %3704 = vmatpush2.bf16.xpose.msra.mxu0 0
        %3705 = vmatprep.mubr.bf16.mxu0 0
        %3706 = vmatmul.mubr.bf16.gmra.mxu0 %v3617
        %v3707 = vpop.f32.mrf.mxu0
        %v3708 = vadd.f32 0.0, %v3707
        %v3709 = vpop.f32.mrf.mxu0
        %v3710 = vpop.f32.mrf.mxu0
        %v3711 = vadd.f32 0.0, %v3710
        %v3712 = vpop.f32.mrf.mxu0
        %3713 = vdwg.mxu0
        %3714 = vmatprep.subr.bf16.mxu0 0
        %3715 = vmatpush1.bf16.xpose.msra.mxu0 0
        %3716 = vmatprep.subr.bf16.mxu0 0
        %3717 = vmatpush1.bf16.xpose.msra.mxu0 0
        %3718 = vmatprep.subr.bf16.mxu0 0
        %3719 = vmatpush1.bf16.xpose.msra.mxu0 0
        %3720 = vmatprep.subr.bf16.mxu0 0
        %3721 = vmatpush1.bf16.xpose.msra.mxu0 0
        %3722 = vmatprep.subr.bf16.mxu0 0
        %3723 = vmatpush1.bf16.xpose.msra.mxu0 0
        %3724 = vmatprep.subr.bf16.mxu0 0
        %3725 = vmatpush1.bf16.xpose.msra.mxu0 0
        %3726 = vmatprep.subr.bf16.mxu0 0
        %3727 = vmatpush1.bf16.xpose.msra.mxu0 0
        %3728 = vmatprep.subr.bf16.mxu0 0
        %3729 = vmatpush1.bf16.xpose.msra.mxu0 %v3626
        %3730 = vmatprep.subr.bf16.mxu0 0
        %3731 = vmatpush2.bf16.xpose.msra.mxu0 0
        %3732 = vmatprep.subr.bf16.mxu0 0
        %3733 = vmatpush2.bf16.xpose.msra.mxu0 0
        %3734 = vmatprep.subr.bf16.mxu0 0
        %3735 = vmatpush2.bf16.xpose.msra.mxu0 0
        %3736 = vmatprep.subr.bf16.mxu0 0
        %3737 = vmatpush2.bf16.xpose.msra.mxu0 0
        %3738 = vmatprep.subr.bf16.mxu0 0
        %3739 = vmatpush2.bf16.xpose.msra.mxu0 0
        %3740 = vmatprep.subr.bf16.mxu0 0
        %3741 = vmatpush2.bf16.xpose.msra.mxu0 0
        %3742 = vmatprep.subr.bf16.mxu0 0
        %3743 = vmatpush2.bf16.xpose.msra.mxu0 0
        %3744 = vmatprep.subr.bf16.mxu0 0
        %3745 = vmatpush2.bf16.xpose.msra.mxu0 0
        %3746 = vmatprep.mubr.bf16.mxu0 0
        %3747 = vmatmul.mubr.bf16.gmra.mxu0 %v3618
        %v3748 = vpop.f32.mrf.mxu0
        %v3749 = vadd.f32 0.0, %v3748
        %v3750 = vpop.f32.mrf.mxu0
        %v3751 = vpop.f32.mrf.mxu0
        %v3752 = vadd.f32 0.0, %v3751
        %v3753 = vpop.f32.mrf.mxu0
        %3754 = vdwg.mxu0
        %3755 = vmatprep.subr.bf16.mxu0 0
        %3756 = vmatpush1.bf16.xpose.msra.mxu0 0
        %3757 = vmatprep.subr.bf16.mxu0 0
        %3758 = vmatpush1.bf16.xpose.msra.mxu0 0
        %3759 = vmatprep.subr.bf16.mxu0 0
        %3760 = vmatpush1.bf16.xpose.msra.mxu0 0
        %3761 = vmatprep.subr.bf16.mxu0 0
        %3762 = vmatpush1.bf16.xpose.msra.mxu0 0
        %3763 = vmatprep.subr.bf16.mxu0 0
        %3764 = vmatpush1.bf16.xpose.msra.mxu0 0
        %3765 = vmatprep.subr.bf16.mxu0 0
        %3766 = vmatpush1.bf16.xpose.msra.mxu0 0
        %3767 = vmatprep.subr.bf16.mxu0 0
        %3768 = vmatpush1.bf16.xpose.msra.mxu0 0
        %3769 = vmatprep.subr.bf16.mxu0 0
        %3770 = vmatpush1.bf16.xpose.msra.mxu0 %v3627
        %3771 = vmatprep.subr.bf16.mxu0 0
        %3772 = vmatpush2.bf16.xpose.msra.mxu0 0
        %3773 = vmatprep.subr.bf16.mxu0 0
        %3774 = vmatpush2.bf16.xpose.msra.mxu0 0
        %3775 = vmatprep.subr.bf16.mxu0 0
        %3776 = vmatpush2.bf16.xpose.msra.mxu0 0
        %3777 = vmatprep.subr.bf16.mxu0 0
        %3778 = vmatpush2.bf16.xpose.msra.mxu0 0
        %3779 = vmatprep.subr.bf16.mxu0 0
        %3780 = vmatpush2.bf16.xpose.msra.mxu0 0
        %3781 = vmatprep.subr.bf16.mxu0 0
        %3782 = vmatpush2.bf16.xpose.msra.mxu0 0
        %3783 = vmatprep.subr.bf16.mxu0 0
        %3784 = vmatpush2.bf16.xpose.msra.mxu0 0
        %3785 = vmatprep.subr.bf16.mxu0 0
        %3786 = vmatpush2.bf16.xpose.msra.mxu0 0
        %3787 = vmatprep.mubr.bf16.mxu0 0
        %3788 = vmatmul.mubr.bf16.gmra.mxu0 %v3619
        %v3789 = vpop.f32.mrf.mxu0
        %v3790 = vadd.f32 0.0, %v3789
        %v3791 = vpop.f32.mrf.mxu0
        %v3792 = vpop.f32.mrf.mxu0
        %v3793 = vadd.f32 0.0, %v3792
        %v3794 = vpop.f32.mrf.mxu0
        %3795 = vdwg.mxu0
        %3796 = vmatprep.subr.bf16.mxu0 0
        %3797 = vmatpush1.bf16.xpose.msra.mxu0 0
        %3798 = vmatprep.subr.bf16.mxu0 0
        %3799 = vmatpush1.bf16.xpose.msra.mxu0 0
        %3800 = vmatprep.subr.bf16.mxu0 0
        %3801 = vmatpush1.bf16.xpose.msra.mxu0 0
        %3802 = vmatprep.subr.bf16.mxu0 0
        %3803 = vmatpush1.bf16.xpose.msra.mxu0 0
        %3804 = vmatprep.subr.bf16.mxu0 0
        %3805 = vmatpush1.bf16.xpose.msra.mxu0 0
        %3806 = vmatprep.subr.bf16.mxu0 0
        %3807 = vmatpush1.bf16.xpose.msra.mxu0 0
        %3808 = vmatprep.subr.bf16.mxu0 0
        %3809 = vmatpush1.bf16.xpose.msra.mxu0 0
        %3810 = vmatprep.subr.bf16.mxu0 0
        %3811 = vmatpush1.bf16.xpose.msra.mxu0 %v3628
        %3812 = vmatprep.subr.bf16.mxu0 0
        %3813 = vmatpush2.bf16.xpose.msra.mxu0 0
        %3814 = vmatprep.subr.bf16.mxu0 0
        %3815 = vmatpush2.bf16.xpose.msra.mxu0 0
        %3816 = vmatprep.subr.bf16.mxu0 0
        %3817 = vmatpush2.bf16.xpose.msra.mxu0 0
        %3818 = vmatprep.subr.bf16.mxu0 0
        %3819 = vmatpush2.bf16.xpose.msra.mxu0 0
        %3820 = vmatprep.subr.bf16.mxu0 0
        %3821 = vmatpush2.bf16.xpose.msra.mxu0 0
        %3822 = vmatprep.subr.bf16.mxu0 0
        %3823 = vmatpush2.bf16.xpose.msra.mxu0 0
        %3824 = vmatprep.subr.bf16.mxu0 0
        %3825 = vmatpush2.bf16.xpose.msra.mxu0 0
        %3826 = vmatprep.subr.bf16.mxu0 0
        %3827 = vmatpush2.bf16.xpose.msra.mxu0 0
        %3828 = vmatprep.mubr.bf16.mxu0 0
        %3829 = vmatmul.mubr.bf16.gmra.mxu0 %v3620
        %v3830 = vpop.f32.mrf.mxu0
        %v3831 = vadd.f32 0.0, %v3830
        %v3832 = vpop.f32.mrf.mxu0
        %v3833 = vpop.f32.mrf.mxu0
        %v3834 = vadd.f32 0.0, %v3833
        %v3835 = vpop.f32.mrf.mxu0
        %3836 = vdwg.mxu0
        %3837 = vmatprep.subr.bf16.mxu0 0
        %3838 = vmatpush1.bf16.xpose.msra.mxu0 0
        %3839 = vmatprep.subr.bf16.mxu0 0
        %3840 = vmatpush1.bf16.xpose.msra.mxu0 0
        %3841 = vmatprep.subr.bf16.mxu0 0
        %3842 = vmatpush1.bf16.xpose.msra.mxu0 0
        %3843 = vmatprep.subr.bf16.mxu0 0
        %3844 = vmatpush1.bf16.xpose.msra.mxu0 0
        %3845 = vmatprep.subr.bf16.mxu0 0
        %3846 = vmatpush1.bf16.xpose.msra.mxu0 0
        %3847 = vmatprep.subr.bf16.mxu0 0
        %3848 = vmatpush1.bf16.xpose.msra.mxu0 0
        %3849 = vmatprep.subr.bf16.mxu0 0
        %3850 = vmatpush1.bf16.xpose.msra.mxu0 0
        %3851 = vmatprep.subr.bf16.mxu0 0
        %3852 = vmatpush1.bf16.xpose.msra.mxu0 %v3629
        %3853 = vmatprep.subr.bf16.mxu0 0
        %3854 = vmatpush2.bf16.xpose.msra.mxu0 0
        %3855 = vmatprep.subr.bf16.mxu0 0
        %3856 = vmatpush2.bf16.xpose.msra.mxu0 0
        %3857 = vmatprep.subr.bf16.mxu0 0
        %3858 = vmatpush2.bf16.xpose.msra.mxu0 0
        %3859 = vmatprep.subr.bf16.mxu0 0
        %3860 = vmatpush2.bf16.xpose.msra.mxu0 0
        %3861 = vmatprep.subr.bf16.mxu0 0
        %3862 = vmatpush2.bf16.xpose.msra.mxu0 0
        %3863 = vmatprep.subr.bf16.mxu0 0
        %3864 = vmatpush2.bf16.xpose.msra.mxu0 0
        %3865 = vmatprep.subr.bf16.mxu0 0
        %3866 = vmatpush2.bf16.xpose.msra.mxu0 0
        %3867 = vmatprep.subr.bf16.mxu0 0
        %3868 = vmatpush2.bf16.xpose.msra.mxu0 0
        %3869 = vmatprep.mubr.bf16.mxu0 0
        %3870 = vmatmul.mubr.bf16.gmra.mxu0 %v3621
        %v3871 = vpop.f32.mrf.mxu0
        %v3872 = vadd.f32 0.0, %v3871
        %v3873 = vpop.f32.mrf.mxu0
        %v3874 = vpop.f32.mrf.mxu0
        %v3875 = vadd.f32 0.0, %v3874
        %v3876 = vpop.f32.mrf.mxu0
        %3877 = vdwg.mxu0
        %3878 = vmatprep.subr.bf16.mxu0 0
        %3879 = vmatpush1.bf16.xpose.msra.mxu0 0
        %3880 = vmatprep.subr.bf16.mxu0 0
        %3881 = vmatpush1.bf16.xpose.msra.mxu0 0
        %3882 = vmatprep.subr.bf16.mxu0 0
        %3883 = vmatpush1.bf16.xpose.msra.mxu0 0
        %3884 = vmatprep.subr.bf16.mxu0 0
        %3885 = vmatpush1.bf16.xpose.msra.mxu0 0
        %3886 = vmatprep.subr.bf16.mxu0 0
        %3887 = vmatpush1.bf16.xpose.msra.mxu0 0
        %3888 = vmatprep.subr.bf16.mxu0 0
        %3889 = vmatpush1.bf16.xpose.msra.mxu0 0
        %3890 = vmatprep.subr.bf16.mxu0 0
        %3891 = vmatpush1.bf16.xpose.msra.mxu0 0
        %3892 = vmatprep.subr.bf16.mxu0 0
        %3893 = vmatpush1.bf16.xpose.msra.mxu0 %v3630
        %3894 = vmatprep.subr.bf16.mxu0 0
        %3895 = vmatpush2.bf16.xpose.msra.mxu0 0
        %3896 = vmatprep.subr.bf16.mxu0 0
        %3897 = vmatpush2.bf16.xpose.msra.mxu0 0
        %3898 = vmatprep.subr.bf16.mxu0 0
        %3899 = vmatpush2.bf16.xpose.msra.mxu0 0
        %3900 = vmatprep.subr.bf16.mxu0 0
        %3901 = vmatpush2.bf16.xpose.msra.mxu0 0
        %3902 = vmatprep.subr.bf16.mxu0 0
        %3903 = vmatpush2.bf16.xpose.msra.mxu0 0
        %3904 = vmatprep.subr.bf16.mxu0 0
        %3905 = vmatpush2.bf16.xpose.msra.mxu0 0
        %3906 = vmatprep.subr.bf16.mxu0 0
        %3907 = vmatpush2.bf16.xpose.msra.mxu0 0
        %3908 = vmatprep.subr.bf16.mxu0 0
        %3909 = vmatpush2.bf16.xpose.msra.mxu0 0
        %3910 = vmatprep.mubr.bf16.mxu0 0
        %3911 = vmatmul.mubr.bf16.gmra.mxu0 %v3622
        %v3912 = vpop.f32.mrf.mxu0
        %v3913 = vadd.f32 0.0, %v3912
        %v3914 = vpop.f32.mrf.mxu0
        %v3915 = vpop.f32.mrf.mxu0
        %v3916 = vadd.f32 0.0, %v3915
        %v3917 = vpop.f32.mrf.mxu0
        %3918 = vdwg.mxu0
        %3919 = vmatprep.subr.bf16.mxu0 0
        %3920 = vmatpush1.bf16.xpose.msra.mxu0 0
        %3921 = vmatprep.subr.bf16.mxu0 0
        %3922 = vmatpush1.bf16.xpose.msra.mxu0 0
        %3923 = vmatprep.subr.bf16.mxu0 0
        %3924 = vmatpush1.bf16.xpose.msra.mxu0 0
        %3925 = vmatprep.subr.bf16.mxu0 0
        %3926 = vmatpush1.bf16.xpose.msra.mxu0 0
        %3927 = vmatprep.subr.bf16.mxu0 0
        %3928 = vmatpush1.bf16.xpose.msra.mxu0 0
        %3929 = vmatprep.subr.bf16.mxu0 0
        %3930 = vmatpush1.bf16.xpose.msra.mxu0 0
        %3931 = vmatprep.subr.bf16.mxu0 0
        %3932 = vmatpush1.bf16.xpose.msra.mxu0 0
        %3933 = vmatprep.subr.bf16.mxu0 0
        %3934 = vmatpush1.bf16.xpose.msra.mxu0 %v3631
        %3935 = vmatprep.subr.bf16.mxu0 0
        %3936 = vmatpush2.bf16.xpose.msra.mxu0 0
        %3937 = vmatprep.subr.bf16.mxu0 0
        %3938 = vmatpush2.bf16.xpose.msra.mxu0 0
        %3939 = vmatprep.subr.bf16.mxu0 0
        %3940 = vmatpush2.bf16.xpose.msra.mxu0 0
        %3941 = vmatprep.subr.bf16.mxu0 0
        %3942 = vmatpush2.bf16.xpose.msra.mxu0 0
        %3943 = vmatprep.subr.bf16.mxu0 0
        %3944 = vmatpush2.bf16.xpose.msra.mxu0 0
        %3945 = vmatprep.subr.bf16.mxu0 0
        %3946 = vmatpush2.bf16.xpose.msra.mxu0 0
        %3947 = vmatprep.subr.bf16.mxu0 0
        %3948 = vmatpush2.bf16.xpose.msra.mxu0 0
        %3949 = vmatprep.subr.bf16.mxu0 0
        %3950 = vmatpush2.bf16.xpose.msra.mxu0 0
        %3951 = vmatprep.mubr.bf16.mxu0 0
        %3952 = vmatmul.mubr.bf16.gmra.mxu0 %v3623
        %v3953 = vpop.f32.mrf.mxu0
        %v3954 = vadd.f32 0.0, %v3953
        %v3955 = vpop.f32.mrf.mxu0
        %v3956 = vpop.f32.mrf.mxu0
        %v3957 = vadd.f32 0.0, %v3956
        %v3958 = vpop.f32.mrf.mxu0
        %3959 = vdwg.mxu0
        %v3960 = vsel %vm3071, %v3667, -inf
        %3961 = vmax.xlane.f32.xlu0 %v3960
        %v3962 = vpop.xlane.xlu0 %3961
        %v3963 = vsel %vm3071, %v3670, -inf
        %3964 = vmax.xlane.f32.xlu0 %v3963
        %v3965 = vpop.xlane.xlu0 %3964
        %v3966 = vsel %vm3071, %v3708, -inf
        %3967 = vmax.xlane.f32.xlu0 %v3966
        %v3968 = vpop.xlane.xlu0 %3967
        %v3969 = vsel %vm3071, %v3711, -inf
        %3970 = vmax.xlane.f32.xlu0 %v3969
        %v3971 = vpop.xlane.xlu0 %3970
        %v3972 = vsel %vm3071, %v3749, -inf
        %3973 = vmax.xlane.f32.xlu0 %v3972
        %v3974 = vpop.xlane.xlu0 %3973
        %v3975 = vsel %vm3071, %v3752, -inf
        %3976 = vmax.xlane.f32.xlu0 %v3975
        %v3977 = vpop.xlane.xlu0 %3976
        %v3978 = vsel %vm3071, %v3790, -inf
        %3979 = vmax.xlane.f32.xlu0 %v3978
        %v3980 = vpop.xlane.xlu0 %3979
        %v3981 = vsel %vm3071, %v3793, -inf
        %3982 = vmax.xlane.f32.xlu0 %v3981
        %v3983 = vpop.xlane.xlu0 %3982
        %v3984 = vsel %vm3071, %v3831, -inf
        %3985 = vmax.xlane.f32.xlu0 %v3984
        %v3986 = vpop.xlane.xlu0 %3985
        %v3987 = vsel %vm3071, %v3834, -inf
        %3988 = vmax.xlane.f32.xlu0 %v3987
        %v3989 = vpop.xlane.xlu0 %3988
        %v3990 = vsel %vm3071, %v3872, -inf
        %3991 = vmax.xlane.f32.xlu0 %v3990
        %v3992 = vpop.xlane.xlu0 %3991
        %v3993 = vsel %vm3071, %v3875, -inf
        %3994 = vmax.xlane.f32.xlu0 %v3993
        %v3995 = vpop.xlane.xlu0 %3994
        %v3996 = vsel %vm3071, %v3913, -inf
        %3997 = vmax.xlane.f32.xlu0 %v3996
        %v3998 = vpop.xlane.xlu0 %3997
        %v3999 = vsel %vm3071, %v3916, -inf
        %4000 = vmax.xlane.f32.xlu0 %v3999
        %v4001 = vpop.xlane.xlu0 %4000
        %v4002 = vsel %vm3071, %v3954, -inf
        %4003 = vmax.xlane.f32.xlu0 %v4002
        %v4004 = vpop.xlane.xlu0 %4003
        %v4005 = vsel %vm3071, %v3957, -inf
        %4006 = vmax.xlane.f32.xlu0 %v4005
        %v4007 = vpop.xlane.xlu0 %4006
        %v4008 = vsub.f32 %v3667, %v3962
        %v4009 = vsub.f32 %v3670, %v3965
        %v4010 = vsub.f32 %v3708, %v3968
        %v4011 = vsub.f32 %v3711, %v3971
        %v4012 = vsub.f32 %v3749, %v3974
        %v4013 = vsub.f32 %v3752, %v3977
        %v4014 = vsub.f32 %v3790, %v3980
        %v4015 = vsub.f32 %v3793, %v3983
        %v4016 = vsub.f32 %v3831, %v3986
        %v4017 = vsub.f32 %v3834, %v3989
        %v4018 = vsub.f32 %v3872, %v3992
        %v4019 = vsub.f32 %v3875, %v3995
        %v4020 = vsub.f32 %v3913, %v3998
        %v4021 = vsub.f32 %v3916, %v4001
        %v4022 = vsub.f32 %v3954, %v4004
        %v4023 = vsub.f32 %v3957, %v4007
        %v4024 = vmul.f32 %v4008, 1.442695
        %v4025 = vpow.pop %v4024
        %v4026 = vmul.f32 %v4009, 1.442695
        %v4027 = vpow.pop %v4026
        %v4028 = vmul.f32 %v4010, 1.442695
        %v4029 = vpow.pop %v4028
        %v4030 = vmul.f32 %v4011, 1.442695
        %v4031 = vpow.pop %v4030
        %v4032 = vmul.f32 %v4012, 1.442695
        %v4033 = vpow.pop %v4032
        %v4034 = vmul.f32 %v4013, 1.442695
        %v4035 = vpow.pop %v4034
        %v4036 = vmul.f32 %v4014, 1.442695
        %v4037 = vpow.pop %v4036
        %v4038 = vmul.f32 %v4015, 1.442695
        %v4039 = vpow.pop %v4038
        %v4040 = vmul.f32 %v4016, 1.442695
        %v4041 = vpow.pop %v4040
        %v4042 = vmul.f32 %v4017, 1.442695
        %v4043 = vpow.pop %v4042
        %v4044 = vmul.f32 %v4018, 1.442695
        %v4045 = vpow.pop %v4044
        %v4046 = vmul.f32 %v4019, 1.442695
        %v4047 = vpow.pop %v4046
        %v4048 = vmul.f32 %v4020, 1.442695
        %v4049 = vpow.pop %v4048
        %v4050 = vmul.f32 %v4021, 1.442695
        %v4051 = vpow.pop %v4050
        %v4052 = vmul.f32 %v4022, 1.442695
        %v4053 = vpow.pop %v4052
        %v4054 = vmul.f32 %v4023, 1.442695
        %v4055 = vpow.pop %v4054
        %v4056 = vsel %vm3071, %v4025, 0.0
        %4057 = vadd.xlane.f32.xlu0 %v4056
        %v4058 = vpop.xlane.xlu0 %4057
        %v4059 = vsel %vm3071, %v4027, 0.0
        %4060 = vadd.xlane.f32.xlu0 %v4059
        %v4061 = vpop.xlane.xlu0 %4060
        %v4062 = vsel %vm3071, %v4029, 0.0
        %4063 = vadd.xlane.f32.xlu0 %v4062
        %v4064 = vpop.xlane.xlu0 %4063
        %v4065 = vsel %vm3071, %v4031, 0.0
        %4066 = vadd.xlane.f32.xlu0 %v4065
        %v4067 = vpop.xlane.xlu0 %4066
        %v4068 = vsel %vm3071, %v4033, 0.0
        %4069 = vadd.xlane.f32.xlu0 %v4068
        %v4070 = vpop.xlane.xlu0 %4069
        %v4071 = vsel %vm3071, %v4035, 0.0
        %4072 = vadd.xlane.f32.xlu0 %v4071
        %v4073 = vpop.xlane.xlu0 %4072
        %v4074 = vsel %vm3071, %v4037, 0.0
        %4075 = vadd.xlane.f32.xlu0 %v4074
        %v4076 = vpop.xlane.xlu0 %4075
        %v4077 = vsel %vm3071, %v4039, 0.0
        %4078 = vadd.xlane.f32.xlu0 %v4077
        %v4079 = vpop.xlane.xlu0 %4078
        %v4080 = vsel %vm3071, %v4041, 0.0
        %4081 = vadd.xlane.f32.xlu0 %v4080
        %v4082 = vpop.xlane.xlu0 %4081
        %v4083 = vsel %vm3071, %v4043, 0.0
        %4084 = vadd.xlane.f32.xlu0 %v4083
        %v4085 = vpop.xlane.xlu0 %4084
        %v4086 = vsel %vm3071, %v4045, 0.0
        %4087 = vadd.xlane.f32.xlu0 %v4086
        %v4088 = vpop.xlane.xlu0 %4087
        %v4089 = vsel %vm3071, %v4047, 0.0
        %4090 = vadd.xlane.f32.xlu0 %v4089
        %v4091 = vpop.xlane.xlu0 %4090
        %v4092 = vsel %vm3071, %v4049, 0.0
        %4093 = vadd.xlane.f32.xlu0 %v4092
        %v4094 = vpop.xlane.xlu0 %4093
        %v4095 = vsel %vm3071, %v4051, 0.0
        %4096 = vadd.xlane.f32.xlu0 %v4095
        %v4097 = vpop.xlane.xlu0 %4096
        %v4098 = vsel %vm3071, %v4053, 0.0
        %4099 = vadd.xlane.f32.xlu0 %v4098
        %v4100 = vpop.xlane.xlu0 %4099
        %v4101 = vsel %vm3071, %v4055, 0.0
        %4102 = vadd.xlane.f32.xlu0 %v4101
        %v4103 = vpop.xlane.xlu0 %4102
        %v4104 = vrcp.pop %v4058
        %v4105 = vrcp.pop %v4061
        %v4106 = vrcp.pop %v4064
        %v4107 = vrcp.pop %v4067
        %v4108 = vrcp.pop %v4070
        %v4109 = vrcp.pop %v4073
        %v4110 = vrcp.pop %v4076
        %v4111 = vrcp.pop %v4079
        %v4112 = vrcp.pop %v4082
        %v4113 = vrcp.pop %v4085
        %v4114 = vrcp.pop %v4088
        %v4115 = vrcp.pop %v4091
        %v4116 = vrcp.pop %v4094
        %v4117 = vrcp.pop %v4097
        %v4118 = vrcp.pop %v4100
        %v4119 = vrcp.pop %v4103
        %v4120 = vmul.f32 %v4025, %v4104
        %v4121 = vmul.f32 %v4027, %v4105
        %v4122 = vmul.f32 %v4029, %v4106
        %v4123 = vmul.f32 %v4031, %v4107
        %v4124 = vmul.f32 %v4033, %v4108
        %v4125 = vmul.f32 %v4035, %v4109
        %v4126 = vmul.f32 %v4037, %v4110
        %v4127 = vmul.f32 %v4039, %v4111
        %v4128 = vmul.f32 %v4041, %v4112
        %v4129 = vmul.f32 %v4043, %v4113
        %v4130 = vmul.f32 %v4045, %v4114
        %v4131 = vmul.f32 %v4047, %v4115
        %v4132 = vmul.f32 %v4049, %v4116
        %v4133 = vmul.f32 %v4051, %v4117
        %v4134 = vmul.f32 %v4053, %v4118
        %v4135 = vmul.f32 %v4055, %v4119
        %v4136 = vpack.c.bf16 %v4121, %v4120
        %v4137 = vpack.c.bf16 %v4123, %v4122
        %v4138 = vpack.c.bf16 %v4125, %v4124
        %v4139 = vpack.c.bf16 %v4127, %v4126
        %v4140 = vpack.c.bf16 %v4129, %v4128
        %v4141 = vpack.c.bf16 %v4131, %v4130
        %v4142 = vpack.c.bf16 %v4133, %v4132
        %v4143 = vpack.c.bf16 %v4135, %v4134
        %v4144 = vpack.c.bf16 %v2060, %v2057
        %v4145 = vpack.c.bf16 %v2068, %v2065
        %v4146 = vpack.c.bf16 %v2076, %v2073
        %v4147 = vpack.c.bf16 %v2084, %v2081
        %v4148 = vpack.c.bf16 %v2092, %v2089
        %v4149 = vpack.c.bf16 %v2100, %v2097
        %v4150 = vpack.c.bf16 %v2108, %v2105
        %v4151 = vpack.c.bf16 %v2116, %v2113
        %v4153 = vsel %vm3071, %v4136, 0
        %4155 = vmatprep.subr.bf16.mxu0 0
        %4156 = vmatpush1.bf16.msra.mxu0 0
        %4157 = vmatprep.subr.bf16.mxu0 0
        %4158 = vmatpush1.bf16.msra.mxu0 0
        %4159 = vmatprep.subr.bf16.mxu0 0
        %4160 = vmatpush1.bf16.msra.mxu0 0
        %4161 = vmatprep.subr.bf16.mxu0 0
        %4162 = vmatpush1.bf16.msra.mxu0 0
        %4163 = vmatprep.subr.bf16.mxu0 0
        %4164 = vmatpush1.bf16.msra.mxu0 0
        %4165 = vmatprep.subr.bf16.mxu0 0
        %4166 = vmatpush1.bf16.msra.mxu0 0
        %4167 = vmatprep.subr.bf16.mxu0 0
        %4168 = vmatpush1.bf16.msra.mxu0 0
        %4169 = vmatprep.subr.bf16.mxu0 0
        %4170 = vmatpush1.bf16.msra.mxu0 %v4144
        %4171 = vmatprep.subr.bf16.mxu0 0
        %4172 = vmatpush2.bf16.msra.mxu0 0
        %4173 = vmatprep.subr.bf16.mxu0 0
        %4174 = vmatpush2.bf16.msra.mxu0 0
        %4175 = vmatprep.subr.bf16.mxu0 0
        %4176 = vmatpush2.bf16.msra.mxu0 0
        %4177 = vmatprep.subr.bf16.mxu0 0
        %4178 = vmatpush2.bf16.msra.mxu0 0
        %4179 = vmatprep.subr.bf16.mxu0 0
        %4180 = vmatpush2.bf16.msra.mxu0 0
        %4181 = vmatprep.subr.bf16.mxu0 0
        %4182 = vmatpush2.bf16.msra.mxu0 0
        %4183 = vmatprep.subr.bf16.mxu0 0
        %4184 = vmatpush2.bf16.msra.mxu0 0
        %4185 = vmatprep.subr.bf16.mxu0 0
        %4186 = vmatpush2.bf16.msra.mxu0 0
        %4187 = vmatprep.mubr.bf16.mxu0 0
        %4188 = vmatmul.mubr.bf16.gmra.mxu0 %v4153
        %v4189 = vpop.f32.mrf.mxu0
        %v4190 = vadd.f32 0.0, %v4189
        %v4191 = vpop.f32.mrf.mxu0
        %v4192 = vpop.f32.mrf.mxu0
        %v4193 = vadd.f32 0.0, %v4192
        %v4194 = vpop.f32.mrf.mxu0
        %4195 = vdwg.mxu0
        %v4197 = vsel %vm3071, %v4137, 0
        %4199 = vmatprep.subr.bf16.mxu0 0
        %4200 = vmatpush1.bf16.msra.mxu0 0
        %4201 = vmatprep.subr.bf16.mxu0 0
        %4202 = vmatpush1.bf16.msra.mxu0 0
        %4203 = vmatprep.subr.bf16.mxu0 0
        %4204 = vmatpush1.bf16.msra.mxu0 0
        %4205 = vmatprep.subr.bf16.mxu0 0
        %4206 = vmatpush1.bf16.msra.mxu0 0
        %4207 = vmatprep.subr.bf16.mxu0 0
        %4208 = vmatpush1.bf16.msra.mxu0 0
        %4209 = vmatprep.subr.bf16.mxu0 0
        %4210 = vmatpush1.bf16.msra.mxu0 0
        %4211 = vmatprep.subr.bf16.mxu0 0
        %4212 = vmatpush1.bf16.msra.mxu0 0
        %4213 = vmatprep.subr.bf16.mxu0 0
        %4214 = vmatpush1.bf16.msra.mxu0 %v4145
        %4215 = vmatprep.subr.bf16.mxu0 0
        %4216 = vmatpush2.bf16.msra.mxu0 0
        %4217 = vmatprep.subr.bf16.mxu0 0
        %4218 = vmatpush2.bf16.msra.mxu0 0
        %4219 = vmatprep.subr.bf16.mxu0 0
        %4220 = vmatpush2.bf16.msra.mxu0 0
        %4221 = vmatprep.subr.bf16.mxu0 0
        %4222 = vmatpush2.bf16.msra.mxu0 0
        %4223 = vmatprep.subr.bf16.mxu0 0
        %4224 = vmatpush2.bf16.msra.mxu0 0
        %4225 = vmatprep.subr.bf16.mxu0 0
        %4226 = vmatpush2.bf16.msra.mxu0 0
        %4227 = vmatprep.subr.bf16.mxu0 0
        %4228 = vmatpush2.bf16.msra.mxu0 0
        %4229 = vmatprep.subr.bf16.mxu0 0
        %4230 = vmatpush2.bf16.msra.mxu0 0
        %4231 = vmatprep.mubr.bf16.mxu0 0
        %4232 = vmatmul.mubr.bf16.gmra.mxu0 %v4197
        %v4233 = vpop.f32.mrf.mxu0
        %v4234 = vadd.f32 0.0, %v4233
        %v4235 = vpop.f32.mrf.mxu0
        %v4236 = vpop.f32.mrf.mxu0
        %v4237 = vadd.f32 0.0, %v4236
        %v4238 = vpop.f32.mrf.mxu0
        %4239 = vdwg.mxu0
        %v4241 = vsel %vm3071, %v4138, 0
        %4243 = vmatprep.subr.bf16.mxu0 0
        %4244 = vmatpush1.bf16.msra.mxu0 0
        %4245 = vmatprep.subr.bf16.mxu0 0
        %4246 = vmatpush1.bf16.msra.mxu0 0
        %4247 = vmatprep.subr.bf16.mxu0 0
        %4248 = vmatpush1.bf16.msra.mxu0 0
        %4249 = vmatprep.subr.bf16.mxu0 0
        %4250 = vmatpush1.bf16.msra.mxu0 0
        %4251 = vmatprep.subr.bf16.mxu0 0
        %4252 = vmatpush1.bf16.msra.mxu0 0
        %4253 = vmatprep.subr.bf16.mxu0 0
        %4254 = vmatpush1.bf16.msra.mxu0 0
        %4255 = vmatprep.subr.bf16.mxu0 0
        %4256 = vmatpush1.bf16.msra.mxu0 0
        %4257 = vmatprep.subr.bf16.mxu0 0
        %4258 = vmatpush1.bf16.msra.mxu0 %v4146
        %4259 = vmatprep.subr.bf16.mxu0 0
        %4260 = vmatpush2.bf16.msra.mxu0 0
        %4261 = vmatprep.subr.bf16.mxu0 0
        %4262 = vmatpush2.bf16.msra.mxu0 0
        %4263 = vmatprep.subr.bf16.mxu0 0
        %4264 = vmatpush2.bf16.msra.mxu0 0
        %4265 = vmatprep.subr.bf16.mxu0 0
        %4266 = vmatpush2.bf16.msra.mxu0 0
        %4267 = vmatprep.subr.bf16.mxu0 0
        %4268 = vmatpush2.bf16.msra.mxu0 0
        %4269 = vmatprep.subr.bf16.mxu0 0
        %4270 = vmatpush2.bf16.msra.mxu0 0
        %4271 = vmatprep.subr.bf16.mxu0 0
        %4272 = vmatpush2.bf16.msra.mxu0 0
        %4273 = vmatprep.subr.bf16.mxu0 0
        %4274 = vmatpush2.bf16.msra.mxu0 0
        %4275 = vmatprep.mubr.bf16.mxu0 0
        %4276 = vmatmul.mubr.bf16.gmra.mxu0 %v4241
        %v4277 = vpop.f32.mrf.mxu0
        %v4278 = vadd.f32 0.0, %v4277
        %v4279 = vpop.f32.mrf.mxu0
        %v4280 = vpop.f32.mrf.mxu0
        %v4281 = vadd.f32 0.0, %v4280
        %v4282 = vpop.f32.mrf.mxu0
        %4283 = vdwg.mxu0
        %v4285 = vsel %vm3071, %v4139, 0
        %4287 = vmatprep.subr.bf16.mxu0 0
        %4288 = vmatpush1.bf16.msra.mxu0 0
        %4289 = vmatprep.subr.bf16.mxu0 0
        %4290 = vmatpush1.bf16.msra.mxu0 0
        %4291 = vmatprep.subr.bf16.mxu0 0
        %4292 = vmatpush1.bf16.msra.mxu0 0
        %4293 = vmatprep.subr.bf16.mxu0 0
        %4294 = vmatpush1.bf16.msra.mxu0 0
        %4295 = vmatprep.subr.bf16.mxu0 0
        %4296 = vmatpush1.bf16.msra.mxu0 0
        %4297 = vmatprep.subr.bf16.mxu0 0
        %4298 = vmatpush1.bf16.msra.mxu0 0
        %4299 = vmatprep.subr.bf16.mxu0 0
        %4300 = vmatpush1.bf16.msra.mxu0 0
        %4301 = vmatprep.subr.bf16.mxu0 0
        %4302 = vmatpush1.bf16.msra.mxu0 %v4147
        %4303 = vmatprep.subr.bf16.mxu0 0
        %4304 = vmatpush2.bf16.msra.mxu0 0
        %4305 = vmatprep.subr.bf16.mxu0 0
        %4306 = vmatpush2.bf16.msra.mxu0 0
        %4307 = vmatprep.subr.bf16.mxu0 0
        %4308 = vmatpush2.bf16.msra.mxu0 0
        %4309 = vmatprep.subr.bf16.mxu0 0
        %4310 = vmatpush2.bf16.msra.mxu0 0
        %4311 = vmatprep.subr.bf16.mxu0 0
        %4312 = vmatpush2.bf16.msra.mxu0 0
        %4313 = vmatprep.subr.bf16.mxu0 0
        %4314 = vmatpush2.bf16.msra.mxu0 0
        %4315 = vmatprep.subr.bf16.mxu0 0
        %4316 = vmatpush2.bf16.msra.mxu0 0
        %4317 = vmatprep.subr.bf16.mxu0 0
        %4318 = vmatpush2.bf16.msra.mxu0 0
        %4319 = vmatprep.mubr.bf16.mxu0 0
        %4320 = vmatmul.mubr.bf16.gmra.mxu0 %v4285
        %v4321 = vpop.f32.mrf.mxu0
        %v4322 = vadd.f32 0.0, %v4321
        %v4323 = vpop.f32.mrf.mxu0
        %v4324 = vpop.f32.mrf.mxu0
        %v4325 = vadd.f32 0.0, %v4324
        %v4326 = vpop.f32.mrf.mxu0
        %4327 = vdwg.mxu0
        %v4329 = vsel %vm3071, %v4140, 0
        %4331 = vmatprep.subr.bf16.mxu0 0
        %4332 = vmatpush1.bf16.msra.mxu0 0
        %4333 = vmatprep.subr.bf16.mxu0 0
        %4334 = vmatpush1.bf16.msra.mxu0 0
        %4335 = vmatprep.subr.bf16.mxu0 0
        %4336 = vmatpush1.bf16.msra.mxu0 0
        %4337 = vmatprep.subr.bf16.mxu0 0
        %4338 = vmatpush1.bf16.msra.mxu0 0
        %4339 = vmatprep.subr.bf16.mxu0 0
        %4340 = vmatpush1.bf16.msra.mxu0 0
        %4341 = vmatprep.subr.bf16.mxu0 0
        %4342 = vmatpush1.bf16.msra.mxu0 0
        %4343 = vmatprep.subr.bf16.mxu0 0
        %4344 = vmatpush1.bf16.msra.mxu0 0
        %4345 = vmatprep.subr.bf16.mxu0 0
        %4346 = vmatpush1.bf16.msra.mxu0 %v4148
        %4347 = vmatprep.subr.bf16.mxu0 0
        %4348 = vmatpush2.bf16.msra.mxu0 0
        %4349 = vmatprep.subr.bf16.mxu0 0
        %4350 = vmatpush2.bf16.msra.mxu0 0
        %4351 = vmatprep.subr.bf16.mxu0 0
        %4352 = vmatpush2.bf16.msra.mxu0 0
        %4353 = vmatprep.subr.bf16.mxu0 0
        %4354 = vmatpush2.bf16.msra.mxu0 0
        %4355 = vmatprep.subr.bf16.mxu0 0
        %4356 = vmatpush2.bf16.msra.mxu0 0
        %4357 = vmatprep.subr.bf16.mxu0 0
        %4358 = vmatpush2.bf16.msra.mxu0 0
        %4359 = vmatprep.subr.bf16.mxu0 0
        %4360 = vmatpush2.bf16.msra.mxu0 0
        %4361 = vmatprep.subr.bf16.mxu0 0
        %4362 = vmatpush2.bf16.msra.mxu0 0
        %4363 = vmatprep.mubr.bf16.mxu0 0
        %4364 = vmatmul.mubr.bf16.gmra.mxu0 %v4329
        %v4365 = vpop.f32.mrf.mxu0
        %v4366 = vadd.f32 0.0, %v4365
        %v4367 = vpop.f32.mrf.mxu0
        %v4368 = vpop.f32.mrf.mxu0
        %v4369 = vadd.f32 0.0, %v4368
        %v4370 = vpop.f32.mrf.mxu0
        %4371 = vdwg.mxu0
        %v4373 = vsel %vm3071, %v4141, 0
        %4375 = vmatprep.subr.bf16.mxu0 0
        %4376 = vmatpush1.bf16.msra.mxu0 0
        %4377 = vmatprep.subr.bf16.mxu0 0
        %4378 = vmatpush1.bf16.msra.mxu0 0
        %4379 = vmatprep.subr.bf16.mxu0 0
        %4380 = vmatpush1.bf16.msra.mxu0 0
        %4381 = vmatprep.subr.bf16.mxu0 0
        %4382 = vmatpush1.bf16.msra.mxu0 0
        %4383 = vmatprep.subr.bf16.mxu0 0
        %4384 = vmatpush1.bf16.msra.mxu0 0
        %4385 = vmatprep.subr.bf16.mxu0 0
        %4386 = vmatpush1.bf16.msra.mxu0 0
        %4387 = vmatprep.subr.bf16.mxu0 0
        %4388 = vmatpush1.bf16.msra.mxu0 0
        %4389 = vmatprep.subr.bf16.mxu0 0
        %4390 = vmatpush1.bf16.msra.mxu0 %v4149
        %4391 = vmatprep.subr.bf16.mxu0 0
        %4392 = vmatpush2.bf16.msra.mxu0 0
        %4393 = vmatprep.subr.bf16.mxu0 0
        %4394 = vmatpush2.bf16.msra.mxu0 0
        %4395 = vmatprep.subr.bf16.mxu0 0
        %4396 = vmatpush2.bf16.msra.mxu0 0
        %4397 = vmatprep.subr.bf16.mxu0 0
        %4398 = vmatpush2.bf16.msra.mxu0 0
        %4399 = vmatprep.subr.bf16.mxu0 0
        %4400 = vmatpush2.bf16.msra.mxu0 0
        %4401 = vmatprep.subr.bf16.mxu0 0
        %4402 = vmatpush2.bf16.msra.mxu0 0
        %4403 = vmatprep.subr.bf16.mxu0 0
        %4404 = vmatpush2.bf16.msra.mxu0 0
        %4405 = vmatprep.subr.bf16.mxu0 0
        %4406 = vmatpush2.bf16.msra.mxu0 0
        %4407 = vmatprep.mubr.bf16.mxu0 0
        %4408 = vmatmul.mubr.bf16.gmra.mxu0 %v4373
        %v4409 = vpop.f32.mrf.mxu0
        %v4410 = vadd.f32 0.0, %v4409
        %v4411 = vpop.f32.mrf.mxu0
        %v4412 = vpop.f32.mrf.mxu0
        %v4413 = vadd.f32 0.0, %v4412
        %v4414 = vpop.f32.mrf.mxu0
        %4415 = vdwg.mxu0
        %v4417 = vsel %vm3071, %v4142, 0
        %4419 = vmatprep.subr.bf16.mxu0 0
        %4420 = vmatpush1.bf16.msra.mxu0 0
        %4421 = vmatprep.subr.bf16.mxu0 0
        %4422 = vmatpush1.bf16.msra.mxu0 0
        %4423 = vmatprep.subr.bf16.mxu0 0
        %4424 = vmatpush1.bf16.msra.mxu0 0
        %4425 = vmatprep.subr.bf16.mxu0 0
        %4426 = vmatpush1.bf16.msra.mxu0 0
        %4427 = vmatprep.subr.bf16.mxu0 0
        %4428 = vmatpush1.bf16.msra.mxu0 0
        %4429 = vmatprep.subr.bf16.mxu0 0
        %4430 = vmatpush1.bf16.msra.mxu0 0
        %4431 = vmatprep.subr.bf16.mxu0 0
        %4432 = vmatpush1.bf16.msra.mxu0 0
        %4433 = vmatprep.subr.bf16.mxu0 0
        %4434 = vmatpush1.bf16.msra.mxu0 %v4150
        %4435 = vmatprep.subr.bf16.mxu0 0
        %4436 = vmatpush2.bf16.msra.mxu0 0
        %4437 = vmatprep.subr.bf16.mxu0 0
        %4438 = vmatpush2.bf16.msra.mxu0 0
        %4439 = vmatprep.subr.bf16.mxu0 0
        %4440 = vmatpush2.bf16.msra.mxu0 0
        %4441 = vmatprep.subr.bf16.mxu0 0
        %4442 = vmatpush2.bf16.msra.mxu0 0
        %4443 = vmatprep.subr.bf16.mxu0 0
        %4444 = vmatpush2.bf16.msra.mxu0 0
        %4445 = vmatprep.subr.bf16.mxu0 0
        %4446 = vmatpush2.bf16.msra.mxu0 0
        %4447 = vmatprep.subr.bf16.mxu0 0
        %4448 = vmatpush2.bf16.msra.mxu0 0
        %4449 = vmatprep.subr.bf16.mxu0 0
        %4450 = vmatpush2.bf16.msra.mxu0 0
        %4451 = vmatprep.mubr.bf16.mxu0 0
        %4452 = vmatmul.mubr.bf16.gmra.mxu0 %v4417
        %v4453 = vpop.f32.mrf.mxu0
        %v4454 = vadd.f32 0.0, %v4453
        %v4455 = vpop.f32.mrf.mxu0
        %v4456 = vpop.f32.mrf.mxu0
        %v4457 = vadd.f32 0.0, %v4456
        %v4458 = vpop.f32.mrf.mxu0
        %4459 = vdwg.mxu0
        %v4461 = vsel %vm3071, %v4143, 0
        %4463 = vmatprep.subr.bf16.mxu0 0
        %4464 = vmatpush1.bf16.msra.mxu0 0
        %4465 = vmatprep.subr.bf16.mxu0 0
        %4466 = vmatpush1.bf16.msra.mxu0 0
        %4467 = vmatprep.subr.bf16.mxu0 0
        %4468 = vmatpush1.bf16.msra.mxu0 0
        %4469 = vmatprep.subr.bf16.mxu0 0
        %4470 = vmatpush1.bf16.msra.mxu0 0
        %4471 = vmatprep.subr.bf16.mxu0 0
        %4472 = vmatpush1.bf16.msra.mxu0 0
        %4473 = vmatprep.subr.bf16.mxu0 0
        %4474 = vmatpush1.bf16.msra.mxu0 0
        %4475 = vmatprep.subr.bf16.mxu0 0
        %4476 = vmatpush1.bf16.msra.mxu0 0
        %4477 = vmatprep.subr.bf16.mxu0 0
        %4478 = vmatpush1.bf16.msra.mxu0 %v4151
        %4479 = vmatprep.subr.bf16.mxu0 0
        %4480 = vmatpush2.bf16.msra.mxu0 0
        %4481 = vmatprep.subr.bf16.mxu0 0
        %4482 = vmatpush2.bf16.msra.mxu0 0
        %4483 = vmatprep.subr.bf16.mxu0 0
        %4484 = vmatpush2.bf16.msra.mxu0 0
        %4485 = vmatprep.subr.bf16.mxu0 0
        %4486 = vmatpush2.bf16.msra.mxu0 0
        %4487 = vmatprep.subr.bf16.mxu0 0
        %4488 = vmatpush2.bf16.msra.mxu0 0
        %4489 = vmatprep.subr.bf16.mxu0 0
        %4490 = vmatpush2.bf16.msra.mxu0 0
        %4491 = vmatprep.subr.bf16.mxu0 0
        %4492 = vmatpush2.bf16.msra.mxu0 0
        %4493 = vmatprep.subr.bf16.mxu0 0
        %4494 = vmatpush2.bf16.msra.mxu0 0
        %4495 = vmatprep.mubr.bf16.mxu0 0
        %4496 = vmatmul.mubr.bf16.gmra.mxu0 %v4461
        %v4497 = vpop.f32.mrf.mxu0
        %v4498 = vadd.f32 0.0, %v4497
        %v4499 = vpop.f32.mrf.mxu0
        %v4500 = vpop.f32.mrf.mxu0
        %v4501 = vadd.f32 0.0, %v4500
        %v4502 = vpop.f32.mrf.mxu0
        %4503 = vdwg.mxu0
        %v4504 = vld [vmem:[%s20] sm:$0x1]
        %v4505 = vld [vmem:[%s21] sm:$0x1]
        %v4507 = vlaneseq
        %v4508 = vshrl.u32 %v4507, 7
        %v4509 = vsub.s32 0, %v4508
        %v4510 = vrot.slane %v4504, %v4509
        %v4512 = vmul.f32 %v3302, %v4510
        %v4513 = vmul.f32 %v3305, %v4510
        %v4514 = vmul.f32 %v3346, %v4510
        %v4515 = vmul.f32 %v3349, %v4510
        %v4516 = vmul.f32 %v3390, %v4510
        %v4517 = vmul.f32 %v3393, %v4510
        %v4518 = vmul.f32 %v3434, %v4510
        %v4519 = vmul.f32 %v3437, %v4510
        %v4520 = vmul.f32 %v3478, %v4510
        %v4521 = vmul.f32 %v3481, %v4510
        %v4522 = vmul.f32 %v3522, %v4510
        %v4523 = vmul.f32 %v3525, %v4510
        %v4524 = vmul.f32 %v3566, %v4510
        %v4525 = vmul.f32 %v3569, %v4510
        %v4526 = vmul.f32 %v3610, %v4510
        %v4527 = vmul.f32 %v3613, %v4510
        %v4528 = vadd.f32 %v987, %v4512
        %v4529 = vadd.f32 %v988, %v4513
        %v4530 = vadd.f32 %v989, %v4514
        %v4531 = vadd.f32 %v990, %v4515
        %v4532 = vadd.f32 %v991, %v4516
        %v4533 = vadd.f32 %v992, %v4517
        %v4534 = vadd.f32 %v993, %v4518
        %v4535 = vadd.f32 %v994, %v4519
        %v4536 = vadd.f32 %v995, %v4520
        %v4537 = vadd.f32 %v996, %v4521
        %v4538 = vadd.f32 %v997, %v4522
        %v4539 = vadd.f32 %v998, %v4523
        %v4540 = vadd.f32 %v999, %v4524
        %v4541 = vadd.f32 %v1000, %v4525
        %v4542 = vadd.f32 %v1001, %v4526
        %v4543 = vadd.f32 %v1002, %v4527
        %4544 = vst [vmem:[%s972] sm:$0xff] %v4528
        %4545 = vst [vmem:[%s972 + $0x8] sm:$0xff] %v4529
        %4546 = vst [vmem:[%s972 + $0x10] sm:$0xff] %v4530
        %4547 = vst [vmem:[%s972 + $0x18] sm:$0xff] %v4531
        %4548 = vst [vmem:[%s972 + $0x20] sm:$0xff] %v4532
        %4549 = vst [vmem:[%s972 + $0x28] sm:$0xff] %v4533
        %4550 = vst [vmem:[%s972 + $0x30] sm:$0xff] %v4534
        %4551 = vst [vmem:[%s972 + $0x38] sm:$0xff] %v4535
        %4552 = vst [vmem:[%s972 + $0x40] sm:$0xff] %v4536
        %4553 = vst [vmem:[%s972 + $0x48] sm:$0xff] %v4537
        %4554 = vst [vmem:[%s972 + $0x50] sm:$0xff] %v4538
        %4555 = vst [vmem:[%s972 + $0x58] sm:$0xff] %v4539
        %4556 = vst [vmem:[%s972 + $0x60] sm:$0xff] %v4540
        %4557 = vst [vmem:[%s972 + $0x68] sm:$0xff] %v4541
        %4558 = vst [vmem:[%s972 + $0x70] sm:$0xff] %v4542
        %4559 = vst [vmem:[%s972 + $0x78] sm:$0xff] %v4543
        %v4561 = vlaneseq
        %v4562 = vshrl.u32 %v4561, 7
        %v4563 = vsub.s32 0, %v4562
        %v4564 = vrot.slane %v4505, %v4563
        %v4566 = vmul.f32 %v4190, %v4564
        %v4567 = vmul.f32 %v4193, %v4564
        %v4568 = vmul.f32 %v4234, %v4564
        %v4569 = vmul.f32 %v4237, %v4564
        %v4570 = vmul.f32 %v4278, %v4564
        %v4571 = vmul.f32 %v4281, %v4564
        %v4572 = vmul.f32 %v4322, %v4564
        %v4573 = vmul.f32 %v4325, %v4564
        %v4574 = vmul.f32 %v4366, %v4564
        %v4575 = vmul.f32 %v4369, %v4564
        %v4576 = vmul.f32 %v4410, %v4564
        %v4577 = vmul.f32 %v4413, %v4564
        %v4578 = vmul.f32 %v4454, %v4564
        %v4579 = vmul.f32 %v4457, %v4564
        %v4580 = vmul.f32 %v4498, %v4564
        %v4581 = vmul.f32 %v4501, %v4564
        %v4582 = vadd.f32 %v1003, %v4566
        %v4583 = vadd.f32 %v1004, %v4567
        %v4584 = vadd.f32 %v1005, %v4568
        %v4585 = vadd.f32 %v1006, %v4569
        %v4586 = vadd.f32 %v1007, %v4570
        %v4587 = vadd.f32 %v1008, %v4571
        %v4588 = vadd.f32 %v1009, %v4572
        %v4589 = vadd.f32 %v1010, %v4573
        %v4590 = vadd.f32 %v1011, %v4574
        %v4591 = vadd.f32 %v1012, %v4575
        %v4592 = vadd.f32 %v1013, %v4576
        %v4593 = vadd.f32 %v1014, %v4577
        %v4594 = vadd.f32 %v1015, %v4578
        %v4595 = vadd.f32 %v1016, %v4579
        %v4596 = vadd.f32 %v1017, %v4580
        %v4597 = vadd.f32 %v1018, %v4581
        %4598 = vst [vmem:[%s979] sm:$0xff] %v4582
        %4599 = vst [vmem:[%s979 + $0x8] sm:$0xff] %v4583
        %4600 = vst [vmem:[%s979 + $0x10] sm:$0xff] %v4584
        %4601 = vst [vmem:[%s979 + $0x18] sm:$0xff] %v4585
        %4602 = vst [vmem:[%s979 + $0x20] sm:$0xff] %v4586
        %4603 = vst [vmem:[%s979 + $0x28] sm:$0xff] %v4587
        %4604 = vst [vmem:[%s979 + $0x30] sm:$0xff] %v4588
        %4605 = vst [vmem:[%s979 + $0x38] sm:$0xff] %v4589
        %4606 = vst [vmem:[%s979 + $0x40] sm:$0xff] %v4590
        %4607 = vst [vmem:[%s979 + $0x48] sm:$0xff] %v4591
        %4608 = vst [vmem:[%s979 + $0x50] sm:$0xff] %v4592
        %4609 = vst [vmem:[%s979 + $0x58] sm:$0xff] %v4593
        %4610 = vst [vmem:[%s979 + $0x60] sm:$0xff] %v4594
        %4611 = vst [vmem:[%s979 + $0x68] sm:$0xff] %v4595
        %4612 = vst [vmem:[%s979 + $0x70] sm:$0xff] %v4596
        %4613 = vst [vmem:[%s979 + $0x78] sm:$0xff] %v4597
        %s4614 = sand.u32 %s565, 1
        %s4615 = scalar_lea.sflag [#allocation4], %s4614
        %s4616 = sand.u32 %s565, 1
        %s4617 = smul.addr %s4616, 128
        %s4618 = scalar_lea.vmem [#allocation19], %s4617
        %s4619 = sand.u32 %s593, 1
        %s4620 = scalar_lea.sflag [#allocation21], %s4619
        %s4621 = sand.u32 %s593, 1
        %s4622 = smul.addr %s4621, 128
        %s4623 = scalar_lea.vmem [#allocation20], %s4622
        // Predicated region
        $region149: #{tpu_custom_call.1} parent=107 // pred_check
          %p4624 = pneg %p575
        $region150: #{tpu_custom_call.1} parent=107 // pred_check_branch
          %4626 = sbr.rel (%p4624) target = $region152
        $region151: #{tpu_custom_call.1} parent=107 // pred_region
          %s4627 = smul.u32 8, %s58
          %s4629 = ssub.s32 2048, 2048
          %4630 = vsyncadd %s4615, %s4629
          %s4631 = smul.addr %s4627, 2
          %s4632 = smul.addr %s57, 32
          %s4633 = sadd.s32 %s4631, %s4632
          %s4634 = smul.addr %s4633, 128
          %s4635 = scalar_lea.hbm %s22, %s4634
          %s4636 = sshll.u32 %s4618, 4
          %s4637 = int_to_ptr.vmem [resolvable:$true] %s4636
          %4642 = dma.vmem_to_hbm [thread:$0]  %s4637, 2048, %s4635, %s4615, 128, 128, 8
        $region152: #{tpu_custom_call.1} parent=107 // pred_fallthru
          _
        // Predicated region
        $region153: #{tpu_custom_call.1} parent=107 // pred_check
          %p4643 = pneg %p603
        $region154: #{tpu_custom_call.1} parent=107 // pred_check_branch
          %4645 = sbr.rel (%p4643) target = $region156
        $region155: #{tpu_custom_call.1} parent=107 // pred_region
          %s4646 = smul.u32 8, %s58
          %s4648 = ssub.s32 2048, 2048
          %4649 = vsyncadd %s4620, %s4648
          %s4650 = smul.addr %s4646, 2
          %s4651 = smul.addr %s57, 32
          %s4652 = sadd.s32 %s4650, %s4651
          %s4653 = smul.addr %s4652, 128
          %s4654 = scalar_lea.hbm %s23, %s4653
          %s4655 = sshll.u32 %s4623, 4
          %s4656 = int_to_ptr.vmem [resolvable:$true] %s4655
          %4661 = dma.vmem_to_hbm [thread:$0]  %s4656, 2048, %s4654, %s4620, 128, 128, 8
        $region156: #{tpu_custom_call.1} parent=107 // pred_fallthru
          _
      $region108: #{tpu_custom_call.1} parent=5 // pred_fallthru
        _
      %p4662 = scmp.le.s32.totalorder 2, %s48
      // Predicated region
      $region157: #{tpu_custom_call.1} parent=5 // pred_check
        %p4663 = pneg %p4662
      $region158: #{tpu_custom_call.1} parent=5 // pred_check_branch
        %4665 = sbr.rel (%p4663) target = $region160
      $region159: #{tpu_custom_call.1} parent=5 // pred_region
        %s4666 = ssub.s32 %s48, 2
        // Predicated region
        $region161: #{tpu_custom_call.1} parent=159 // pred_check
          %p4667 = pneg %p581
        $region162: #{tpu_custom_call.1} parent=159 // pred_check_branch
          %4669 = sbr.rel (%p4667) target = $region164
        $region163: #{tpu_custom_call.1} parent=159 // pred_region
          %s4670 = sand.u32 %s566, 1
          %s4671 = scalar_lea.sflag [#allocation4], %s4670
          %s4672 = sand.u32 %s566, 1
          %s4673 = smul.addr %s4672, 128
          %s4674 = scalar_lea.vmem [#allocation19], %s4673
          %4675 = dma.done %s4671, 2048
        $region164: #{tpu_custom_call.1} parent=159 // pred_fallthru
          _
        // Predicated region
        $region165: #{tpu_custom_call.1} parent=159 // pred_check
          %p4676 = pneg %p609
        $region166: #{tpu_custom_call.1} parent=159 // pred_check_branch
          %4678 = sbr.rel (%p4676) target = $region168
        $region167: #{tpu_custom_call.1} parent=159 // pred_region
          %s4679 = sand.u32 %s594, 1
          %s4680 = scalar_lea.sflag [#allocation21], %s4679
          %s4681 = sand.u32 %s594, 1
          %s4682 = smul.addr %s4681, 128
          %s4683 = scalar_lea.vmem [#allocation20], %s4682
          %4684 = dma.done %s4680, 2048
        $region168: #{tpu_custom_call.1} parent=159 // pred_fallthru
          _
      $region160: #{tpu_custom_call.1} parent=5 // pred_fallthru
        _
    $region6: #{tpu_custom_call.1} parent=1 // loop_footer
      %s52 = sadd.s32 1, %s48
    $region7: #{tpu_custom_call.1} parent=1 // loop_footer_branch
      %47 = sbr.rel target = $region3
    $region8: #{tpu_custom_call.1} parent=1 // loop_exit
      _
    %4685 = vsyncpa [#allocation3], 1
    %s4686 = scalar_lea.sflag [#allocation3], 1
    %4687 = vsyncpa %s4686, 1
    %4688 = vsyncpa [#allocation6], 1
    %s4689 = scalar_lea.sflag [#allocation6], 1
    %4690 = vsyncpa %s4689, 1
    %4691 = vsyncpa [#allocation9], 1
    %s4692 = scalar_lea.sflag [#allocation9], 1
    %4693 = vsyncpa %s4692, 1
    %4694 = vsyncpa [#allocation12], 1
    %4695 = vsyncpa [#allocation15], 1
    %4696 = vsyncpa [#allocation18], 1
    %4697 = vsyncpa [#allocation4], 1
    %s4698 = scalar_lea.sflag [#allocation4], 1
    %4699 = vsyncpa %s4698, 1
    %4700 = vsyncpa [#allocation21], 1
    %s4701 = scalar_lea.sflag [#allocation21], 1
    %4702 = vsyncpa %s4701, 1

</llo_original>
